<compile_context>
chip_gen: v7x
topology: tpu7x:2x2x1
jax: 0.10.0
libtpu: 0.0.40
codegen_flags: <defaults>
</compile_context>

<pallas_src>
import functools
import numpy as np
import jax
import jax.numpy as jnp
from jax import lax
from jax.experimental import pallas as pl
from jax.experimental.pallas import tpu as pltpu

BN_EPS = 1e-5
NORM_EPS = 1e-12
NUM_MAIN = 27
NUM_SUB = 14
SUB_LIST = (0, 1, 2, 4, 7, 8, 11)
NEIGHBOR_NUM = 4
CLASSES_PER_STEP = 3                      # 27 classes -> 9 grid steps, (C, 3C) weight blocks
VMEM_LIMIT = 32 * 1024 * 1024

assert NUM_MAIN % CLASSES_PER_STEP == 0


# ----------------------------------------------------------------------------
# Kernel 1: 27 per-class LinearBlocks + mean over tokens, G=3 classes per step.
#   x (B*N, C) bf16 stays resident; per-group packed weight (C, G*C) pipelined;
#   token mean done as a block-diagonal (B, B*N) matmul (no cross-tile reshape);
#   output written as dense (1, B, G*C) slabs into a (ngroups, B, G*C) array.
# ----------------------------------------------------------------------------
def _class_linear_mean_kernel(mm_ref, x_ref, wt_ref, sc_ref, sh_ref, o_ref):
    # bf16 inputs, f32 accumulation on the MXU
    z = jnp.dot(x_ref[...], wt_ref[0], preferred_element_type=jnp.float32)   # (B*N, G*C)
    z = jnp.maximum(z * sc_ref[0] + sh_ref[0], 0.0)                          # BN (eval) + ReLU
    # token mean: tiny block-diagonal (B, B*N) x (B*N, G*C) matmul on the MXU
    m = jnp.dot(mm_ref[...], z, preferred_element_type=jnp.float32)          # (B, G*C)
    o_ref[...] = m[None]                                                     # (1, B, G*C)


def class_linears_mean(meanmat, x2d, wt_all, sc_all, sh_all, batch):
    bn_, c = x2d.shape
    ng, _, gc = wt_all.shape
    return pl.pallas_call(
        _class_linear_mean_kernel,
        grid=(ng,),
        in_specs=[
            pl.BlockSpec((batch, bn_), lambda i: (0, 0)),      # mean matrix (resident)
            pl.BlockSpec((bn_, c), lambda i: (0, 0)),          # bf16 activations (resident)
            pl.BlockSpec((1, c, gc), lambda i: (i, 0, 0)),     # per-group weights (pipelined)
            pl.BlockSpec((1, 1, gc), lambda i: (i, 0, 0)),
            pl.BlockSpec((1, 1, gc), lambda i: (i, 0, 0)),
        ],
        out_specs=pl.BlockSpec((1, batch, gc), lambda i: (i, 0, 0)),
        out_shape=jax.ShapeDtypeStruct((ng, batch, gc), jnp.float32),
        compiler_params=pltpu.CompilerParams(
            dimension_semantics=("parallel",), vmem_limit_bytes=VMEM_LIMIT),
    )(meanmat, x2d, wt_all, sc_all, sh_all)


# ----------------------------------------------------------------------------
# Kernel 2: fused U/V projections + GNN ('dots') + cosine head, batch-blocked grid.
#   U/V is one (Bb*27, C) x (C, 2C) bf16 matmul; adjacency + normalize_digraph are
#   elementwise/VPU work; only two small batched matmuls remain (si and aggregate).
# ----------------------------------------------------------------------------
def _gnn_head_kernel(fv_ref, wuv_ref, buv_ref, bnsc_ref, bnsh_ref,
                     mscn_ref, al_ref, ar_ref, main_ref, sl_ref, sr_ref):
    fv = fv_ref[...]                                              # (Bb, 27, C) f32
    bb, n, c = fv.shape
    # fused U(x), V(x): single wide bf16 matmul with f32 accumulation
    uv = jnp.dot(fv.reshape(bb * n, c).astype(jnp.bfloat16), wuv_ref[...],
                 preferred_element_type=jnp.float32) + buv_ref[...]
    uv = uv.reshape(bb, n, 2 * c)
    ux, vx = uv[..., :c], uv[..., c:]
    # similarity: si[b] = x[b] @ x[b]^T  ('dots' metric, f32)
    si = jnp.einsum('bic,bjc->bij', fv, fv, preferred_element_type=jnp.float32)
    # k-th largest per row, duplicates counted (== torch.topk(...)[0][..., -1])
    col = lax.broadcasted_iota(jnp.int32, (bb, n, n), 2)
    work = si
    for _ in range(NEIGHBOR_NUM - 1):
        cur_max = jnp.max(work, axis=-1, keepdims=True)
        first = jnp.min(jnp.where(work >= cur_max, col, n), axis=-1, keepdims=True)
        work = jnp.where(col == first, -jnp.inf, work)            # drop one max occurrence
    thresh = jnp.max(work, axis=-1, keepdims=True)                # (Bb, n, 1)
    adj = (si >= thresh).astype(jnp.float32)
    # normalize_digraph folded elementwise: A = D^-1/2 adj D^-1/2  (D = diag(row degree))
    dinv = lax.rsqrt(jnp.sum(adj, axis=-1, keepdims=True))        # deg >= k >= 1
    agg = jnp.einsum('bij,bjc->bic', adj, vx * dinv,
                     preferred_element_type=jnp.float32) * dinv + ux
    z = agg * bnsc_ref[...][None] + bnsh_ref[...][None]           # eval BatchNorm1d(27)
    y = jnp.maximum(fv + z, 0.0)                                  # (Bb, 27, C)
    # cosine head: rsqrt-normalize rows (EUP), then elementwise-mul + lane-sum vs anchors
    ss = jnp.sum(y * y, axis=-1, keepdims=True)
    yn = y * lax.rsqrt(jnp.maximum(ss, NORM_EPS * NORM_EPS))      # == F.normalize(., eps=1e-12)
    main_ref[...] = jnp.sum(yn * mscn_ref[...][None], axis=-1)    # (Bb, 27)
    sl_ref[...] = jnp.sum(yn * al_ref[...][None], axis=-1)        # left  sub anchors
    sr_ref[...] = jnp.sum(yn * ar_ref[...][None], axis=-1)        # right sub anchors


def gnn_head(f_v, wuv, buv, bnsc, bnsh, mscn, a_l, a_r):
    b, n, c = f_v.shape
    bb = 8 if (b % 8 == 0) else b          # batch block: multiple of 8 or the whole batch
    nb = b // bb
    return pl.pallas_call(
        _gnn_head_kernel,
        grid=(nb,),
        in_specs=[
            pl.BlockSpec((bb, n, c), lambda i: (i, 0, 0)),      # f_v batch block
            pl.BlockSpec((c, 2 * c), lambda i: (0, 0)),         # fused U|V weight (bf16)
            pl.BlockSpec((1, 2 * c), lambda i: (0, 0)),         # fused U|V bias
            pl.BlockSpec((n, 1), lambda i: (0, 0)),             # bnv scale
            pl.BlockSpec((n, 1), lambda i: (0, 0)),             # bnv shift
            pl.BlockSpec((n, c), lambda i: (0, 0)),             # main anchors (normalized)
            pl.BlockSpec((n, c), lambda i: (0, 0)),             # sub anchors (left)
            pl.BlockSpec((n, c), lambda i: (0, 0)),             # sub anchors (right)
        ],
        out_specs=[pl.BlockSpec((bb, n), lambda i: (i, 0)) for _ in range(3)],
        out_shape=[jax.ShapeDtypeStruct((b, n), jnp.float32) for _ in range(3)],
        compiler_params=pltpu.CompilerParams(
            dimension_semantics=("parallel",), vmem_limit_bytes=VMEM_LIMIT),
    )(f_v, wuv, buv, bnsc, bnsh, mscn, a_l, a_r)


# ----------------------------------------------------------------------------
# Parameters (deterministic, fresh-module semantics).  All parameter-only preprocessing
# (weight packing/casts, anchor relu+normalize+scatter) is hoisted here.
# ----------------------------------------------------------------------------
def init_params(key, c):
    ks = jax.random.split(key, 7)
    s = np.float32(1.0 / np.sqrt(1.0 + BN_EPS))   # BN eval scale (running mean 0, var 1)
    g = CLASSES_PER_STEP
    ng = NUM_MAIN // g
    p = {}
    # 27 per-class LinearBlocks: fc weight ~ N(0, sqrt(2/C)), bias = 0.01; packed G per step
    wc = np.sqrt(2.0 / c) * jax.random.normal(ks[0], (NUM_MAIN, c, c), jnp.float32)  # (cls,out,in)
    wt = jnp.transpose(wc, (0, 2, 1))                                                # (cls,in,out)
    p["c_wt"] = (wt.reshape(ng, g, c, c).transpose(0, 2, 1, 3)
                   .reshape(ng, c, g * c).astype(jnp.bfloat16))                      # (ng, C, G*C)
    p["c_sc"] = jnp.full((ng, 1, g * c), s, jnp.float32)
    p["c_sh"] = jnp.full((ng, 1, g * c), 0.01 * s, jnp.float32)                      # bias*scale
    # GNN U, V (weight ~ N(0, sqrt(2/C))), fused into one (C, 2C) bf16 weight + (1, 2C) bias
    uw = np.sqrt(2.0 / c) * jax.random.normal(ks[1], (c, c), jnp.float32)
    vw = np.sqrt(2.0 / c) * jax.random.normal(ks[2], (c, c), jnp.float32)
    bnd = float(1.0 / np.sqrt(c))
    ub = jax.random.uniform(ks[3], (1, c), jnp.float32, -bnd, bnd)
    vb = jax.random.uniform(ks[4], (1, c), jnp.float32, -bnd, bnd)
    p["uv_wt"] = jnp.concatenate([uw.T, vw.T], axis=1).astype(jnp.bfloat16)          # (C, 2C)
    p["uv_b"] = jnp.concatenate([ub, vb], axis=1)                                    # (1, 2C)
    # bnv (weight 1, bias 0, eval fold)
    p["bnv_sc"] = jnp.full((NUM_MAIN, 1), s, jnp.float32)
    p["bnv_sh"] = jnp.zeros((NUM_MAIN, 1), jnp.float32)
    # classification anchors (xavier uniform) -> relu + L2 normalize (hoisted)
    a_m = float(np.sqrt(6.0 / (NUM_MAIN + c)))
    a_s = float(np.sqrt(6.0 / (NUM_SUB + c)))
    main_sc = jax.random.uniform(ks[5], (NUM_MAIN, c), jnp.float32, -a_m, a_m)
    sub_sc = jax.random.uniform(ks[6], (NUM_SUB, c), jnp.float32, -a_s, a_s)

    def _relu_norm(a):
        a = jnp.maximum(a, 0.0)
        return a / jnp.maximum(jnp.sqrt(jnp.sum(a * a, -1, keepdims=True)), NORM_EPS)

    sscn = _relu_norm(sub_sc)
    sub_idx = jnp.asarray(SUB_LIST, jnp.int32)
    p["mscn"] = _relu_norm(main_sc)                                                  # (27, C)
    # sub anchors laid out per main class (left/right) so the kernel does mul + lane-sum only
    p["a_l"] = jnp.zeros((NUM_MAIN, c), jnp.float32).at[sub_idx].set(sscn[0::2])
    p["a_r"] = jnp.zeros((NUM_MAIN, c), jnp.float32).at[sub_idx].set(sscn[1::2])
    return p


# ----------------------------------------------------------------------------
# Forward glue
# ----------------------------------------------------------------------------
def head_forward(x, p):
    """x: (B, N, C) token features -> (B, 41) AU scores (27 main + 14 sub)."""
    b, n_tok, c = x.shape
    g = CLASSES_PER_STEP
    ng = NUM_MAIN // g
    # per-class LinearBlocks + token mean   (bf16 activations, f32 accumulation)
    x2 = x.reshape(b * n_tok, c).astype(jnp.bfloat16)
    # block-diagonal mean matrix (trace-time constant under jit)
    meanmat = jnp.asarray(np.repeat(np.eye(b, dtype=np.float32), n_tok, axis=1) / n_tok)
    fgrp = class_linears_mean(meanmat, x2, p["c_wt"], p["c_sc"], p["c_sh"], b)  # (ng, B, G*C)
    # tiny class-major -> batch-major relayout (≈0.4 MB at real shapes), done in XLA
    f_v = fgrp.reshape(ng, b, g, c).transpose(1, 0, 2, 3).reshape(b, NUM_MAIN, c)

    main_cl, s_l, s_r = gnn_head(f_v, p["uv_wt"], p["uv_b"], p["bnv_sc"], p["bnv_sh"],
                                 p["mscn"], p["a_l"], p["a_r"])
    # TODO(synk): final (B, 41) score assembly (7-column gather + interleave + concat) is
    #             tiny XLA glue on (B, 27) arrays, intentionally left outside Pallas.
    sub_idx = jnp.asarray(SUB_LIST, jnp.int32)
    sub_cl = jnp.stack([s_l[:, sub_idx], s_r[:, sub_idx]], axis=-1).reshape(b, NUM_SUB)
    return jnp.concatenate([main_cl, sub_cl], axis=-1)             # (B, 41)


if __name__ == "__main__":
    B, N_TOK, C = 2, 16, 32    # small stand-in (real model: C=512, ~49 tokens, B~8)
    key = jax.random.PRNGKey(0)
    kx, kp = jax.random.split(key)
    x = jax.random.normal(kx, (B, N_TOK, C), jnp.float32)
    params = init_params(kp, C)

    cl = jax.jit(head_forward)(x, params)
    cl = jax.block_until_ready(cl)

    assert cl.shape == (B, NUM_MAIN + NUM_SUB), cl.shape
    assert bool(jnp.all(jnp.isfinite(cl)))
    print("KERNEL_OK")
</pallas_src>

<mosaic_0001>
module attributes {stable_mosaic.version = 11 : i64} {
  func.func @_class_linear_mean_kernel(%arg0: i32, %arg1: memref<2x32xf32, #tpu.memory_space<vmem>>, %arg2: memref<32x32xbf16, #tpu.memory_space<vmem>>, %arg3: memref<1x32x96xbf16, #tpu.memory_space<vmem>>, %arg4: memref<1x1x96xf32, #tpu.memory_space<vmem>>, %arg5: memref<1x1x96xf32, #tpu.memory_space<vmem>>, %arg6: memref<1x2x96xf32, #tpu.memory_space<vmem>>) attributes {dimension_semantics = [#tpu.dimension_semantics<parallel>], iteration_bounds = array<i64: 9>, scalar_prefetch = 0 : i64, scratch_operands = 0 : i64, tpu.core_type = #tpu.core_type<tc>, window_params = [{pipeline_mode = #tpu.pipeline_mode<synchronous>, transform_indices = @transform_0, window_bounds = array<i64: 2, 32>}, {pipeline_mode = #tpu.pipeline_mode<synchronous>, transform_indices = @transform_1, window_bounds = array<i64: 32, 32>}, {transform_indices = @transform_2, window_bounds = array<i64: 1, 32, 96>}, {transform_indices = @transform_3, window_bounds = array<i64: 1, 1, 96>}, {transform_indices = @transform_4, window_bounds = array<i64: 1, 1, 96>}, {transform_indices = @transform_5, window_bounds = array<i64: 1, 2, 96>}]} {
    %c0 = arith.constant 0 : index
    %c0_0 = arith.constant 0 : index
    %0 = vector.load %arg2[%c0, %c0_0] : memref<32x32xbf16, #tpu.memory_space<vmem>>, vector<32x32xbf16>
    %c0_1 = arith.constant 0 : index
    %c0_2 = arith.constant 0 : index
    %c0_3 = arith.constant 0 : index
    %1 = vector.load %arg3[%c0_1, %c0_2, %c0_3] : memref<1x32x96xbf16, #tpu.memory_space<vmem>>, vector<1x32x96xbf16>
    %2 = vector.shape_cast %1 : vector<1x32x96xbf16> to vector<32x96xbf16>
    %cst = arith.constant dense<0.000000e+00> : vector<32x96xf32>
    %3 = tpu.matmul %0, %2, %cst {dimension_numbers = #tpu.dot_dimension_numbers<[1], [0], [0], [1], [0, 0, 1, 1], [], []>} : vector<32x32xbf16>, vector<32x96xbf16>, vector<32x96xf32> -> vector<32x96xf32>
    %c0_4 = arith.constant 0 : index
    %c0_5 = arith.constant 0 : index
    %c0_6 = arith.constant 0 : index
    %4 = vector.load %arg4[%c0_4, %c0_5, %c0_6] : memref<1x1x96xf32, #tpu.memory_space<vmem>>, vector<1x1x96xf32>
    %5 = vector.shape_cast %4 : vector<1x1x96xf32> to vector<1x96xf32>
    %6 = vector.broadcast %5 : vector<1x96xf32> to vector<32x96xf32>
    %7 = arith.mulf %3, %6 : vector<32x96xf32>
    %c0_7 = arith.constant 0 : index
    %c0_8 = arith.constant 0 : index
    %c0_9 = arith.constant 0 : index
    %8 = vector.load %arg5[%c0_7, %c0_8, %c0_9] : memref<1x1x96xf32, #tpu.memory_space<vmem>>, vector<1x1x96xf32>
    %9 = vector.shape_cast %8 : vector<1x1x96xf32> to vector<1x96xf32>
    %10 = vector.broadcast %9 : vector<1x96xf32> to vector<32x96xf32>
    %11 = arith.addf %7, %10 : vector<32x96xf32>
    %cst_10 = arith.constant 0.000000e+00 : f32
    %12 = vector.broadcast %cst_10 : f32 to vector<32x96xf32>
    %13 = arith.maximumf %11, %12 : vector<32x96xf32>
    %c0_11 = arith.constant 0 : index
    %c0_12 = arith.constant 0 : index
    %14 = vector.load %arg1[%c0_11, %c0_12] : memref<2x32xf32, #tpu.memory_space<vmem>>, vector<2x32xf32>
    %cst_13 = arith.constant dense<0.000000e+00> : vector<2x96xf32>
    %15 = tpu.matmul %14, %13, %cst_13 {dimension_numbers = #tpu.dot_dimension_numbers<[1], [0], [0], [1], [0, 0, 1, 1], [], []>} : vector<2x32xf32>, vector<32x96xf32>, vector<2x96xf32> -> vector<2x96xf32>
    %16 = vector.shape_cast %15 : vector<2x96xf32> to vector<1x2x96xf32>
    %c0_14 = arith.constant 0 : index
    %c0_15 = arith.constant 0 : index
    %c0_16 = arith.constant 0 : index
    %17 = vector.load %arg6[%c0_14, %c0_15, %c0_16] : memref<1x2x96xf32, #tpu.memory_space<vmem>>, vector<1x2x96xf32>
    tpu.vector_store %arg6[%c0_14, %c0_15, %c0_16], %16 {strides = array<i32>} : memref<1x2x96xf32, #tpu.memory_space<vmem>>, vector<1x2x96xf32>,
    return
  }
  func.func @transform_0(%arg0: i32) -> (i32, i32) {
    %c0_i32 = arith.constant 0 : i32
    %c0_i32_0 = arith.constant 0 : i32
    %c0_i32_1 = arith.constant 0 : i32
    return %c0_i32, %c0_i32_0 : i32, i32
  }
  func.func @transform_1(%arg0: i32) -> (i32, i32) {
    %c0_i32 = arith.constant 0 : i32
    %c0_i32_0 = arith.constant 0 : i32
    %c0_i32_1 = arith.constant 0 : i32
    return %c0_i32, %c0_i32_0 : i32, i32
  }
  func.func @transform_2(%arg0: i32) -> (i32, i32, i32) {
    %c0_i32 = arith.constant 0 : i32
    %c0_i32_0 = arith.constant 0 : i32
    %c0_i32_1 = arith.constant 0 : i32
    return %arg0, %c0_i32, %c0_i32_0 : i32, i32, i32
  }
  func.func @transform_3(%arg0: i32) -> (i32, i32, i32) {
    %c0_i32 = arith.constant 0 : i32
    %c0_i32_0 = arith.constant 0 : i32
    %c0_i32_1 = arith.constant 0 : i32
    return %arg0, %c0_i32, %c0_i32_0 : i32, i32, i32
  }
  func.func @transform_4(%arg0: i32) -> (i32, i32, i32) {
    %c0_i32 = arith.constant 0 : i32
    %c0_i32_0 = arith.constant 0 : i32
    %c0_i32_1 = arith.constant 0 : i32
    return %arg0, %c0_i32, %c0_i32_0 : i32, i32, i32
  }
  func.func @transform_5(%arg0: i32) -> (i32, i32, i32) {
    %c0_i32 = arith.constant 0 : i32
    %c0_i32_0 = arith.constant 0 : i32
    %c0_i32_1 = arith.constant 0 : i32
    return %arg0, %c0_i32, %c0_i32_0 : i32, i32, i32
  }
}

module attributes {stable_mosaic.version = 11 : i64} {
  func.func @_gnn_head_kernel(%arg0: i32, %arg1: memref<2x27x32xf32, #tpu.memory_space<vmem>>, %arg2: memref<32x64xbf16, #tpu.memory_space<vmem>>, %arg3: memref<1x64xf32, #tpu.memory_space<vmem>>, %arg4: memref<27x1xf32, #tpu.memory_space<vmem>>, %arg5: memref<27x1xf32, #tpu.memory_space<vmem>>, %arg6: memref<27x32xf32, #tpu.memory_space<vmem>>, %arg7: memref<27x32xf32, #tpu.memory_space<vmem>>, %arg8: memref<27x32xf32, #tpu.memory_space<vmem>>, %arg9: memref<2x27xf32, #tpu.memory_space<vmem>>, %arg10: memref<2x27xf32, #tpu.memory_space<vmem>>, %arg11: memref<2x27xf32, #tpu.memory_space<vmem>>) attributes {dimension_semantics = [#tpu.dimension_semantics<parallel>], iteration_bounds = array<i64: 1>, scalar_prefetch = 0 : i64, scratch_operands = 0 : i64, tpu.core_type = #tpu.core_type<tc>, window_params = [{transform_indices = @transform_0, window_bounds = array<i64: 2, 27, 32>}, {pipeline_mode = #tpu.pipeline_mode<synchronous>, transform_indices = @transform_1, window_bounds = array<i64: 32, 64>}, {pipeline_mode = #tpu.pipeline_mode<synchronous>, transform_indices = @transform_2, window_bounds = array<i64: 1, 64>}, {pipeline_mode = #tpu.pipeline_mode<synchronous>, transform_indices = @transform_3, window_bounds = array<i64: 27, 1>}, {pipeline_mode = #tpu.pipeline_mode<synchronous>, transform_indices = @transform_4, window_bounds = array<i64: 27, 1>}, {pipeline_mode = #tpu.pipeline_mode<synchronous>, transform_indices = @transform_5, window_bounds = array<i64: 27, 32>}, {pipeline_mode = #tpu.pipeline_mode<synchronous>, transform_indices = @transform_6, window_bounds = array<i64: 27, 32>}, {pipeline_mode = #tpu.pipeline_mode<synchronous>, transform_indices = @transform_7, window_bounds = array<i64: 27, 32>}, {transform_indices = @transform_8, window_bounds = array<i64: 2, 27>}, {transform_indices = @transform_9, window_bounds = array<i64: 2, 27>}, {transform_indices = @transform_10, window_bounds = array<i64: 2, 27>}]} {
    %c0 = arith.constant 0 : index
    %c0_0 = arith.constant 0 : index
    %c0_1 = arith.constant 0 : index
    %0 = vector.load %arg1[%c0, %c0_0, %c0_1] : memref<2x27x32xf32, #tpu.memory_space<vmem>>, vector<2x27x32xf32>
    %1 = vector.shape_cast %0 : vector<2x27x32xf32> to vector<54x32xf32>
    %2 = arith.truncf %1 : vector<54x32xf32> to vector<54x32xbf16>
    %c0_2 = arith.constant 0 : index
    %c0_3 = arith.constant 0 : index
    %3 = vector.load %arg2[%c0_2, %c0_3] : memref<32x64xbf16, #tpu.memory_space<vmem>>, vector<32x64xbf16>
    %cst = arith.constant dense<0.000000e+00> : vector<54x64xf32>
    %4 = tpu.matmul %2, %3, %cst {dimension_numbers = #tpu.dot_dimension_numbers<[1], [0], [0], [1], [0, 0, 1, 1], [], []>} : vector<54x32xbf16>, vector<32x64xbf16>, vector<54x64xf32> -> vector<54x64xf32>
    %c0_4 = arith.constant 0 : index
    %c0_5 = arith.constant 0 : index
    %5 = vector.load %arg3[%c0_4, %c0_5] : memref<1x64xf32, #tpu.memory_space<vmem>>, vector<1x64xf32>
    %6 = vector.broadcast %5 : vector<1x64xf32> to vector<54x64xf32>
    %7 = arith.addf %4, %6 : vector<54x64xf32>
    %8 = vector.shape_cast %7 : vector<54x64xf32> to vector<2x27x64xf32>
    %9 = vector.extract_strided_slice %8 {offsets = [0, 0, 0], sizes = [2, 27, 32], strides = [1, 1, 1]} : vector<2x27x64xf32> to vector<2x27x32xf32>
    %10 = vector.extract_strided_slice %8 {offsets = [0, 0, 32], sizes = [2, 27, 32], strides = [1, 1, 1]} : vector<2x27x64xf32> to vector<2x27x32xf32>
    "tpu.trace_start"() <{level = 10 : i32, message = "bic,bjc->bij"}> : () -> ()
    %cst_6 = arith.constant dense<0.000000e+00> : vector<2x27x27xf32>
    %11 = tpu.matmul %0, %0, %cst_6 {dimension_numbers = #tpu.dot_dimension_numbers<[2], [2], [1], [1], [0, 0, 0, 1, 1, 1], [0], [0]>} : vector<2x27x32xf32>, vector<2x27x32xf32>, vector<2x27x27xf32> -> vector<2x27x27xf32>
    "tpu.trace_stop"() : () -> ()
    %12 = tpu.iota {dimensions = array<i32: 2>} : vector<2x27x27xi32>
    %cst_7 = arith.constant dense<0xFF800000> : vector<2x27xf32>
    %13 = vector.multi_reduction <maximumf>, %11, %cst_7 [2] : vector<2x27x27xf32> to vector<2x27xf32>
    %14 = vector.shape_cast %13 : vector<2x27xf32> to vector<2x27x1xf32>
    %15 = vector.broadcast %14 : vector<2x27x1xf32> to vector<2x27x27xf32>
    %16 = arith.cmpf oge, %11, %15 : vector<2x27x27xf32>
    %c27_i32 = arith.constant 27 : i32
    %17 = vector.broadcast %c27_i32 : i32 to vector<2x27x27xi32>
    %18 = arith.select %16, %12, %17 : vector<2x27x27xi1>, vector<2x27x27xi32>
    %cst_8 = arith.constant dense<2147483647> : vector<2x27xi32>
    %19 = vector.multi_reduction <minsi>, %18, %cst_8 [2] : vector<2x27x27xi32> to vector<2x27xi32>
    %20 = vector.shape_cast %19 : vector<2x27xi32> to vector<2x27x1xi32>
    %21 = vector.broadcast %20 : vector<2x27x1xi32> to vector<2x27x27xi32>
    %22 = arith.cmpi eq, %12, %21 : vector<2x27x27xi32>
    %cst_9 = arith.constant 0xFF800000 : f32
    %23 = vector.broadcast %cst_9 : f32 to vector<2x27x27xf32>
    %24 = arith.select %22, %23, %11 : vector<2x27x27xi1>, vector<2x27x27xf32>
    %cst_10 = arith.constant dense<0xFF800000> : vector<2x27xf32>
    %25 = vector.multi_reduction <maximumf>, %24, %cst_10 [2] : vector<2x27x27xf32> to vector<2x27xf32>
    %26 = vector.shape_cast %25 : vector<2x27xf32> to vector<2x27x1xf32>
    %27 = vector.broadcast %26 : vector<2x27x1xf32> to vector<2x27x27xf32>
    %28 = arith.cmpf oge, %24, %27 : vector<2x27x27xf32>
    %c27_i32_11 = arith.constant 27 : i32
    %29 = vector.broadcast %c27_i32_11 : i32 to vector<2x27x27xi32>
    %30 = arith.select %28, %12, %29 : vector<2x27x27xi1>, vector<2x27x27xi32>
    %cst_12 = arith.constant dense<2147483647> : vector<2x27xi32>
    %31 = vector.multi_reduction <minsi>, %30, %cst_12 [2] : vector<2x27x27xi32> to vector<2x27xi32>
    %32 = vector.shape_cast %31 : vector<2x27xi32> to vector<2x27x1xi32>
    %33 = vector.broadcast %32 : vector<2x27x1xi32> to vector<2x27x27xi32>
    %34 = arith.cmpi eq, %12, %33 : vector<2x27x27xi32>
    %cst_13 = arith.constant 0xFF800000 : f32
    %35 = vector.broadcast %cst_13 : f32 to vector<2x27x27xf32>
    %36 = arith.select %34, %35, %24 : vector<2x27x27xi1>, vector<2x27x27xf32>
    %cst_14 = arith.constant dense<0xFF800000> : vector<2x27xf32>
    %37 = vector.multi_reduction <maximumf>, %36, %cst_14 [2] : vector<2x27x27xf32> to vector<2x27xf32>
    %38 = vector.shape_cast %37 : vector<2x27xf32> to vector<2x27x1xf32>
    %39 = vector.broadcast %38 : vector<2x27x1xf32> to vector<2x27x27xf32>
    %40 = arith.cmpf oge, %36, %39 : vector<2x27x27xf32>
    %c27_i32_15 = arith.constant 27 : i32
    %41 = vector.broadcast %c27_i32_15 : i32 to vector<2x27x27xi32>
    %42 = arith.select %40, %12, %41 : vector<2x27x27xi1>, vector<2x27x27xi32>
    %cst_16 = arith.constant dense<2147483647> : vector<2x27xi32>
    %43 = vector.multi_reduction <minsi>, %42, %cst_16 [2] : vector<2x27x27xi32> to vector<2x27xi32>
    %44 = vector.shape_cast %43 : vector<2x27xi32> to vector<2x27x1xi32>
    %45 = vector.broadcast %44 : vector<2x27x1xi32> to vector<2x27x27xi32>
    %46 = arith.cmpi eq, %12, %45 : vector<2x27x27xi32>
    %cst_17 = arith.constant 0xFF800000 : f32
    %47 = vector.broadcast %cst_17 : f32 to vector<2x27x27xf32>
    %48 = arith.select %46, %47, %36 : vector<2x27x27xi1>, vector<2x27x27xf32>
    %cst_18 = arith.constant dense<0xFF800000> : vector<2x27xf32>
    %49 = vector.multi_reduction <maximumf>, %48, %cst_18 [2] : vector<2x27x27xf32> to vector<2x27xf32>
    %50 = vector.shape_cast %49 : vector<2x27xf32> to vector<2x27x1xf32>
    %51 = vector.broadcast %50 : vector<2x27x1xf32> to vector<2x27x27xf32>
    %52 = arith.cmpf oge, %11, %51 : vector<2x27x27xf32>
    %53 = arith.extui %52 : vector<2x27x27xi1> to vector<2x27x27xi32>
    %54 = arith.sitofp %53 : vector<2x27x27xi32> to vector<2x27x27xf32>
    %cst_19 = arith.constant dense<0.000000e+00> : vector<2x27xf32>
    %55 = vector.multi_reduction <add>, %54, %cst_19 [2] : vector<2x27x27xf32> to vector<2x27xf32>
    %56 = vector.shape_cast %55 : vector<2x27xf32> to vector<2x27x1xf32>
    %57 = math.rsqrt %56 : vector<2x27x1xf32>
    %58 = vector.broadcast %57 : vector<2x27x1xf32> to vector<2x27x32xf32>
    %59 = arith.mulf %10, %58 : vector<2x27x32xf32>
    "tpu.trace_start"() <{level = 10 : i32, message = "bij,bjc->bic"}> : () -> ()
    %cst_20 = arith.constant dense<0.000000e+00> : vector<2x27x32xf32>
    %60 = tpu.matmul %54, %59, %cst_20 {dimension_numbers = #tpu.dot_dimension_numbers<[2], [1], [1], [2], [0, 0, 0, 1, 1, 2], [0], [0]>} : vector<2x27x27xf32>, vector<2x27x32xf32>, vector<2x27x32xf32> -> vector<2x27x32xf32>
    "tpu.trace_stop"() : () -> ()
    %61 = vector.broadcast %57 : vector<2x27x1xf32> to vector<2x27x32xf32>
    %62 = arith.mulf %60, %61 : vector<2x27x32xf32>
    %63 = arith.addf %62, %9 : vector<2x27x32xf32>
    %c0_21 = arith.constant 0 : index
    %c0_22 = arith.constant 0 : index
    %64 = vector.load %arg4[%c0_21, %c0_22] : memref<27x1xf32, #tpu.memory_space<vmem>>, vector<27x1xf32>
    %65 = vector.shape_cast %64 : vector<27x1xf32> to vector<1x27x1xf32>
    %66 = vector.broadcast %65 : vector<1x27x1xf32> to vector<2x27x32xf32>
    %67 = arith.mulf %63, %66 : vector<2x27x32xf32>
    %c0_23 = arith.constant 0 : index
    %c0_24 = arith.constant 0 : index
    %68 = vector.load %arg5[%c0_23, %c0_24] : memref<27x1xf32, #tpu.memory_space<vmem>>, vector<27x1xf32>
    %69 = vector.shape_cast %68 : vector<27x1xf32> to vector<1x27x1xf32>
    %70 = vector.broadcast %69 : vector<1x27x1xf32> to vector<2x27x32xf32>
    %71 = arith.addf %67, %70 : vector<2x27x32xf32>
    %72 = arith.addf %0, %71 : vector<2x27x32xf32>
    %cst_25 = arith.constant 0.000000e+00 : f32
    %73 = vector.broadcast %cst_25 : f32 to vector<2x27x32xf32>
    %74 = arith.maximumf %72, %73 : vector<2x27x32xf32>
    %75 = arith.mulf %74, %74 : vector<2x27x32xf32>
    %cst_26 = arith.constant dense<0.000000e+00> : vector<2x27xf32>
    %76 = vector.multi_reduction <add>, %75, %cst_26 [2] : vector<2x27x32xf32> to vector<2x27xf32>
    %77 = vector.shape_cast %76 : vector<2x27xf32> to vector<2x27x1xf32>
    %cst_27 = arith.constant 1.000000e-24 : f32
    %78 = vector.broadcast %cst_27 : f32 to vector<2x27x1xf32>
    %79 = arith.maximumf %77, %78 : vector<2x27x1xf32>
    %80 = math.rsqrt %79 : vector<2x27x1xf32>
    %81 = vector.broadcast %80 : vector<2x27x1xf32> to vector<2x27x32xf32>
    %82 = arith.mulf %74, %81 : vector<2x27x32xf32>
    %c0_28 = arith.constant 0 : index
    %c0_29 = arith.constant 0 : index
    %83 = vector.load %arg6[%c0_28, %c0_29] : memref<27x32xf32, #tpu.memory_space<vmem>>, vector<27x32xf32>
    %84 = vector.shape_cast %83 : vector<27x32xf32> to vector<1x27x32xf32>
    %85 = vector.broadcast %84 : vector<1x27x32xf32> to vector<2x27x32xf32>
    %86 = arith.mulf %82, %85 : vector<2x27x32xf32>
    %cst_30 = arith.constant dense<0.000000e+00> : vector<2x27xf32>
    %87 = vector.multi_reduction <add>, %86, %cst_30 [2] : vector<2x27x32xf32> to vector<2x27xf32>
    %c0_31 = arith.constant 0 : index
    %c0_32 = arith.constant 0 : index
    %88 = vector.load %arg9[%c0_31, %c0_32] : memref<2x27xf32, #tpu.memory_space<vmem>>, vector<2x27xf32>
    tpu.vector_store %arg9[%c0_31, %c0_32], %87 {strides = array<i32>} : memref<2x27xf32, #tpu.memory_space<vmem>>, vector<2x27xf32>,
    %c0_33 = arith.constant 0 : index
    %c0_34 = arith.constant 0 : index
    %89 = vector.load %arg7[%c0_33, %c0_34] : memref<27x32xf32, #tpu.memory_space<vmem>>, vector<27x32xf32>
    %90 = vector.shape_cast %89 : vector<27x32xf32> to vector<1x27x32xf32>
    %91 = vector.broadcast %90 : vector<1x27x32xf32> to vector<2x27x32xf32>
    %92 = arith.mulf %82, %91 : vector<2x27x32xf32>
    %cst_35 = arith.constant dense<0.000000e+00> : vector<2x27xf32>
    %93 = vector.multi_reduction <add>, %92, %cst_35 [2] : vector<2x27x32xf32> to vector<2x27xf32>
    %c0_36 = arith.constant 0 : index
    %c0_37 = arith.constant 0 : index
    %94 = vector.load %arg10[%c0_36, %c0_37] : memref<2x27xf32, #tpu.memory_space<vmem>>, vector<2x27xf32>
    tpu.vector_store %arg10[%c0_36, %c0_37], %93 {strides = array<i32>} : memref<2x27xf32, #tpu.memory_space<vmem>>, vector<2x27xf32>,
    %c0_38 = arith.constant 0 : index
    %c0_39 = arith.constant 0 : index
    %95 = vector.load %arg8[%c0_38, %c0_39] : memref<27x32xf32, #tpu.memory_space<vmem>>, vector<27x32xf32>
    %96 = vector.shape_cast %95 : vector<27x32xf32> to vector<1x27x32xf32>
    %97 = vector.broadcast %96 : vector<1x27x32xf32> to vector<2x27x32xf32>
    %98 = arith.mulf %82, %97 : vector<2x27x32xf32>
    %cst_40 = arith.constant dense<0.000000e+00> : vector<2x27xf32>
    %99 = vector.multi_reduction <add>, %98, %cst_40 [2] : vector<2x27x32xf32> to vector<2x27xf32>
    %c0_41 = arith.constant 0 : index
    %c0_42 = arith.constant 0 : index
    %100 = vector.load %arg11[%c0_41, %c0_42] : memref<2x27xf32, #tpu.memory_space<vmem>>, vector<2x27xf32>
    tpu.vector_store %arg11[%c0_41, %c0_42], %99 {strides = array<i32>} : memref<2x27xf32, #tpu.memory_space<vmem>>, vector<2x27xf32>,
    return
  }
  func.func @transform_0(%arg0: i32) -> (i32, i32, i32) {
    %c0_i32 = arith.constant 0 : i32
    %c0_i32_0 = arith.constant 0 : i32
    %c0_i32_1 = arith.constant 0 : i32
    return %arg0, %c0_i32, %c0_i32_0 : i32, i32, i32
  }
  func.func @transform_1(%arg0: i32) -> (i32, i32) {
    %c0_i32 = arith.constant 0 : i32
    %c0_i32_0 = arith.constant 0 : i32
    %c0_i32_1 = arith.constant 0 : i32
    return %c0_i32, %c0_i32_0 : i32, i32
  }
  func.func @transform_2(%arg0: i32) -> (i32, i32) {
    %c0_i32 = arith.constant 0 : i32
    %c0_i32_0 = arith.constant 0 : i32
    %c0_i32_1 = arith.constant 0 : i32
    return %c0_i32, %c0_i32_0 : i32, i32
  }
  func.func @transform_3(%arg0: i32) -> (i32, i32) {
    %c0_i32 = arith.constant 0 : i32
    %c0_i32_0 = arith.constant 0 : i32
    %c0_i32_1 = arith.constant 0 : i32
    return %c0_i32, %c0_i32_0 : i32, i32
  }
  func.func @transform_4(%arg0: i32) -> (i32, i32) {
    %c0_i32 = arith.constant 0 : i32
    %c0_i32_0 = arith.constant 0 : i32
    %c0_i32_1 = arith.constant 0 : i32
    return %c0_i32, %c0_i32_0 : i32, i32
  }
  func.func @transform_5(%arg0: i32) -> (i32, i32) {
    %c0_i32 = arith.constant 0 : i32
    %c0_i32_0 = arith.constant 0 : i32
    %c0_i32_1 = arith.constant 0 : i32
    return %c0_i32, %c0_i32_0 : i32, i32
  }
  func.func @transform_6(%arg0: i32) -> (i32, i32) {
    %c0_i32 = arith.constant 0 : i32
    %c0_i32_0 = arith.constant 0 : i32
    %c0_i32_1 = arith.constant 0 : i32
    return %c0_i32, %c0_i32_0 : i32, i32
  }
  func.func @transform_7(%arg0: i32) -> (i32, i32) {
    %c0_i32 = arith.constant 0 : i32
    %c0_i32_0 = arith.constant 0 : i32
    %c0_i32_1 = arith.constant 0 : i32
    return %c0_i32, %c0_i32_0 : i32, i32
  }
  func.func @transform_8(%arg0: i32) -> (i32, i32) {
    %c0_i32 = arith.constant 0 : i32
    %c0_i32_0 = arith.constant 0 : i32
    return %arg0, %c0_i32 : i32, i32
  }
  func.func @transform_9(%arg0: i32) -> (i32, i32) {
    %c0_i32 = arith.constant 0 : i32
    %c0_i32_0 = arith.constant 0 : i32
    return %arg0, %c0_i32 : i32, i32
  }
  func.func @transform_10(%arg0: i32) -> (i32, i32) {
    %c0_i32 = arith.constant 0 : i32
    %c0_i32_0 = arith.constant 0 : i32
    return %arg0, %c0_i32 : i32, i32
  }
}

</mosaic_0001>

<llo_original>
// kernel: head_forward.2
$region0: #{head_forward.2}
  #allocation0 [shape = 'u32[]', space=smem, size = 0x4, offset = 0x4, fixed_abs, tag = 'smem constant byte address 0x4 - core index']
  #allocation1 [shape = 'u32[144,128]{1,0:T(1,128)}', space=vmem, size = 0x12000, scoped, tag = 'internal scratch']
  %s0 = inlined_call_operand.vmem [shape: f32[2,32], index: 0, kind: input, shape index: {}]
  %s1 = inlined_call_operand.vmem [shape: bf16[32,32], index: 1, kind: input, shape index: {}]
  %s2 = inlined_call_operand.hbm [shape: bf16[9,32,96], index: 2, kind: input, shape index: {}]
  %s3 = inlined_call_operand.vmem [shape: f32[9,1,96], index: 3, kind: input, shape index: {}]
  %s4 = inlined_call_operand.vmem [shape: f32[9,1,96], index: 4, kind: input, shape index: {}]
  %s5 = inlined_call_operand.vmem [shape: f32[9,2,96], index: 5, kind: output, shape index: {}]
  %s6 = sld [smem:[#allocation0]]
  $region57: #{head_forward.2} parent=0
    _
  %s8 = ssub.s32 1, %s6
  %s9 = scalar_select 0, %s8, %s6
  $region1: #{head_forward.2} parent=0
    #allocation2 [shape = 'u8[16384]{0}', space=vmem, size = 0x4000, scoped, tag = 'input window, operand 2']
    #allocation3 [shape = 's32[2]{0}', space=sflag, size = 0x8, scoped, tag = 'scoped memory for head_forward.2']
    %10 = vsyncpa [#allocation3], 0
    %s11 = scalar_lea.sflag [#allocation3], 1
    %12 = vsyncpa %s11, 0
    loop: start=0, step=1, limit=11
    $region2: #{head_forward.2} parent=1 // loop_pre_header
      _
    $region3: #{head_forward.2} parent=1 // loop_header
      %s14 = sphi 0, %s18
      %p15 = scmp.ge.s32.totalorder %s14, 11
      %s22 = sphi 0, %s22
      %s24 = sphi 0, %s22
      %s25 = sphi 0, %s24
      %s39 = sphi 0, %s25
      %s43 = sphi 0, %s43
      %s45 = sphi 0, %s43
      %s46 = sphi 0, %s45
      %s60 = sphi 0, %s46
      %s66 = sphi 0, %s68
      %s69 = sphi 0, %s66
      %s70 = sphi 0, %s69
      %s86 = sphi 0, %s70
      %s92 = sphi 0, %s94
      %s95 = sphi 0, %s92
      %s96 = sphi 0, %s95
      %s112 = sphi 0, %s96
      %s118 = sphi 0, %s120
      %s121 = sphi 0, %s118
      %s122 = sphi 0, %s121
      %s138 = sphi 0, %s122
      %s144 = sphi 0, %s146
      %s147 = sphi 0, %s144
      %s148 = sphi 0, %s147
      %s164 = sphi 0, %s148
    $region4: #{head_forward.2} parent=1 // loop_header_branch
      %17 = sbr.rel (%p15) target = $region8
    $region5: #{head_forward.2} parent=1 // loop_body
      %s19 = ssub.s32 %s14, 1
      %s20 = ssub.s32 %s14, 2
      %s21 = sadd.s32 %s14, 1
      %s23 = sadd.s32 %s22, 1
      %p26 = scmp.eq.s32.totalorder %s14, 8
      %p27 = scmp.ne.s32.totalorder %s22, %s24
      %p28 = scmp.eq.s32.totalorder %s14, 0
      %p29 = por %p27, %p28
      %p30 = scmp.ne.s32.totalorder %s22, %s24
      %p31 = scmp.eq.s32.totalorder %s19, 8
      %p32 = por %p30, %p31
      %p33 = scmp.ne.s32.totalorder %s24, %s25
      %p34 = scmp.eq.s32.totalorder %s19, 0
      %p35 = por %p33, %p34
      %p36 = scmp.ne.s32.totalorder %s24, %s25
      %p37 = scmp.eq.s32.totalorder %s20, 8
      %p38 = por %p36, %p37
      %p40 = scmp.ne.s32.totalorder %s25, %s39
      %p41 = scmp.eq.s32.totalorder %s20, 0
      %p42 = por %p40, %p41
      %s44 = sadd.s32 %s43, 1
      %p47 = scmp.eq.s32.totalorder %s14, 8
      %p48 = scmp.ne.s32.totalorder %s43, %s45
      %p49 = scmp.eq.s32.totalorder %s14, 0
      %p50 = por %p48, %p49
      %p51 = scmp.ne.s32.totalorder %s43, %s45
      %p52 = scmp.eq.s32.totalorder %s19, 8
      %p53 = por %p51, %p52
      %p54 = scmp.ne.s32.totalorder %s45, %s46
      %p55 = scmp.eq.s32.totalorder %s19, 0
      %p56 = por %p54, %p55
      %p57 = scmp.ne.s32.totalorder %s45, %s46
      %p58 = scmp.eq.s32.totalorder %s20, 8
      %p59 = por %p57, %p58
      %p61 = scmp.ne.s32.totalorder %s46, %s60
      %p62 = scmp.eq.s32.totalorder %s20, 0
      %p63 = por %p61, %p62
      %s64 = ssub.s32 %s14, %s21
      %p65 = scmp.eq.s32.totalorder %s64, 0
      %s67 = sadd.s32 %s66, 1
      %s68 = scalar_select %p65, %s66, %s67
      %p71 = pneg %p65
      %p72 = scmp.eq.s32.totalorder %s14, 8
      %p73 = por %p71, %p72
      %p74 = scmp.ne.s32.totalorder %s66, %s69
      %p75 = scmp.eq.s32.totalorder %s14, 0
      %p76 = por %p74, %p75
      %p77 = scmp.ne.s32.totalorder %s66, %s69
      %p78 = scmp.eq.s32.totalorder %s19, 8
      %p79 = por %p77, %p78
      %p80 = scmp.ne.s32.totalorder %s69, %s70
      %p81 = scmp.eq.s32.totalorder %s19, 0
      %p82 = por %p80, %p81
      %p83 = scmp.ne.s32.totalorder %s69, %s70
      %p84 = scmp.eq.s32.totalorder %s20, 8
      %p85 = por %p83, %p84
      %p87 = scmp.ne.s32.totalorder %s70, %s86
      %p88 = scmp.eq.s32.totalorder %s20, 0
      %p89 = por %p87, %p88
      %s90 = ssub.s32 %s14, %s21
      %p91 = scmp.eq.s32.totalorder %s90, 0
      %s93 = sadd.s32 %s92, 1
      %s94 = scalar_select %p91, %s92, %s93
      %p97 = pneg %p91
      %p98 = scmp.eq.s32.totalorder %s14, 8
      %p99 = por %p97, %p98
      %p100 = scmp.ne.s32.totalorder %s92, %s95
      %p101 = scmp.eq.s32.totalorder %s14, 0
      %p102 = por %p100, %p101
      %p103 = scmp.ne.s32.totalorder %s92, %s95
      %p104 = scmp.eq.s32.totalorder %s19, 8
      %p105 = por %p103, %p104
      %p106 = scmp.ne.s32.totalorder %s95, %s96
      %p107 = scmp.eq.s32.totalorder %s19, 0
      %p108 = por %p106, %p107
      %p109 = scmp.ne.s32.totalorder %s95, %s96
      %p110 = scmp.eq.s32.totalorder %s20, 8
      %p111 = por %p109, %p110
      %p113 = scmp.ne.s32.totalorder %s96, %s112
      %p114 = scmp.eq.s32.totalorder %s20, 0
      %p115 = por %p113, %p114
      %s116 = ssub.s32 %s14, %s21
      %p117 = scmp.eq.s32.totalorder %s116, 0
      %s119 = sadd.s32 %s118, 1
      %s120 = scalar_select %p117, %s118, %s119
      %p123 = pneg %p117
      %p124 = scmp.eq.s32.totalorder %s14, 8
      %p125 = por %p123, %p124
      %p126 = scmp.ne.s32.totalorder %s118, %s121
      %p127 = scmp.eq.s32.totalorder %s14, 0
      %p128 = por %p126, %p127
      %p129 = scmp.ne.s32.totalorder %s118, %s121
      %p130 = scmp.eq.s32.totalorder %s19, 8
      %p131 = por %p129, %p130
      %p132 = scmp.ne.s32.totalorder %s121, %s122
      %p133 = scmp.eq.s32.totalorder %s19, 0
      %p134 = por %p132, %p133
      %p135 = scmp.ne.s32.totalorder %s121, %s122
      %p136 = scmp.eq.s32.totalorder %s20, 8
      %p137 = por %p135, %p136
      %p139 = scmp.ne.s32.totalorder %s122, %s138
      %p140 = scmp.eq.s32.totalorder %s20, 0
      %p141 = por %p139, %p140
      %s142 = ssub.s32 %s14, %s21
      %p143 = scmp.eq.s32.totalorder %s142, 0
      %s145 = sadd.s32 %s144, 1
      %s146 = scalar_select %p143, %s144, %s145
      %p149 = pneg %p143
      %p150 = scmp.eq.s32.totalorder %s14, 8
      %p151 = por %p149, %p150
      %p152 = scmp.ne.s32.totalorder %s144, %s147
      %p153 = scmp.eq.s32.totalorder %s14, 0
      %p154 = por %p152, %p153
      %p155 = scmp.ne.s32.totalorder %s144, %s147
      %p156 = scmp.eq.s32.totalorder %s19, 8
      %p157 = por %p155, %p156
      %p158 = scmp.ne.s32.totalorder %s147, %s148
      %p159 = scmp.eq.s32.totalorder %s19, 0
      %p160 = por %p158, %p159
      %p161 = scmp.ne.s32.totalorder %s147, %s148
      %p162 = scmp.eq.s32.totalorder %s20, 8
      %p163 = por %p161, %p162
      %p165 = scmp.ne.s32.totalorder %s148, %s164
      %p166 = scmp.eq.s32.totalorder %s20, 0
      %p167 = por %p165, %p166
      %p168 = scmp.le.s32.totalorder 1, %s14
      %p169 = scmp.lt.s32.totalorder %s14, 10
      %p170 = pnand %p168, %p169
      %p171 = pneg %p170
      // Predicated region
      $region9: #{head_forward.2} parent=5 // pred_check
        _
      $region10: #{head_forward.2} parent=5 // pred_check_branch
        %173 = sbr.rel (%p170) target = $region12
      $region11: #{head_forward.2} parent=5 // pred_region
        %s174 = ssub.s32 %s14, 1
        // Predicated region
        $region13: #{head_forward.2} parent=11 // pred_check
          %p175 = pneg %p35
        $region14: #{head_forward.2} parent=11 // pred_check_branch
          %177 = sbr.rel (%p175) target = $region16
        $region15: #{head_forward.2} parent=11 // pred_region
          _
        $region16: #{head_forward.2} parent=11 // pred_fallthru
          _
        // Predicated region
        $region17: #{head_forward.2} parent=11 // pred_check
          %p178 = pneg %p56
        $region18: #{head_forward.2} parent=11 // pred_check_branch
          %180 = sbr.rel (%p178) target = $region20
        $region19: #{head_forward.2} parent=11 // pred_region
          _
        $region20: #{head_forward.2} parent=11 // pred_fallthru
          _
      $region12: #{head_forward.2} parent=5 // pred_fallthru
        _
      %p181 = scmp.lt.s32.totalorder %s14, 9
      // Predicated region
      $region21: #{head_forward.2} parent=5 // pred_check
        %p182 = pneg %p181
      $region22: #{head_forward.2} parent=5 // pred_check_branch
        %184 = sbr.rel (%p182) target = $region24
      $region23: #{head_forward.2} parent=5 // pred_region
        // Predicated region
        $region25: #{head_forward.2} parent=23 // pred_check
          %p185 = pneg %p76
        $region26: #{head_forward.2} parent=23 // pred_check_branch
          %187 = sbr.rel (%p185) target = $region28
        $region27: #{head_forward.2} parent=23 // pred_region
          %s188 = sand.u32 %s66, 1
          %s189 = scalar_lea.sflag [#allocation3], %s188
          %s190 = sand.u32 %s66, 1
          %s191 = smul.addr %s190, 16
          %s192 = scalar_lea.vmem [#allocation2], %s191
          %s194 = ssub.s32 256, 256
          %195 = vsyncadd %s189, %s194
          %s196 = smul.addr %s14, 4
          %s197 = smul.addr %s196, 64
          %s198 = scalar_lea.hbm %s2, %s197
          %s199 = sshll.u32 %s192, 4
          %s200 = int_to_ptr.vmem [resolvable:$true] %s199
          %205 = dma.hbm_to_vmem [thread:$0]  %s198, 256, %s200, %s189, 64, 64, 4
        $region28: #{head_forward.2} parent=23 // pred_fallthru
          _
        // Predicated region
        $region29: #{head_forward.2} parent=23 // pred_check
          %p206 = pneg %p102
        $region30: #{head_forward.2} parent=23 // pred_check_branch
          %208 = sbr.rel (%p206) target = $region32
        $region31: #{head_forward.2} parent=23 // pred_region
          %p209 = scmp.lt.s32.totalorder %s14, 8
          %s210 = scalar_select %p209, %s14, 8
          %s211 = scalar_lea.vmem %s3, %s210
        $region32: #{head_forward.2} parent=23 // pred_fallthru
          _
        // Predicated region
        $region33: #{head_forward.2} parent=23 // pred_check
          %p212 = pneg %p128
        $region34: #{head_forward.2} parent=23 // pred_check_branch
          %214 = sbr.rel (%p212) target = $region36
        $region35: #{head_forward.2} parent=23 // pred_region
          %p215 = scmp.lt.s32.totalorder %s14, 8
          %s216 = scalar_select %p215, %s14, 8
          %s217 = scalar_lea.vmem %s4, %s216
        $region36: #{head_forward.2} parent=23 // pred_fallthru
          _
      $region24: #{head_forward.2} parent=5 // pred_fallthru
        _
      %p218 = scmp.le.s32.totalorder 1, %s14
      %p219 = scmp.lt.s32.totalorder %s14, 10
      %p220 = pnand %p218, %p219
      %p221 = pneg %p220
      // Predicated region
      $region37: #{head_forward.2} parent=5 // pred_check
        _
      $region38: #{head_forward.2} parent=5 // pred_check_branch
        %223 = sbr.rel (%p220) target = $region40
      $region39: #{head_forward.2} parent=5 // pred_region
        %s224 = ssub.s32 %s14, 1
        %s225 = sand.u32 %s69, 1
        %s226 = scalar_lea.sflag [#allocation3], %s225
        %s227 = sand.u32 %s69, 1
        %s228 = smul.addr %s227, 16
        %s229 = scalar_lea.vmem [#allocation2], %s228
        // Predicated region
        $region41: #{head_forward.2} parent=39 // pred_check
          %p230 = pneg %p82
        $region42: #{head_forward.2} parent=39 // pred_check_branch
          %232 = sbr.rel (%p230) target = $region44
        $region43: #{head_forward.2} parent=39 // pred_region
          %233 = dma.done %s226, 256
        $region44: #{head_forward.2} parent=39 // pred_fallthru
          _
        %p234 = pneg %p35
        %p235 = pneg %p32
        %p236 = pneg %p56
        %p237 = pneg %p53
        %s238 = sand.u32 %s69, 1
        %s239 = scalar_lea.sflag [#allocation3], %s238
        %s240 = sand.u32 %s69, 1
        %s241 = smul.addr %s240, 16
        %s242 = scalar_lea.vmem [#allocation2], %s241
        %p243 = pneg %p82
        %p244 = pneg %p79
        %p245 = scmp.lt.s32.totalorder %s19, 8
        %s246 = scalar_select %p245, %s19, 8
        %s247 = scalar_lea.vmem %s3, %s246
        %p248 = pneg %p108
        %p249 = pneg %p105
        %p250 = scmp.lt.s32.totalorder %s19, 8
        %s251 = scalar_select %p250, %s19, 8
        %s252 = scalar_lea.vmem %s4, %s251
        %p253 = pneg %p134
        %p254 = pneg %p131
        %p255 = pneg %p160
        %p256 = pneg %p157
        %p257 = scmp.lt.s32.totalorder %s19, 8
        %s258 = scalar_select %p257, %s19, 8
        %s259 = smul.addr %s258, 2
        %s260 = scalar_lea.vmem %s5, %s259
        %p261 = scmp.lt.s32.totalorder %s19, 8
        %s262 = scalar_select %p261, %s19, 8
        %s263 = scalar_lea.vmem %s3, %s262
        %p264 = scmp.lt.s32.totalorder %s19, 8
        %s265 = scalar_select %p264, %s19, 8
        %s266 = scalar_lea.vmem %s4, %s265
        %p267 = scmp.lt.s32.totalorder %s19, 8
        %s268 = scalar_select %p267, %s19, 8
        %s269 = smul.addr %s268, 2
        %s270 = scalar_lea.vmem %s5, %s269
        %v272 = vld [vmem:[%s1] sm:$0xf]
        %v273 = vld [vmem:[%s1 + $0x4] sm:$0xf]
        %v274 = vld [vmem:[%s1 + $0x8] sm:$0xf]
        %v275 = vld [vmem:[%s1 + $0xc] sm:$0xf]
        %v276 = vld [vmem:[%s229] sm:$0xf]
        %v277 = vld [vmem:[%s229 + $0x4] sm:$0xf]
        %v278 = vld [vmem:[%s229 + $0x8] sm:$0xf]
        %v279 = vld [vmem:[%s229 + $0xc] sm:$0xf]
        %v284 = vunpack.c.l.b16 %v272
        %v285 = vunpack.c.l.b16 %v273
        %v286 = vunpack.c.l.b16 %v274
        %v287 = vunpack.c.l.b16 %v275
        %v288 = vpack.c.b16 %v285, %v284
        %v289 = vpack.c.b16 %v287, %v286
        %v294 = vunpack.c.l.b16 %v276
        %v295 = vunpack.c.l.b16 %v277
        %v296 = vunpack.c.l.b16 %v278
        %v297 = vunpack.c.l.b16 %v279
        %v298 = vpack.c.b16 %v295, %v294
        %v299 = vpack.c.b16 %v297, %v296
        %vm302 = vcmask 261120
        %v304 = vsel %vm302, %v288, 0
        %v307 = vsel %vm302, %v289, 0
        %309 = vmatprep.subr.bf16.mxu0 0
        %310 = vmatpush1.bf16.msra.mxu0 %v298
        %311 = vmatprep.subr.bf16.mxu0 0
        %312 = vmatpush1.bf16.msra.mxu0 %v299
        %313 = vmatprep.subr.bf16.mxu0 0
        %314 = vmatpush1.bf16.msra.mxu0 0
        %315 = vmatprep.subr.bf16.mxu0 0
        %316 = vmatpush1.bf16.msra.mxu0 0
        %317 = vmatprep.subr.bf16.mxu0 0
        %318 = vmatpush1.bf16.msra.mxu0 0
        %319 = vmatprep.subr.bf16.mxu0 0
        %320 = vmatpush1.bf16.msra.mxu0 0
        %321 = vmatprep.subr.bf16.mxu0 0
        %322 = vmatpush1.bf16.msra.mxu0 0
        %323 = vmatprep.subr.bf16.mxu0 0
        %324 = vmatpush1.bf16.msra.mxu0 0
        %325 = vmatprep.subr.bf16.mxu0 0
        %326 = vmatpush1.bf16.msra.mxu0 0
        %327 = vmatprep.subr.bf16.mxu0 0
        %328 = vmatpush1.bf16.msra.mxu0 0
        %329 = vmatprep.subr.bf16.mxu0 0
        %330 = vmatpush1.bf16.msra.mxu0 0
        %331 = vmatprep.subr.bf16.mxu0 0
        %332 = vmatpush1.bf16.msra.mxu0 0
        %333 = vmatprep.subr.bf16.mxu0 0
        %334 = vmatpush1.bf16.msra.mxu0 0
        %335 = vmatprep.subr.bf16.mxu0 0
        %336 = vmatpush1.bf16.msra.mxu0 0
        %337 = vmatprep.subr.bf16.mxu0 0
        %338 = vmatpush1.bf16.msra.mxu0 0
        %339 = vmatprep.subr.bf16.mxu0 0
        %340 = vmatpush1.bf16.msra.mxu0 0
        %341 = vmatprep.mubr.bf16.mxu0 0
        %342 = vmatmul.mubr.bf16.gmra.mrb[0].mxu0 %v304
        %v343 = vpop.f32.mrb[0].mxu0
        %v344 = vadd.f32 0.0, %v343
        %v345 = vpop.f32.mrb[0].mxu0
        %v346 = vpop.f32.mrb[0].mxu0
        %v347 = vadd.f32 0.0, %v346
        %v348 = vpop.f32.mrb[0].mxu0
        %349 = vmatprep.mubr.bf16.mxu0 0
        %350 = vmatmul.mubr.bf16.gmra.mrb[0].mxu0 %v307
        %v351 = vpop.f32.mrb[0].mxu0
        %v352 = vadd.f32 0.0, %v351
        %v353 = vpop.f32.mrb[0].mxu0
        %v354 = vpop.f32.mrb[0].mxu0
        %v355 = vadd.f32 0.0, %v354
        %v356 = vpop.f32.mrb[0].mxu0
        %357 = vdwg.mxu0
        %v358 = vld [vmem:[%s263] sm:$0x1]
        %v360 = vlaneseq
        %v361 = vshrl.u32 %v360, 7
        %v362 = vsub.s32 0, %v361
        %v363 = vrot.slane %v358, %v362
        %v365 = vmul.f32 %v344, %v363
        %v366 = vmul.f32 %v347, %v363
        %v367 = vmul.f32 %v352, %v363
        %v368 = vmul.f32 %v355, %v363
        %v369 = vld [vmem:[%s266] sm:$0x1]
        %v371 = vlaneseq
        %v372 = vshrl.u32 %v371, 7
        %v373 = vsub.s32 0, %v372
        %v374 = vrot.slane %v369, %v373
        %v376 = vadd.f32 %v365, %v374
        %v377 = vadd.f32 %v366, %v374
        %v378 = vadd.f32 %v367, %v374
        %v379 = vadd.f32 %v368, %v374
        %v380 = vmax.f32 %v376, 0.0
        %v381 = vmax.f32 %v377, 0.0
        %v382 = vmax.f32 %v378, 0.0
        %v383 = vmax.f32 %v379, 0.0
        %v384 = vld [vmem:[%s0] sm:$0x3]
        %v386 = vsel %vm302, %v384, 0
        %388 = vmatprep.subr.mxu0 0.0
        %389 = vmatpush1.msra.mxu0 %v380
        %390 = vmatprep.subr.mxu0 0.0
        %391 = vmatpush1.msra.mxu0 %v381
        %392 = vmatprep.subr.mxu0 0.0
        %393 = vmatpush1.msra.mxu0 %v382
        %394 = vmatprep.subr.mxu0 0.0
        %395 = vmatpush1.msra.mxu0 %v383
        %396 = vmatprep.subr.mxu0 0.0
        %397 = vmatpush1.msra.mxu0 0.0
        %398 = vmatprep.subr.mxu0 0.0
        %399 = vmatpush1.msra.mxu0 0.0
        %400 = vmatprep.subr.mxu0 0.0
        %401 = vmatpush1.msra.mxu0 0.0
        %402 = vmatprep.subr.mxu0 0.0
        %403 = vmatpush1.msra.mxu0 0.0
        %404 = vmatprep.subr.mxu0 0.0
        %405 = vmatpush1.msra.mxu0 0.0
        %406 = vmatprep.subr.mxu0 0.0
        %407 = vmatpush1.msra.mxu0 0.0
        %408 = vmatprep.subr.mxu0 0.0
        %409 = vmatpush1.msra.mxu0 0.0
        %410 = vmatprep.subr.mxu0 0.0
        %411 = vmatpush1.msra.mxu0 0.0
        %412 = vmatprep.subr.mxu0 0.0
        %413 = vmatpush1.msra.mxu0 0.0
        %414 = vmatprep.subr.mxu0 0.0
        %415 = vmatpush1.msra.mxu0 0.0
        %416 = vmatprep.subr.mxu0 0.0
        %417 = vmatpush1.msra.mxu0 0.0
        %418 = vmatprep.subr.mxu0 0.0
        %419 = vmatpush1.msra.mxu0 0.0
        %420 = vmatprep.subr.mxu0 0.0
        %421 = vmatpush1.msra.mxu0 0.0
        %422 = vmatprep.subr.mxu0 0.0
        %423 = vmatpush1.msra.mxu0 0.0
        %424 = vmatprep.subr.mxu0 0.0
        %425 = vmatpush1.msra.mxu0 0.0
        %426 = vmatprep.subr.mxu0 0.0
        %427 = vmatpush1.msra.mxu0 0.0
        %428 = vmatprep.subr.mxu0 0.0
        %429 = vmatpush1.msra.mxu0 0.0
        %430 = vmatprep.subr.mxu0 0.0
        %431 = vmatpush1.msra.mxu0 0.0
        %432 = vmatprep.subr.mxu0 0.0
        %433 = vmatpush1.msra.mxu0 0.0
        %434 = vmatprep.subr.mxu0 0.0
        %435 = vmatpush1.msra.mxu0 0.0
        %436 = vmatprep.subr.mxu0 0.0
        %437 = vmatpush1.msra.mxu0 0.0
        %438 = vmatprep.subr.mxu0 0.0
        %439 = vmatpush1.msra.mxu0 0.0
        %440 = vmatprep.subr.mxu0 0.0
        %441 = vmatpush1.msra.mxu0 0.0
        %442 = vmatprep.subr.mxu0 0.0
        %443 = vmatpush1.msra.mxu0 0.0
        %444 = vmatprep.subr.mxu0 0.0
        %445 = vmatpush1.msra.mxu0 0.0
        %446 = vmatprep.subr.mxu0 0.0
        %447 = vmatpush1.msra.mxu0 0.0
        %448 = vmatprep.subr.mxu0 0.0
        %449 = vmatpush1.msra.mxu0 0.0
        %450 = vmatprep.subr.mxu0 0.0
        %451 = vmatpush1.msra.mxu0 0.0
        %452 = vmatprep.mubr.f32.mxu0 0.0
        %453 = vmatmul.mubr.f32.gmra.mrb[0].mxu0 %v386
        %v454 = vpop.f32.mrb[0].mxu0
        %v455 = vadd.f32 0.0, %v454
        %v456 = vpop.f32.mrb[0].mxu0
        %457 = vdwg.mxu0
        %vm458 = vcmask 779264
        %459 = vst.msk [vmem:[%s270] sm:$0x3] %vm458, %v455
        %p460 = scmp.lt.s32.totalorder %s19, 8
        %s461 = scalar_select %p460, %s19, 8
        %s462 = smul.addr %s461, 2
        %s463 = scalar_lea.vmem %s5, %s462
        // Predicated region
        $region45: #{head_forward.2} parent=39 // pred_check
          %p464 = pneg %p157
        $region46: #{head_forward.2} parent=39 // pred_check_branch
          %466 = sbr.rel (%p464) target = $region48
        $region47: #{head_forward.2} parent=39 // pred_region
          _
        $region48: #{head_forward.2} parent=39 // pred_fallthru
          _
      $region40: #{head_forward.2} parent=5 // pred_fallthru
        _
      %p467 = scmp.le.s32.totalorder 2, %s14
      // Predicated region
      $region49: #{head_forward.2} parent=5 // pred_check
        %p468 = pneg %p467
      $region50: #{head_forward.2} parent=5 // pred_check_branch
        %470 = sbr.rel (%p468) target = $region52
      $region51: #{head_forward.2} parent=5 // pred_region
        %s471 = ssub.s32 %s14, 2
        // Predicated region
        $region53: #{head_forward.2} parent=51 // pred_check
          %p472 = pneg %p163
        $region54: #{head_forward.2} parent=51 // pred_check_branch
          %474 = sbr.rel (%p472) target = $region56
        $region55: #{head_forward.2} parent=51 // pred_region
          %p475 = scmp.lt.s32.totalorder %s20, 8
          %s476 = scalar_select %p475, %s20, 8
          %s477 = smul.addr %s476, 2
          %s478 = scalar_lea.vmem %s5, %s477
        $region56: #{head_forward.2} parent=51 // pred_fallthru
          _
      $region52: #{head_forward.2} parent=5 // pred_fallthru
        _
    $region6: #{head_forward.2} parent=1 // loop_footer
      %s18 = sadd.s32 1, %s14
    $region7: #{head_forward.2} parent=1 // loop_footer_branch
      %13 = sbr.rel target = $region3
    $region8: #{head_forward.2} parent=1 // loop_exit
      _
    %479 = vsyncpa [#allocation3], 1
    %s480 = scalar_lea.sflag [#allocation3], 1
    %481 = vsyncpa %s480, 1

// kernel: head_forward.3
$region0: #{head_forward.3}
  #allocation0 [shape = 'u32[]', space=smem, size = 0x4, offset = 0x4, fixed_abs, tag = 'smem constant byte address 0x4 - core index']
  #allocation1 [shape = 'u32[144,128]{1,0:T(1,128)}', space=vmem, size = 0x12000, scoped, tag = 'internal scratch']
  %s0 = inlined_call_operand.vmem [shape: f32[2,27,32], index: 0, kind: input, shape index: {}]
  %s1 = inlined_call_operand.vmem [shape: bf16[32,64], index: 1, kind: input, shape index: {}]
  %s2 = inlined_call_operand.vmem [shape: f32[1,64], index: 2, kind: input, shape index: {}]
  %s3 = inlined_call_operand.vmem [shape: f32[27,1], index: 3, kind: input, shape index: {}]
  %s4 = inlined_call_operand.vmem [shape: f32[27,1], index: 4, kind: input, shape index: {}]
  %s5 = inlined_call_operand.vmem [shape: f32[27,32], index: 5, kind: input, shape index: {}]
  %s6 = inlined_call_operand.vmem [shape: f32[27,32], index: 6, kind: input, shape index: {}]
  %s7 = inlined_call_operand.vmem [shape: f32[27,32], index: 7, kind: input, shape index: {}]
  %s8 = inlined_call_operand.vmem [shape: f32[2,27], index: 8, kind: output, shape index: {0}]
  %s9 = inlined_call_operand.vmem [shape: f32[2,27], index: 9, kind: output, shape index: {1}]
  %s10 = inlined_call_operand.vmem [shape: f32[2,27], index: 10, kind: output, shape index: {2}]
  %11 = xla_tuple %s8, %s9, %s10
  %s12 = sld [smem:[#allocation0]]
  $region58: #{head_forward.3} parent=0
    _
  %s14 = ssub.s32 1, %s12
  %s15 = scalar_select 0, %s14, %s12
  // Predicated region
  $region2: #{head_forward.3} parent=0 // pred_check
    _
  $region3: #{head_forward.3} parent=0 // pred_check_branch
    %17 = sbr.rel (0) target = $region5
  $region4: #{head_forward.3} parent=0 // pred_region
    _
  $region5: #{head_forward.3} parent=0 // pred_fallthru
    _
  // Predicated region
  $region6: #{head_forward.3} parent=0 // pred_check
    _
  $region7: #{head_forward.3} parent=0 // pred_check_branch
    %19 = sbr.rel (0) target = $region9
  $region8: #{head_forward.3} parent=0 // pred_region
    _
  $region9: #{head_forward.3} parent=0 // pred_fallthru
    _
  // Predicated region
  $region10: #{head_forward.3} parent=0 // pred_check
    _
  $region11: #{head_forward.3} parent=0 // pred_check_branch
    %21 = sbr.rel (0) target = $region13
  $region12: #{head_forward.3} parent=0 // pred_region
    _
  $region13: #{head_forward.3} parent=0 // pred_fallthru
    _
  // Predicated region
  $region14: #{head_forward.3} parent=0 // pred_check
    _
  $region15: #{head_forward.3} parent=0 // pred_check_branch
    %23 = sbr.rel (0) target = $region17
  $region16: #{head_forward.3} parent=0 // pred_region
    _
  $region17: #{head_forward.3} parent=0 // pred_fallthru
    _
  // Predicated region
  $region18: #{head_forward.3} parent=0 // pred_check
    _
  $region19: #{head_forward.3} parent=0 // pred_check_branch
    %25 = sbr.rel (0) target = $region21
  $region20: #{head_forward.3} parent=0 // pred_region
    _
  $region21: #{head_forward.3} parent=0 // pred_fallthru
    _
  // Predicated region
  $region22: #{head_forward.3} parent=0 // pred_check
    _
  $region23: #{head_forward.3} parent=0 // pred_check_branch
    %27 = sbr.rel (0) target = $region25
  $region24: #{head_forward.3} parent=0 // pred_region
    _
  $region25: #{head_forward.3} parent=0 // pred_fallthru
    _
  // Predicated region
  $region26: #{head_forward.3} parent=0 // pred_check
    _
  $region27: #{head_forward.3} parent=0 // pred_check_branch
    %29 = sbr.rel (0) target = $region29
  $region28: #{head_forward.3} parent=0 // pred_region
    _
  $region29: #{head_forward.3} parent=0 // pred_fallthru
    _
  // Predicated region
  $region30: #{head_forward.3} parent=0 // pred_check
    _
  $region31: #{head_forward.3} parent=0 // pred_check_branch
    %31 = sbr.rel (0) target = $region33
  $region32: #{head_forward.3} parent=0 // pred_region
    _
  $region33: #{head_forward.3} parent=0 // pred_fallthru
    _
  %v33 = vld [vmem:[%s0] sm:$0xff]
  %v34 = vld [vmem:[%s0 + $0x8] sm:$0xff]
  %v35 = vld [vmem:[%s0 + $0x10] sm:$0xff]
  %v36 = vld [vmem:[%s0 + $0x18] sm:$0x7]
  %v37 = vld [vmem:[%s0 + $0x20] sm:$0xff]
  %v38 = vld [vmem:[%s0 + $0x28] sm:$0xff]
  %v39 = vld [vmem:[%s0 + $0x30] sm:$0xff]
  %v40 = vld [vmem:[%s0 + $0x38] sm:$0x7]
  %v49 = vcombine.high %v33, %v33
  %v51 = vunpack.c.l.s4 1966171168
  %v52 = vunpack.c.0.s8 %v51
  %v53 = vlaneseq
  %v54 = vshrl.u32 %v53, 7
  %v55 = vsub.s32 %v52, %v54
  %v56 = vrot.slane %v33, %v55
  %v58 = vunpack.c.l.s4 1966171168
  %v59 = vunpack.c.0.s8 %v58
  %v60 = vlaneseq
  %v61 = vshrl.u32 %v60, 7
  %v62 = vsub.s32 %v59, %v61
  %v63 = vrot.slane %v49, %v62
  %v64 = vcombine.high %v56, %v56
  %v65 = vcombine.high %v63, %v63
  %v67 = vunpack.c.l.s4 1966171168
  %v68 = vunpack.c.0.s8 %v67
  %v69 = vlaneseq
  %v70 = vshrl.u32 %v69, 7
  %v71 = vsub.s32 %v68, %v70
  %v72 = vrot.slane %v56, %v71
  %v74 = vunpack.c.l.s4 1966171168
  %v75 = vunpack.c.0.s8 %v74
  %v76 = vlaneseq
  %v77 = vshrl.u32 %v76, 7
  %v78 = vsub.s32 %v75, %v77
  %v79 = vrot.slane %v63, %v78
  %v81 = vunpack.c.l.s4 1966171168
  %v82 = vunpack.c.0.s8 %v81
  %v83 = vlaneseq
  %v84 = vshrl.u32 %v83, 7
  %v85 = vsub.s32 %v82, %v84
  %v86 = vrot.slane %v64, %v85
  %v88 = vunpack.c.l.s4 1966171168
  %v89 = vunpack.c.0.s8 %v88
  %v90 = vlaneseq
  %v91 = vshrl.u32 %v90, 7
  %v92 = vsub.s32 %v89, %v91
  %v93 = vrot.slane %v65, %v92
  %v94 = vcombine.high %v72, %v72
  %v95 = vcombine.high %v79, %v79
  %v96 = vcombine.high %v86, %v86
  %v97 = vcombine.high %v93, %v93
  %v98 = vcombine.high %v34, %v34
  %v100 = vunpack.c.l.s4 1966171168
  %v101 = vunpack.c.0.s8 %v100
  %v102 = vlaneseq
  %v103 = vshrl.u32 %v102, 7
  %v104 = vsub.s32 %v101, %v103
  %v105 = vrot.slane %v34, %v104
  %v107 = vunpack.c.l.s4 1966171168
  %v108 = vunpack.c.0.s8 %v107
  %v109 = vlaneseq
  %v110 = vshrl.u32 %v109, 7
  %v111 = vsub.s32 %v108, %v110
  %v112 = vrot.slane %v98, %v111
  %v113 = vcombine.high %v105, %v105
  %v114 = vcombine.high %v112, %v112
  %v116 = vunpack.c.l.s4 1966171168
  %v117 = vunpack.c.0.s8 %v116
  %v118 = vlaneseq
  %v119 = vshrl.u32 %v118, 7
  %v120 = vsub.s32 %v117, %v119
  %v121 = vrot.slane %v105, %v120
  %v123 = vunpack.c.l.s4 1966171168
  %v124 = vunpack.c.0.s8 %v123
  %v125 = vlaneseq
  %v126 = vshrl.u32 %v125, 7
  %v127 = vsub.s32 %v124, %v126
  %v128 = vrot.slane %v112, %v127
  %v130 = vunpack.c.l.s4 1966171168
  %v131 = vunpack.c.0.s8 %v130
  %v132 = vlaneseq
  %v133 = vshrl.u32 %v132, 7
  %v134 = vsub.s32 %v131, %v133
  %v135 = vrot.slane %v113, %v134
  %v137 = vunpack.c.l.s4 1966171168
  %v138 = vunpack.c.0.s8 %v137
  %v139 = vlaneseq
  %v140 = vshrl.u32 %v139, 7
  %v141 = vsub.s32 %v138, %v140
  %v142 = vrot.slane %v114, %v141
  %v143 = vcombine.high %v121, %v121
  %v144 = vcombine.high %v128, %v128
  %v145 = vcombine.high %v135, %v135
  %v146 = vcombine.high %v142, %v142
  %v147 = vcombine.high %v35, %v35
  %v149 = vunpack.c.l.s4 1966171168
  %v150 = vunpack.c.0.s8 %v149
  %v151 = vlaneseq
  %v152 = vshrl.u32 %v151, 7
  %v153 = vsub.s32 %v150, %v152
  %v154 = vrot.slane %v35, %v153
  %v156 = vunpack.c.l.s4 1966171168
  %v157 = vunpack.c.0.s8 %v156
  %v158 = vlaneseq
  %v159 = vshrl.u32 %v158, 7
  %v160 = vsub.s32 %v157, %v159
  %v161 = vrot.slane %v147, %v160
  %v162 = vcombine.high %v154, %v154
  %v163 = vcombine.high %v161, %v161
  %v165 = vunpack.c.l.s4 1966171168
  %v166 = vunpack.c.0.s8 %v165
  %v167 = vlaneseq
  %v168 = vshrl.u32 %v167, 7
  %v169 = vsub.s32 %v166, %v168
  %v170 = vrot.slane %v154, %v169
  %v172 = vunpack.c.l.s4 1966171168
  %v173 = vunpack.c.0.s8 %v172
  %v174 = vlaneseq
  %v175 = vshrl.u32 %v174, 7
  %v176 = vsub.s32 %v173, %v175
  %v177 = vrot.slane %v161, %v176
  %v179 = vunpack.c.l.s4 1966171168
  %v180 = vunpack.c.0.s8 %v179
  %v181 = vlaneseq
  %v182 = vshrl.u32 %v181, 7
  %v183 = vsub.s32 %v180, %v182
  %v184 = vrot.slane %v162, %v183
  %v186 = vunpack.c.l.s4 1966171168
  %v187 = vunpack.c.0.s8 %v186
  %v188 = vlaneseq
  %v189 = vshrl.u32 %v188, 7
  %v190 = vsub.s32 %v187, %v189
  %v191 = vrot.slane %v163, %v190
  %v192 = vcombine.high %v170, %v170
  %v193 = vcombine.high %v177, %v177
  %v194 = vcombine.high %v184, %v184
  %v195 = vcombine.high %v191, %v191
  %v197 = vunpack.c.l.s4 1966171168
  %v198 = vunpack.c.0.s8 %v197
  %v199 = vlaneseq
  %v200 = vshrl.u32 %v199, 7
  %v201 = vsub.s32 %v198, %v200
  %v202 = vrot.slane %v36, %v201
  %v203 = vcombine.high %v202, %v202
  %v205 = vunpack.c.l.s4 1966171168
  %v206 = vunpack.c.0.s8 %v205
  %v207 = vlaneseq
  %v208 = vshrl.u32 %v207, 7
  %v209 = vsub.s32 %v206, %v208
  %v210 = vrot.slane %v202, %v209
  %v212 = vunpack.c.l.s4 1966171168
  %v213 = vunpack.c.0.s8 %v212
  %v214 = vlaneseq
  %v215 = vshrl.u32 %v214, 7
  %v216 = vsub.s32 %v213, %v215
  %v217 = vrot.slane %v203, %v216
  %v218 = vcombine.high %v210, %v210
  %v219 = vcombine.high %v37, %v37
  %v221 = vunpack.c.l.s4 1966171168
  %v222 = vunpack.c.0.s8 %v221
  %v223 = vlaneseq
  %v224 = vshrl.u32 %v223, 7
  %v225 = vsub.s32 %v222, %v224
  %v226 = vrot.slane %v37, %v225
  %v228 = vunpack.c.l.s4 1966171168
  %v229 = vunpack.c.0.s8 %v228
  %v230 = vlaneseq
  %v231 = vshrl.u32 %v230, 7
  %v232 = vsub.s32 %v229, %v231
  %v233 = vrot.slane %v219, %v232
  %v234 = vcombine.high %v226, %v226
  %v235 = vcombine.high %v233, %v233
  %v237 = vunpack.c.l.s4 1966171168
  %v238 = vunpack.c.0.s8 %v237
  %v239 = vlaneseq
  %v240 = vshrl.u32 %v239, 7
  %v241 = vsub.s32 %v238, %v240
  %v242 = vrot.slane %v226, %v241
  %v244 = vunpack.c.l.s4 1966171168
  %v245 = vunpack.c.0.s8 %v244
  %v246 = vlaneseq
  %v247 = vshrl.u32 %v246, 7
  %v248 = vsub.s32 %v245, %v247
  %v249 = vrot.slane %v233, %v248
  %v251 = vunpack.c.l.s4 1966171168
  %v252 = vunpack.c.0.s8 %v251
  %v253 = vlaneseq
  %v254 = vshrl.u32 %v253, 7
  %v255 = vsub.s32 %v252, %v254
  %v256 = vrot.slane %v234, %v255
  %v258 = vunpack.c.l.s4 1966171168
  %v259 = vunpack.c.0.s8 %v258
  %v260 = vlaneseq
  %v261 = vshrl.u32 %v260, 7
  %v262 = vsub.s32 %v259, %v261
  %v263 = vrot.slane %v235, %v262
  %v264 = vcombine.high %v242, %v242
  %v265 = vcombine.high %v249, %v249
  %v266 = vcombine.high %v256, %v256
  %v267 = vcombine.high %v263, %v263
  %v268 = vcombine.high %v38, %v38
  %v270 = vunpack.c.l.s4 1966171168
  %v271 = vunpack.c.0.s8 %v270
  %v272 = vlaneseq
  %v273 = vshrl.u32 %v272, 7
  %v274 = vsub.s32 %v271, %v273
  %v275 = vrot.slane %v38, %v274
  %v277 = vunpack.c.l.s4 1966171168
  %v278 = vunpack.c.0.s8 %v277
  %v279 = vlaneseq
  %v280 = vshrl.u32 %v279, 7
  %v281 = vsub.s32 %v278, %v280
  %v282 = vrot.slane %v268, %v281
  %v283 = vcombine.high %v275, %v275
  %v284 = vcombine.high %v282, %v282
  %v286 = vunpack.c.l.s4 1966171168
  %v287 = vunpack.c.0.s8 %v286
  %v288 = vlaneseq
  %v289 = vshrl.u32 %v288, 7
  %v290 = vsub.s32 %v287, %v289
  %v291 = vrot.slane %v275, %v290
  %v293 = vunpack.c.l.s4 1966171168
  %v294 = vunpack.c.0.s8 %v293
  %v295 = vlaneseq
  %v296 = vshrl.u32 %v295, 7
  %v297 = vsub.s32 %v294, %v296
  %v298 = vrot.slane %v282, %v297
  %v300 = vunpack.c.l.s4 1966171168
  %v301 = vunpack.c.0.s8 %v300
  %v302 = vlaneseq
  %v303 = vshrl.u32 %v302, 7
  %v304 = vsub.s32 %v301, %v303
  %v305 = vrot.slane %v283, %v304
  %v307 = vunpack.c.l.s4 1966171168
  %v308 = vunpack.c.0.s8 %v307
  %v309 = vlaneseq
  %v310 = vshrl.u32 %v309, 7
  %v311 = vsub.s32 %v308, %v310
  %v312 = vrot.slane %v284, %v311
  %v313 = vcombine.high %v291, %v291
  %v314 = vcombine.high %v298, %v298
  %v315 = vcombine.high %v305, %v305
  %v316 = vcombine.high %v312, %v312
  %v317 = vcombine.high %v39, %v39
  %v319 = vunpack.c.l.s4 1966171168
  %v320 = vunpack.c.0.s8 %v319
  %v321 = vlaneseq
  %v322 = vshrl.u32 %v321, 7
  %v323 = vsub.s32 %v320, %v322
  %v324 = vrot.slane %v39, %v323
  %v326 = vunpack.c.l.s4 1966171168
  %v327 = vunpack.c.0.s8 %v326
  %v328 = vlaneseq
  %v329 = vshrl.u32 %v328, 7
  %v330 = vsub.s32 %v327, %v329
  %v331 = vrot.slane %v317, %v330
  %v332 = vcombine.high %v324, %v324
  %v333 = vcombine.high %v331, %v331
  %v335 = vunpack.c.l.s4 1966171168
  %v336 = vunpack.c.0.s8 %v335
  %v337 = vlaneseq
  %v338 = vshrl.u32 %v337, 7
  %v339 = vsub.s32 %v336, %v338
  %v340 = vrot.slane %v324, %v339
  %v342 = vunpack.c.l.s4 1966171168
  %v343 = vunpack.c.0.s8 %v342
  %v344 = vlaneseq
  %v345 = vshrl.u32 %v344, 7
  %v346 = vsub.s32 %v343, %v345
  %v347 = vrot.slane %v331, %v346
  %v349 = vunpack.c.l.s4 1966171168
  %v350 = vunpack.c.0.s8 %v349
  %v351 = vlaneseq
  %v352 = vshrl.u32 %v351, 7
  %v353 = vsub.s32 %v350, %v352
  %v354 = vrot.slane %v332, %v353
  %v356 = vunpack.c.l.s4 1966171168
  %v357 = vunpack.c.0.s8 %v356
  %v358 = vlaneseq
  %v359 = vshrl.u32 %v358, 7
  %v360 = vsub.s32 %v357, %v359
  %v361 = vrot.slane %v333, %v360
  %v362 = vcombine.high %v340, %v340
  %v363 = vcombine.high %v347, %v347
  %v364 = vcombine.high %v354, %v354
  %v365 = vcombine.high %v361, %v361
  %v367 = vunpack.c.l.s4 1966171168
  %v368 = vunpack.c.0.s8 %v367
  %v369 = vlaneseq
  %v370 = vshrl.u32 %v369, 7
  %v371 = vsub.s32 %v368, %v370
  %v372 = vrot.slane %v40, %v371
  %v373 = vcombine.high %v372, %v372
  %v375 = vunpack.c.l.s4 1966171168
  %v376 = vunpack.c.0.s8 %v375
  %v377 = vlaneseq
  %v378 = vshrl.u32 %v377, 7
  %v379 = vsub.s32 %v376, %v378
  %v380 = vrot.slane %v372, %v379
  %v382 = vunpack.c.l.s4 1966171168
  %v383 = vunpack.c.0.s8 %v382
  %v384 = vlaneseq
  %v385 = vshrl.u32 %v384, 7
  %v386 = vsub.s32 %v383, %v385
  %v387 = vrot.slane %v373, %v386
  %v388 = vcombine.high %v380, %v380
  %v389 = vcombine.low %v72, %v86
  %v390 = vcombine.low %v94, %v96
  %v391 = vcombine.low %v79, %v93
  %v392 = vcombine.low %v95, %v97
  %v394 = vunpack.c.l.s4 1966171168
  %v395 = vunpack.c.0.s8 %v394
  %v396 = vlaneseq
  %v397 = vshrl.u32 %v396, 7
  %v398 = vsub.s32 %v395, %v397
  %v399 = vrot.slane %v389, %v398
  %v401 = vunpack.c.l.s4 1966171168
  %v402 = vunpack.c.0.s8 %v401
  %v403 = vlaneseq
  %v404 = vshrl.u32 %v403, 7
  %v405 = vsub.s32 %v402, %v404
  %v406 = vrot.slane %v390, %v405
  %v408 = vunpack.c.l.s4 1966171168
  %v409 = vunpack.c.0.s8 %v408
  %v410 = vlaneseq
  %v411 = vshrl.u32 %v410, 7
  %v412 = vsub.s32 %v409, %v411
  %v413 = vrot.slane %v391, %v412
  %v415 = vunpack.c.l.s4 1966171168
  %v416 = vunpack.c.0.s8 %v415
  %v417 = vlaneseq
  %v418 = vshrl.u32 %v417, 7
  %v419 = vsub.s32 %v416, %v418
  %v420 = vrot.slane %v392, %v419
  %v421 = vcombine.low %v399, %v406
  %v422 = vcombine.low %v413, %v420
  %v424 = vunpack.c.l.s4 1966171168
  %v425 = vunpack.c.0.s8 %v424
  %v426 = vlaneseq
  %v427 = vshrl.u32 %v426, 7
  %v428 = vsub.s32 %v425, %v427
  %v429 = vrot.slane %v421, %v428
  %v431 = vunpack.c.l.s4 1966171168
  %v432 = vunpack.c.0.s8 %v431
  %v433 = vlaneseq
  %v434 = vshrl.u32 %v433, 7
  %v435 = vsub.s32 %v432, %v434
  %v436 = vrot.slane %v422, %v435
  %v437 = vcombine.low %v429, %v436
  %v438 = vcombine.low %v121, %v135
  %v439 = vcombine.low %v143, %v145
  %v440 = vcombine.low %v128, %v142
  %v441 = vcombine.low %v144, %v146
  %v443 = vunpack.c.l.s4 1966171168
  %v444 = vunpack.c.0.s8 %v443
  %v445 = vlaneseq
  %v446 = vshrl.u32 %v445, 7
  %v447 = vsub.s32 %v444, %v446
  %v448 = vrot.slane %v438, %v447
  %v450 = vunpack.c.l.s4 1966171168
  %v451 = vunpack.c.0.s8 %v450
  %v452 = vlaneseq
  %v453 = vshrl.u32 %v452, 7
  %v454 = vsub.s32 %v451, %v453
  %v455 = vrot.slane %v439, %v454
  %v457 = vunpack.c.l.s4 1966171168
  %v458 = vunpack.c.0.s8 %v457
  %v459 = vlaneseq
  %v460 = vshrl.u32 %v459, 7
  %v461 = vsub.s32 %v458, %v460
  %v462 = vrot.slane %v440, %v461
  %v464 = vunpack.c.l.s4 1966171168
  %v465 = vunpack.c.0.s8 %v464
  %v466 = vlaneseq
  %v467 = vshrl.u32 %v466, 7
  %v468 = vsub.s32 %v465, %v467
  %v469 = vrot.slane %v441, %v468
  %v470 = vcombine.low %v448, %v455
  %v471 = vcombine.low %v462, %v469
  %v473 = vunpack.c.l.s4 1966171168
  %v474 = vunpack.c.0.s8 %v473
  %v475 = vlaneseq
  %v476 = vshrl.u32 %v475, 7
  %v477 = vsub.s32 %v474, %v476
  %v478 = vrot.slane %v470, %v477
  %v480 = vunpack.c.l.s4 1966171168
  %v481 = vunpack.c.0.s8 %v480
  %v482 = vlaneseq
  %v483 = vshrl.u32 %v482, 7
  %v484 = vsub.s32 %v481, %v483
  %v485 = vrot.slane %v471, %v484
  %v486 = vcombine.low %v478, %v485
  %v487 = vcombine.low %v170, %v184
  %v488 = vcombine.low %v192, %v194
  %v489 = vcombine.low %v177, %v191
  %v490 = vcombine.low %v193, %v195
  %v492 = vunpack.c.l.s4 1966171168
  %v493 = vunpack.c.0.s8 %v492
  %v494 = vlaneseq
  %v495 = vshrl.u32 %v494, 7
  %v496 = vsub.s32 %v493, %v495
  %v497 = vrot.slane %v487, %v496
  %v499 = vunpack.c.l.s4 1966171168
  %v500 = vunpack.c.0.s8 %v499
  %v501 = vlaneseq
  %v502 = vshrl.u32 %v501, 7
  %v503 = vsub.s32 %v500, %v502
  %v504 = vrot.slane %v488, %v503
  %v506 = vunpack.c.l.s4 1966171168
  %v507 = vunpack.c.0.s8 %v506
  %v508 = vlaneseq
  %v509 = vshrl.u32 %v508, 7
  %v510 = vsub.s32 %v507, %v509
  %v511 = vrot.slane %v489, %v510
  %v513 = vunpack.c.l.s4 1966171168
  %v514 = vunpack.c.0.s8 %v513
  %v515 = vlaneseq
  %v516 = vshrl.u32 %v515, 7
  %v517 = vsub.s32 %v514, %v516
  %v518 = vrot.slane %v490, %v517
  %v519 = vcombine.low %v497, %v504
  %v520 = vcombine.low %v511, %v518
  %v522 = vunpack.c.l.s4 1966171168
  %v523 = vunpack.c.0.s8 %v522
  %v524 = vlaneseq
  %v525 = vshrl.u32 %v524, 7
  %v526 = vsub.s32 %v523, %v525
  %v527 = vrot.slane %v519, %v526
  %v529 = vunpack.c.l.s4 1966171168
  %v530 = vunpack.c.0.s8 %v529
  %v531 = vlaneseq
  %v532 = vshrl.u32 %v531, 7
  %v533 = vsub.s32 %v530, %v532
  %v534 = vrot.slane %v520, %v533
  %v535 = vcombine.low %v527, %v534
  %v536 = vcombine.low %v210, %v217
  %v537 = vcombine.low %v218, %v242
  %v538 = vcombine.low %v256, %v264
  %v539 = vcombine.low %v266, %v249
  %v541 = vunpack.c.l.s4 1966171168
  %v542 = vunpack.c.0.s8 %v541
  %v543 = vlaneseq
  %v544 = vshrl.u32 %v543, 7
  %v545 = vsub.s32 %v542, %v544
  %v546 = vrot.slane %v536, %v545
  %v548 = vunpack.c.l.s4 1966171168
  %v549 = vunpack.c.0.s8 %v548
  %v550 = vlaneseq
  %v551 = vshrl.u32 %v550, 7
  %v552 = vsub.s32 %v549, %v551
  %v553 = vrot.slane %v537, %v552
  %v555 = vunpack.c.l.s4 1966171168
  %v556 = vunpack.c.0.s8 %v555
  %v557 = vlaneseq
  %v558 = vshrl.u32 %v557, 7
  %v559 = vsub.s32 %v556, %v558
  %v560 = vrot.slane %v538, %v559
  %v562 = vunpack.c.l.s4 1966171168
  %v563 = vunpack.c.0.s8 %v562
  %v564 = vlaneseq
  %v565 = vshrl.u32 %v564, 7
  %v566 = vsub.s32 %v563, %v565
  %v567 = vrot.slane %v539, %v566
  %v568 = vcombine.low %v546, %v553
  %v569 = vcombine.low %v560, %v567
  %v571 = vunpack.c.l.s4 1966171168
  %v572 = vunpack.c.0.s8 %v571
  %v573 = vlaneseq
  %v574 = vshrl.u32 %v573, 7
  %v575 = vsub.s32 %v572, %v574
  %v576 = vrot.slane %v568, %v575
  %v578 = vunpack.c.l.s4 1966171168
  %v579 = vunpack.c.0.s8 %v578
  %v580 = vlaneseq
  %v581 = vshrl.u32 %v580, 7
  %v582 = vsub.s32 %v579, %v581
  %v583 = vrot.slane %v569, %v582
  %v584 = vcombine.low %v576, %v583
  %v585 = vcombine.low %v263, %v265
  %v586 = vcombine.low %v267, %v291
  %v587 = vcombine.low %v305, %v313
  %v588 = vcombine.low %v315, %v298
  %v590 = vunpack.c.l.s4 1966171168
  %v591 = vunpack.c.0.s8 %v590
  %v592 = vlaneseq
  %v593 = vshrl.u32 %v592, 7
  %v594 = vsub.s32 %v591, %v593
  %v595 = vrot.slane %v585, %v594
  %v597 = vunpack.c.l.s4 1966171168
  %v598 = vunpack.c.0.s8 %v597
  %v599 = vlaneseq
  %v600 = vshrl.u32 %v599, 7
  %v601 = vsub.s32 %v598, %v600
  %v602 = vrot.slane %v586, %v601
  %v604 = vunpack.c.l.s4 1966171168
  %v605 = vunpack.c.0.s8 %v604
  %v606 = vlaneseq
  %v607 = vshrl.u32 %v606, 7
  %v608 = vsub.s32 %v605, %v607
  %v609 = vrot.slane %v587, %v608
  %v611 = vunpack.c.l.s4 1966171168
  %v612 = vunpack.c.0.s8 %v611
  %v613 = vlaneseq
  %v614 = vshrl.u32 %v613, 7
  %v615 = vsub.s32 %v612, %v614
  %v616 = vrot.slane %v588, %v615
  %v617 = vcombine.low %v595, %v602
  %v618 = vcombine.low %v609, %v616
  %v620 = vunpack.c.l.s4 1966171168
  %v621 = vunpack.c.0.s8 %v620
  %v622 = vlaneseq
  %v623 = vshrl.u32 %v622, 7
  %v624 = vsub.s32 %v621, %v623
  %v625 = vrot.slane %v617, %v624
  %v627 = vunpack.c.l.s4 1966171168
  %v628 = vunpack.c.0.s8 %v627
  %v629 = vlaneseq
  %v630 = vshrl.u32 %v629, 7
  %v631 = vsub.s32 %v628, %v630
  %v632 = vrot.slane %v618, %v631
  %v633 = vcombine.low %v625, %v632
  %v634 = vcombine.low %v312, %v314
  %v635 = vcombine.low %v316, %v340
  %v636 = vcombine.low %v354, %v362
  %v637 = vcombine.low %v364, %v347
  %v639 = vunpack.c.l.s4 1966171168
  %v640 = vunpack.c.0.s8 %v639
  %v641 = vlaneseq
  %v642 = vshrl.u32 %v641, 7
  %v643 = vsub.s32 %v640, %v642
  %v644 = vrot.slane %v634, %v643
  %v646 = vunpack.c.l.s4 1966171168
  %v647 = vunpack.c.0.s8 %v646
  %v648 = vlaneseq
  %v649 = vshrl.u32 %v648, 7
  %v650 = vsub.s32 %v647, %v649
  %v651 = vrot.slane %v635, %v650
  %v653 = vunpack.c.l.s4 1966171168
  %v654 = vunpack.c.0.s8 %v653
  %v655 = vlaneseq
  %v656 = vshrl.u32 %v655, 7
  %v657 = vsub.s32 %v654, %v656
  %v658 = vrot.slane %v636, %v657
  %v660 = vunpack.c.l.s4 1966171168
  %v661 = vunpack.c.0.s8 %v660
  %v662 = vlaneseq
  %v663 = vshrl.u32 %v662, 7
  %v664 = vsub.s32 %v661, %v663
  %v665 = vrot.slane %v637, %v664
  %v666 = vcombine.low %v644, %v651
  %v667 = vcombine.low %v658, %v665
  %v669 = vunpack.c.l.s4 1966171168
  %v670 = vunpack.c.0.s8 %v669
  %v671 = vlaneseq
  %v672 = vshrl.u32 %v671, 7
  %v673 = vsub.s32 %v670, %v672
  %v674 = vrot.slane %v666, %v673
  %v676 = vunpack.c.l.s4 1966171168
  %v677 = vunpack.c.0.s8 %v676
  %v678 = vlaneseq
  %v679 = vshrl.u32 %v678, 7
  %v680 = vsub.s32 %v677, %v679
  %v681 = vrot.slane %v667, %v680
  %v682 = vcombine.low %v674, %v681
  %v683 = vcombine.low %v361, %v363
  %v684 = vcombine.low %v365, %v380
  %v685 = vcombine.low %v387, %v388
  %v687 = vunpack.c.l.s4 1966171168
  %v688 = vunpack.c.0.s8 %v687
  %v689 = vlaneseq
  %v690 = vshrl.u32 %v689, 7
  %v691 = vsub.s32 %v688, %v690
  %v692 = vrot.slane %v683, %v691
  %v694 = vunpack.c.l.s4 1966171168
  %v695 = vunpack.c.0.s8 %v694
  %v696 = vlaneseq
  %v697 = vshrl.u32 %v696, 7
  %v698 = vsub.s32 %v695, %v697
  %v699 = vrot.slane %v684, %v698
  %v701 = vunpack.c.l.s4 1966171168
  %v702 = vunpack.c.0.s8 %v701
  %v703 = vlaneseq
  %v704 = vshrl.u32 %v703, 7
  %v705 = vsub.s32 %v702, %v704
  %v706 = vrot.slane %v685, %v705
  %v707 = vcombine.low %v692, %v699
  %v709 = vunpack.c.l.s4 1966171168
  %v710 = vunpack.c.0.s8 %v709
  %v711 = vlaneseq
  %v712 = vshrl.u32 %v711, 7
  %v713 = vsub.s32 %v710, %v712
  %v714 = vrot.slane %v707, %v713
  %v716 = vunpack.c.l.s4 1966171168
  %v717 = vunpack.c.0.s8 %v716
  %v718 = vlaneseq
  %v719 = vshrl.u32 %v718, 7
  %v720 = vsub.s32 %v717, %v719
  %v721 = vrot.slane %v706, %v720
  %v722 = vcombine.low %v714, %v721
  %v730 = vpack.c.bf16 %v486, %v437
  %v731 = vpack.c.bf16 %v584, %v535
  %v732 = vpack.c.bf16 %v682, %v633
  %v733 = vpack.c.bf16 %v722, %v722
  %v734 = vld [vmem:[%s1] sm:$0xf]
  %v735 = vld [vmem:[%s1 + $0x4] sm:$0xf]
  %v736 = vld [vmem:[%s1 + $0x8] sm:$0xf]
  %v737 = vld [vmem:[%s1 + $0xc] sm:$0xf]
  %v738 = vld [vmem:[%s2] sm:$0x1]
  %v740 = vlaneseq
  %v741 = vshrl.u32 %v740, 7
  %v742 = vsub.s32 0, %v741
  %v743 = vrot.slane %v738, %v742
  %v749 = vunpack.c.l.b16 %v734
  %v750 = vunpack.c.l.b16 %v735
  %v751 = vunpack.c.l.b16 %v736
  %v752 = vunpack.c.l.b16 %v737
  %v753 = vpack.c.b16 %v750, %v749
  %v754 = vpack.c.b16 %v752, %v751
  %vm757 = vcmask 261120
  %v759 = vsel %vm757, %v730, 0
  %v762 = vsel %vm757, %v731, 0
  %v765 = vsel %vm757, %v732, 0
  %v768 = vsel %vm757, %v733, 0
  %770 = vmatprep.subr.bf16.mxu0 0
  %771 = vmatpush1.bf16.msra.mxu0 %v753
  %772 = vmatprep.subr.bf16.mxu0 0
  %773 = vmatpush1.bf16.msra.mxu0 %v754
  %774 = vmatprep.subr.bf16.mxu0 0
  %775 = vmatpush1.bf16.msra.mxu0 0
  %776 = vmatprep.subr.bf16.mxu0 0
  %777 = vmatpush1.bf16.msra.mxu0 0
  %778 = vmatprep.subr.bf16.mxu0 0
  %779 = vmatpush1.bf16.msra.mxu0 0
  %780 = vmatprep.subr.bf16.mxu0 0
  %781 = vmatpush1.bf16.msra.mxu0 0
  %782 = vmatprep.subr.bf16.mxu0 0
  %783 = vmatpush1.bf16.msra.mxu0 0
  %784 = vmatprep.subr.bf16.mxu0 0
  %785 = vmatpush1.bf16.msra.mxu0 0
  %786 = vmatprep.subr.bf16.mxu0 0
  %787 = vmatpush1.bf16.msra.mxu0 0
  %788 = vmatprep.subr.bf16.mxu0 0
  %789 = vmatpush1.bf16.msra.mxu0 0
  %790 = vmatprep.subr.bf16.mxu0 0
  %791 = vmatpush1.bf16.msra.mxu0 0
  %792 = vmatprep.subr.bf16.mxu0 0
  %793 = vmatpush1.bf16.msra.mxu0 0
  %794 = vmatprep.subr.bf16.mxu0 0
  %795 = vmatpush1.bf16.msra.mxu0 0
  %796 = vmatprep.subr.bf16.mxu0 0
  %797 = vmatpush1.bf16.msra.mxu0 0
  %798 = vmatprep.subr.bf16.mxu0 0
  %799 = vmatpush1.bf16.msra.mxu0 0
  %800 = vmatprep.subr.bf16.mxu0 0
  %801 = vmatpush1.bf16.msra.mxu0 0
  %802 = vmatprep.mubr.bf16.mxu0 0
  %803 = vmatmul.mubr.bf16.gmra.mrb[0].mxu0 %v759
  %v804 = vpop.f32.mrb[0].mxu0
  %v805 = vadd.f32 %v743, %v804
  %v806 = vpop.f32.mrb[0].mxu0
  %v807 = vpop.f32.mrb[0].mxu0
  %v808 = vadd.f32 %v743, %v807
  %v809 = vpop.f32.mrb[0].mxu0
  %810 = vmatprep.mubr.bf16.mxu0 0
  %811 = vmatmul.mubr.bf16.gmra.mrb[0].mxu0 %v762
  %v812 = vpop.f32.mrb[0].mxu0
  %v813 = vadd.f32 %v743, %v812
  %v814 = vpop.f32.mrb[0].mxu0
  %v815 = vpop.f32.mrb[0].mxu0
  %v816 = vadd.f32 %v743, %v815
  %v817 = vpop.f32.mrb[0].mxu0
  %818 = vmatprep.mubr.bf16.mxu0 0
  %819 = vmatmul.mubr.bf16.gmra.mrb[0].mxu0 %v765
  %v820 = vpop.f32.mrb[0].mxu0
  %v821 = vadd.f32 %v743, %v820
  %v822 = vpop.f32.mrb[0].mxu0
  %v823 = vpop.f32.mrb[0].mxu0
  %v824 = vadd.f32 %v743, %v823
  %v825 = vpop.f32.mrb[0].mxu0
  %826 = vmatprep.mubr.bf16.mxu0 0
  %827 = vmatmul.mubr.bf16.gmra.mrb[0].mxu0 %v768
  %v828 = vpop.f32.mrb[0].mxu0
  %v829 = vadd.f32 %v743, %v828
  %v830 = vpop.f32.mrb[0].mxu0
  %v831 = vpop.f32.mrb[0].mxu0
  %v832 = vpop.f32.mrb[0].mxu0
  %833 = vdwg.mxu0
  %v841 = vcombine.high %v805, %v805
  %v843 = vunpack.c.l.s4 1966171168
  %v844 = vunpack.c.0.s8 %v843
  %v845 = vlaneseq
  %v846 = vshrl.u32 %v845, 7
  %v847 = vsub.s32 %v844, %v846
  %v848 = vrot.slane %v805, %v847
  %v850 = vunpack.c.l.s4 1966171168
  %v851 = vunpack.c.0.s8 %v850
  %v852 = vlaneseq
  %v853 = vshrl.u32 %v852, 7
  %v854 = vsub.s32 %v851, %v853
  %v855 = vrot.slane %v841, %v854
  %v856 = vcombine.high %v848, %v848
  %v857 = vcombine.high %v855, %v855
  %v859 = vunpack.c.l.s4 1966171168
  %v860 = vunpack.c.0.s8 %v859
  %v861 = vlaneseq
  %v862 = vshrl.u32 %v861, 7
  %v863 = vsub.s32 %v860, %v862
  %v864 = vrot.slane %v848, %v863
  %v866 = vunpack.c.l.s4 1966171168
  %v867 = vunpack.c.0.s8 %v866
  %v868 = vlaneseq
  %v869 = vshrl.u32 %v868, 7
  %v870 = vsub.s32 %v867, %v869
  %v871 = vrot.slane %v855, %v870
  %v873 = vunpack.c.l.s4 1966171168
  %v874 = vunpack.c.0.s8 %v873
  %v875 = vlaneseq
  %v876 = vshrl.u32 %v875, 7
  %v877 = vsub.s32 %v874, %v876
  %v878 = vrot.slane %v856, %v877
  %v880 = vunpack.c.l.s4 1966171168
  %v881 = vunpack.c.0.s8 %v880
  %v882 = vlaneseq
  %v883 = vshrl.u32 %v882, 7
  %v884 = vsub.s32 %v881, %v883
  %v885 = vrot.slane %v857, %v884
  %v886 = vcombine.high %v864, %v864
  %v887 = vcombine.high %v871, %v871
  %v888 = vcombine.high %v878, %v878
  %v889 = vcombine.high %v885, %v885
  %v890 = vcombine.high %v808, %v808
  %v892 = vunpack.c.l.s4 1966171168
  %v893 = vunpack.c.0.s8 %v892
  %v894 = vlaneseq
  %v895 = vshrl.u32 %v894, 7
  %v896 = vsub.s32 %v893, %v895
  %v897 = vrot.slane %v808, %v896
  %v899 = vunpack.c.l.s4 1966171168
  %v900 = vunpack.c.0.s8 %v899
  %v901 = vlaneseq
  %v902 = vshrl.u32 %v901, 7
  %v903 = vsub.s32 %v900, %v902
  %v904 = vrot.slane %v890, %v903
  %v905 = vcombine.high %v897, %v897
  %v906 = vcombine.high %v904, %v904
  %v908 = vunpack.c.l.s4 1966171168
  %v909 = vunpack.c.0.s8 %v908
  %v910 = vlaneseq
  %v911 = vshrl.u32 %v910, 7
  %v912 = vsub.s32 %v909, %v911
  %v913 = vrot.slane %v897, %v912
  %v915 = vunpack.c.l.s4 1966171168
  %v916 = vunpack.c.0.s8 %v915
  %v917 = vlaneseq
  %v918 = vshrl.u32 %v917, 7
  %v919 = vsub.s32 %v916, %v918
  %v920 = vrot.slane %v904, %v919
  %v922 = vunpack.c.l.s4 1966171168
  %v923 = vunpack.c.0.s8 %v922
  %v924 = vlaneseq
  %v925 = vshrl.u32 %v924, 7
  %v926 = vsub.s32 %v923, %v925
  %v927 = vrot.slane %v905, %v926
  %v929 = vunpack.c.l.s4 1966171168
  %v930 = vunpack.c.0.s8 %v929
  %v931 = vlaneseq
  %v932 = vshrl.u32 %v931, 7
  %v933 = vsub.s32 %v930, %v932
  %v934 = vrot.slane %v906, %v933
  %v935 = vcombine.high %v913, %v913
  %v936 = vcombine.high %v920, %v920
  %v937 = vcombine.high %v927, %v927
  %v938 = vcombine.high %v934, %v934
  %v939 = vcombine.high %v813, %v813
  %v941 = vunpack.c.l.s4 1966171168
  %v942 = vunpack.c.0.s8 %v941
  %v943 = vlaneseq
  %v944 = vshrl.u32 %v943, 7
  %v945 = vsub.s32 %v942, %v944
  %v946 = vrot.slane %v813, %v945
  %v948 = vunpack.c.l.s4 1966171168
  %v949 = vunpack.c.0.s8 %v948
  %v950 = vlaneseq
  %v951 = vshrl.u32 %v950, 7
  %v952 = vsub.s32 %v949, %v951
  %v953 = vrot.slane %v939, %v952
  %v954 = vcombine.high %v946, %v946
  %v955 = vcombine.high %v953, %v953
  %v957 = vunpack.c.l.s4 1966171168
  %v958 = vunpack.c.0.s8 %v957
  %v959 = vlaneseq
  %v960 = vshrl.u32 %v959, 7
  %v961 = vsub.s32 %v958, %v960
  %v962 = vrot.slane %v946, %v961
  %v964 = vunpack.c.l.s4 1966171168
  %v965 = vunpack.c.0.s8 %v964
  %v966 = vlaneseq
  %v967 = vshrl.u32 %v966, 7
  %v968 = vsub.s32 %v965, %v967
  %v969 = vrot.slane %v953, %v968
  %v971 = vunpack.c.l.s4 1966171168
  %v972 = vunpack.c.0.s8 %v971
  %v973 = vlaneseq
  %v974 = vshrl.u32 %v973, 7
  %v975 = vsub.s32 %v972, %v974
  %v976 = vrot.slane %v954, %v975
  %v978 = vunpack.c.l.s4 1966171168
  %v979 = vunpack.c.0.s8 %v978
  %v980 = vlaneseq
  %v981 = vshrl.u32 %v980, 7
  %v982 = vsub.s32 %v979, %v981
  %v983 = vrot.slane %v955, %v982
  %v984 = vcombine.high %v962, %v962
  %v985 = vcombine.high %v969, %v969
  %v986 = vcombine.high %v976, %v976
  %v987 = vcombine.high %v983, %v983
  %v988 = vcombine.high %v816, %v816
  %v990 = vunpack.c.l.s4 1966171168
  %v991 = vunpack.c.0.s8 %v990
  %v992 = vlaneseq
  %v993 = vshrl.u32 %v992, 7
  %v994 = vsub.s32 %v991, %v993
  %v995 = vrot.slane %v816, %v994
  %v997 = vunpack.c.l.s4 1966171168
  %v998 = vunpack.c.0.s8 %v997
  %v999 = vlaneseq
  %v1000 = vshrl.u32 %v999, 7
  %v1001 = vsub.s32 %v998, %v1000
  %v1002 = vrot.slane %v988, %v1001
  %v1003 = vcombine.high %v995, %v995
  %v1004 = vcombine.high %v1002, %v1002
  %v1006 = vunpack.c.l.s4 1966171168
  %v1007 = vunpack.c.0.s8 %v1006
  %v1008 = vlaneseq
  %v1009 = vshrl.u32 %v1008, 7
  %v1010 = vsub.s32 %v1007, %v1009
  %v1011 = vrot.slane %v995, %v1010
  %v1013 = vunpack.c.l.s4 1966171168
  %v1014 = vunpack.c.0.s8 %v1013
  %v1015 = vlaneseq
  %v1016 = vshrl.u32 %v1015, 7
  %v1017 = vsub.s32 %v1014, %v1016
  %v1018 = vrot.slane %v1002, %v1017
  %v1020 = vunpack.c.l.s4 1966171168
  %v1021 = vunpack.c.0.s8 %v1020
  %v1022 = vlaneseq
  %v1023 = vshrl.u32 %v1022, 7
  %v1024 = vsub.s32 %v1021, %v1023
  %v1025 = vrot.slane %v1003, %v1024
  %v1027 = vunpack.c.l.s4 1966171168
  %v1028 = vunpack.c.0.s8 %v1027
  %v1029 = vlaneseq
  %v1030 = vshrl.u32 %v1029, 7
  %v1031 = vsub.s32 %v1028, %v1030
  %v1032 = vrot.slane %v1004, %v1031
  %v1033 = vcombine.high %v1011, %v1011
  %v1034 = vcombine.high %v1018, %v1018
  %v1035 = vcombine.high %v1025, %v1025
  %v1036 = vcombine.high %v1032, %v1032
  %v1037 = vcombine.high %v821, %v821
  %v1039 = vunpack.c.l.s4 1966171168
  %v1040 = vunpack.c.0.s8 %v1039
  %v1041 = vlaneseq
  %v1042 = vshrl.u32 %v1041, 7
  %v1043 = vsub.s32 %v1040, %v1042
  %v1044 = vrot.slane %v821, %v1043
  %v1046 = vunpack.c.l.s4 1966171168
  %v1047 = vunpack.c.0.s8 %v1046
  %v1048 = vlaneseq
  %v1049 = vshrl.u32 %v1048, 7
  %v1050 = vsub.s32 %v1047, %v1049
  %v1051 = vrot.slane %v1037, %v1050
  %v1052 = vcombine.high %v1044, %v1044
  %v1053 = vcombine.high %v1051, %v1051
  %v1055 = vunpack.c.l.s4 1966171168
  %v1056 = vunpack.c.0.s8 %v1055
  %v1057 = vlaneseq
  %v1058 = vshrl.u32 %v1057, 7
  %v1059 = vsub.s32 %v1056, %v1058
  %v1060 = vrot.slane %v1044, %v1059
  %v1062 = vunpack.c.l.s4 1966171168
  %v1063 = vunpack.c.0.s8 %v1062
  %v1064 = vlaneseq
  %v1065 = vshrl.u32 %v1064, 7
  %v1066 = vsub.s32 %v1063, %v1065
  %v1067 = vrot.slane %v1051, %v1066
  %v1069 = vunpack.c.l.s4 1966171168
  %v1070 = vunpack.c.0.s8 %v1069
  %v1071 = vlaneseq
  %v1072 = vshrl.u32 %v1071, 7
  %v1073 = vsub.s32 %v1070, %v1072
  %v1074 = vrot.slane %v1052, %v1073
  %v1076 = vunpack.c.l.s4 1966171168
  %v1077 = vunpack.c.0.s8 %v1076
  %v1078 = vlaneseq
  %v1079 = vshrl.u32 %v1078, 7
  %v1080 = vsub.s32 %v1077, %v1079
  %v1081 = vrot.slane %v1053, %v1080
  %v1082 = vcombine.high %v1060, %v1060
  %v1083 = vcombine.high %v1067, %v1067
  %v1084 = vcombine.high %v1074, %v1074
  %v1085 = vcombine.high %v1081, %v1081
  %v1086 = vcombine.high %v824, %v824
  %v1088 = vunpack.c.l.s4 1966171168
  %v1089 = vunpack.c.0.s8 %v1088
  %v1090 = vlaneseq
  %v1091 = vshrl.u32 %v1090, 7
  %v1092 = vsub.s32 %v1089, %v1091
  %v1093 = vrot.slane %v824, %v1092
  %v1095 = vunpack.c.l.s4 1966171168
  %v1096 = vunpack.c.0.s8 %v1095
  %v1097 = vlaneseq
  %v1098 = vshrl.u32 %v1097, 7
  %v1099 = vsub.s32 %v1096, %v1098
  %v1100 = vrot.slane %v1086, %v1099
  %v1101 = vcombine.high %v1093, %v1093
  %v1102 = vcombine.high %v1100, %v1100
  %v1104 = vunpack.c.l.s4 1966171168
  %v1105 = vunpack.c.0.s8 %v1104
  %v1106 = vlaneseq
  %v1107 = vshrl.u32 %v1106, 7
  %v1108 = vsub.s32 %v1105, %v1107
  %v1109 = vrot.slane %v1093, %v1108
  %v1111 = vunpack.c.l.s4 1966171168
  %v1112 = vunpack.c.0.s8 %v1111
  %v1113 = vlaneseq
  %v1114 = vshrl.u32 %v1113, 7
  %v1115 = vsub.s32 %v1112, %v1114
  %v1116 = vrot.slane %v1100, %v1115
  %v1118 = vunpack.c.l.s4 1966171168
  %v1119 = vunpack.c.0.s8 %v1118
  %v1120 = vlaneseq
  %v1121 = vshrl.u32 %v1120, 7
  %v1122 = vsub.s32 %v1119, %v1121
  %v1123 = vrot.slane %v1101, %v1122
  %v1125 = vunpack.c.l.s4 1966171168
  %v1126 = vunpack.c.0.s8 %v1125
  %v1127 = vlaneseq
  %v1128 = vshrl.u32 %v1127, 7
  %v1129 = vsub.s32 %v1126, %v1128
  %v1130 = vrot.slane %v1102, %v1129
  %v1131 = vcombine.high %v1109, %v1109
  %v1132 = vcombine.high %v1116, %v1116
  %v1133 = vcombine.high %v1123, %v1123
  %v1134 = vcombine.high %v1130, %v1130
  %v1135 = vcombine.high %v829, %v829
  %v1137 = vunpack.c.l.s4 1966171168
  %v1138 = vunpack.c.0.s8 %v1137
  %v1139 = vlaneseq
  %v1140 = vshrl.u32 %v1139, 7
  %v1141 = vsub.s32 %v1138, %v1140
  %v1142 = vrot.slane %v829, %v1141
  %v1144 = vunpack.c.l.s4 1966171168
  %v1145 = vunpack.c.0.s8 %v1144
  %v1146 = vlaneseq
  %v1147 = vshrl.u32 %v1146, 7
  %v1148 = vsub.s32 %v1145, %v1147
  %v1149 = vrot.slane %v1135, %v1148
  %v1150 = vcombine.high %v1142, %v1142
  %v1151 = vcombine.high %v1149, %v1149
  %v1153 = vunpack.c.l.s4 1966171168
  %v1154 = vunpack.c.0.s8 %v1153
  %v1155 = vlaneseq
  %v1156 = vshrl.u32 %v1155, 7
  %v1157 = vsub.s32 %v1154, %v1156
  %v1158 = vrot.slane %v1142, %v1157
  %v1160 = vunpack.c.l.s4 1966171168
  %v1161 = vunpack.c.0.s8 %v1160
  %v1162 = vlaneseq
  %v1163 = vshrl.u32 %v1162, 7
  %v1164 = vsub.s32 %v1161, %v1163
  %v1165 = vrot.slane %v1149, %v1164
  %v1167 = vunpack.c.l.s4 1966171168
  %v1168 = vunpack.c.0.s8 %v1167
  %v1169 = vlaneseq
  %v1170 = vshrl.u32 %v1169, 7
  %v1171 = vsub.s32 %v1168, %v1170
  %v1172 = vrot.slane %v1150, %v1171
  %v1174 = vunpack.c.l.s4 1966171168
  %v1175 = vunpack.c.0.s8 %v1174
  %v1176 = vlaneseq
  %v1177 = vshrl.u32 %v1176, 7
  %v1178 = vsub.s32 %v1175, %v1177
  %v1179 = vrot.slane %v1151, %v1178
  %v1180 = vcombine.high %v1158, %v1158
  %v1181 = vcombine.high %v1172, %v1172
  %v1236 = vsel %vm757, %v33, 0
  %v1238 = vsel %vm757, %v34, 0
  %v1240 = vsel %vm757, %v35, 0
  %v1242 = vsel %vm757, %v36, 0
  %1244 = vmatprep.subr.mxu0 0.0
  %1245 = vmatpush1.xpose.msra.mxu0 %v1236
  %1246 = vmatprep.subr.mxu0 0.0
  %1247 = vmatpush1.xpose.msra.mxu0 %v1238
  %1248 = vmatprep.subr.mxu0 0.0
  %1249 = vmatpush1.xpose.msra.mxu0 %v1240
  %1250 = vmatprep.subr.mxu0 0.0
  %1251 = vmatpush1.xpose.msra.mxu0 %v1242
  %1252 = vmatprep.subr.mxu0 0.0
  %1253 = vmatpush1.xpose.msra.mxu0 0.0
  %1254 = vmatprep.subr.mxu0 0.0
  %1255 = vmatpush1.xpose.msra.mxu0 0.0
  %1256 = vmatprep.subr.mxu0 0.0
  %1257 = vmatpush1.xpose.msra.mxu0 0.0
  %1258 = vmatprep.subr.mxu0 0.0
  %1259 = vmatpush1.xpose.msra.mxu0 0.0
  %1260 = vmatprep.subr.mxu0 0.0
  %1261 = vmatpush1.xpose.msra.mxu0 0.0
  %1262 = vmatprep.subr.mxu0 0.0
  %1263 = vmatpush1.xpose.msra.mxu0 0.0
  %1264 = vmatprep.subr.mxu0 0.0
  %1265 = vmatpush1.xpose.msra.mxu0 0.0
  %1266 = vmatprep.subr.mxu0 0.0
  %1267 = vmatpush1.xpose.msra.mxu0 0.0
  %1268 = vmatprep.subr.mxu0 0.0
  %1269 = vmatpush1.xpose.msra.mxu0 0.0
  %1270 = vmatprep.subr.mxu0 0.0
  %1271 = vmatpush1.xpose.msra.mxu0 0.0
  %1272 = vmatprep.subr.mxu0 0.0
  %1273 = vmatpush1.xpose.msra.mxu0 0.0
  %1274 = vmatprep.subr.mxu0 0.0
  %1275 = vmatpush1.xpose.msra.mxu0 0.0
  %1276 = vmatprep.subr.mxu0 0.0
  %1277 = vmatpush1.xpose.msra.mxu0 0.0
  %1278 = vmatprep.subr.mxu0 0.0
  %1279 = vmatpush1.xpose.msra.mxu0 0.0
  %1280 = vmatprep.subr.mxu0 0.0
  %1281 = vmatpush1.xpose.msra.mxu0 0.0
  %1282 = vmatprep.subr.mxu0 0.0
  %1283 = vmatpush1.xpose.msra.mxu0 0.0
  %1284 = vmatprep.subr.mxu0 0.0
  %1285 = vmatpush1.xpose.msra.mxu0 0.0
  %1286 = vmatprep.subr.mxu0 0.0
  %1287 = vmatpush1.xpose.msra.mxu0 0.0
  %1288 = vmatprep.subr.mxu0 0.0
  %1289 = vmatpush1.xpose.msra.mxu0 0.0
  %1290 = vmatprep.subr.mxu0 0.0
  %1291 = vmatpush1.xpose.msra.mxu0 0.0
  %1292 = vmatprep.subr.mxu0 0.0
  %1293 = vmatpush1.xpose.msra.mxu0 0.0
  %1294 = vmatprep.subr.mxu0 0.0
  %1295 = vmatpush1.xpose.msra.mxu0 0.0
  %1296 = vmatprep.subr.mxu0 0.0
  %1297 = vmatpush1.xpose.msra.mxu0 0.0
  %1298 = vmatprep.subr.mxu0 0.0
  %1299 = vmatpush1.xpose.msra.mxu0 0.0
  %1300 = vmatprep.subr.mxu0 0.0
  %1301 = vmatpush1.xpose.msra.mxu0 0.0
  %1302 = vmatprep.subr.mxu0 0.0
  %1303 = vmatpush1.xpose.msra.mxu0 0.0
  %1304 = vmatprep.subr.mxu0 0.0
  %1305 = vmatpush1.xpose.msra.mxu0 0.0
  %1306 = vmatprep.subr.mxu0 0.0
  %1307 = vmatpush1.xpose.msra.mxu0 0.0
  %1308 = vmatprep.mubr.f32.mxu0 0.0
  %1309 = vmatmul.mubr.f32.gmra.mrb[0].mxu0 %v1236
  %v1310 = vpop.f32.mrb[0].mxu0
  %v1311 = vadd.f32 0.0, %v1310
  %v1312 = vpop.f32.mrb[0].mxu0
  %1313 = vmatprep.mubr.f32.mxu0 0.0
  %1314 = vmatmul.mubr.f32.gmra.mrb[0].mxu0 %v1238
  %v1315 = vpop.f32.mrb[0].mxu0
  %v1316 = vadd.f32 0.0, %v1315
  %v1317 = vpop.f32.mrb[0].mxu0
  %1318 = vmatprep.mubr.f32.mxu0 0.0
  %1319 = vmatmul.mubr.f32.gmra.mrb[0].mxu0 %v1240
  %v1320 = vpop.f32.mrb[0].mxu0
  %v1321 = vadd.f32 0.0, %v1320
  %v1322 = vpop.f32.mrb[0].mxu0
  %1323 = vmatprep.mubr.f32.mxu0 0.0
  %1324 = vmatmul.mubr.f32.gmra.mrb[0].mxu0 %v1242
  %v1325 = vpop.f32.mrb[0].mxu0
  %v1326 = vadd.f32 0.0, %v1325
  %v1327 = vpop.f32.mrb[0].mxu0
  %1328 = vdwg.mxu0
  %v1329 = vsel %vm757, %v37, 0
  %v1331 = vsel %vm757, %v38, 0
  %v1333 = vsel %vm757, %v39, 0
  %v1335 = vsel %vm757, %v40, 0
  %1337 = vmatprep.subr.mxu0 0.0
  %1338 = vmatpush1.xpose.msra.mxu0 %v1329
  %1339 = vmatprep.subr.mxu0 0.0
  %1340 = vmatpush1.xpose.msra.mxu0 %v1331
  %1341 = vmatprep.subr.mxu0 0.0
  %1342 = vmatpush1.xpose.msra.mxu0 %v1333
  %1343 = vmatprep.subr.mxu0 0.0
  %1344 = vmatpush1.xpose.msra.mxu0 %v1335
  %1345 = vmatprep.subr.mxu0 0.0
  %1346 = vmatpush1.xpose.msra.mxu0 0.0
  %1347 = vmatprep.subr.mxu0 0.0
  %1348 = vmatpush1.xpose.msra.mxu0 0.0
  %1349 = vmatprep.subr.mxu0 0.0
  %1350 = vmatpush1.xpose.msra.mxu0 0.0
  %1351 = vmatprep.subr.mxu0 0.0
  %1352 = vmatpush1.xpose.msra.mxu0 0.0
  %1353 = vmatprep.subr.mxu0 0.0
  %1354 = vmatpush1.xpose.msra.mxu0 0.0
  %1355 = vmatprep.subr.mxu0 0.0
  %1356 = vmatpush1.xpose.msra.mxu0 0.0
  %1357 = vmatprep.subr.mxu0 0.0
  %1358 = vmatpush1.xpose.msra.mxu0 0.0
  %1359 = vmatprep.subr.mxu0 0.0
  %1360 = vmatpush1.xpose.msra.mxu0 0.0
  %1361 = vmatprep.subr.mxu0 0.0
  %1362 = vmatpush1.xpose.msra.mxu0 0.0
  %1363 = vmatprep.subr.mxu0 0.0
  %1364 = vmatpush1.xpose.msra.mxu0 0.0
  %1365 = vmatprep.subr.mxu0 0.0
  %1366 = vmatpush1.xpose.msra.mxu0 0.0
  %1367 = vmatprep.subr.mxu0 0.0
  %1368 = vmatpush1.xpose.msra.mxu0 0.0
  %1369 = vmatprep.subr.mxu0 0.0
  %1370 = vmatpush1.xpose.msra.mxu0 0.0
  %1371 = vmatprep.subr.mxu0 0.0
  %1372 = vmatpush1.xpose.msra.mxu0 0.0
  %1373 = vmatprep.subr.mxu0 0.0
  %1374 = vmatpush1.xpose.msra.mxu0 0.0
  %1375 = vmatprep.subr.mxu0 0.0
  %1376 = vmatpush1.xpose.msra.mxu0 0.0
  %1377 = vmatprep.subr.mxu0 0.0
  %1378 = vmatpush1.xpose.msra.mxu0 0.0
  %1379 = vmatprep.subr.mxu0 0.0
  %1380 = vmatpush1.xpose.msra.mxu0 0.0
  %1381 = vmatprep.subr.mxu0 0.0
  %1382 = vmatpush1.xpose.msra.mxu0 0.0
  %1383 = vmatprep.subr.mxu0 0.0
  %1384 = vmatpush1.xpose.msra.mxu0 0.0
  %1385 = vmatprep.subr.mxu0 0.0
  %1386 = vmatpush1.xpose.msra.mxu0 0.0
  %1387 = vmatprep.subr.mxu0 0.0
  %1388 = vmatpush1.xpose.msra.mxu0 0.0
  %1389 = vmatprep.subr.mxu0 0.0
  %1390 = vmatpush1.xpose.msra.mxu0 0.0
  %1391 = vmatprep.subr.mxu0 0.0
  %1392 = vmatpush1.xpose.msra.mxu0 0.0
  %1393 = vmatprep.subr.mxu0 0.0
  %1394 = vmatpush1.xpose.msra.mxu0 0.0
  %1395 = vmatprep.subr.mxu0 0.0
  %1396 = vmatpush1.xpose.msra.mxu0 0.0
  %1397 = vmatprep.subr.mxu0 0.0
  %1398 = vmatpush1.xpose.msra.mxu0 0.0
  %1399 = vmatprep.subr.mxu0 0.0
  %1400 = vmatpush1.xpose.msra.mxu0 0.0
  %1401 = vmatprep.mubr.f32.mxu0 0.0
  %1402 = vmatmul.mubr.f32.gmra.mrb[0].mxu0 %v1329
  %v1403 = vpop.f32.mrb[0].mxu0
  %v1404 = vadd.f32 0.0, %v1403
  %v1405 = vpop.f32.mrb[0].mxu0
  %1406 = vmatprep.mubr.f32.mxu0 0.0
  %1407 = vmatmul.mubr.f32.gmra.mrb[0].mxu0 %v1331
  %v1408 = vpop.f32.mrb[0].mxu0
  %v1409 = vadd.f32 0.0, %v1408
  %v1410 = vpop.f32.mrb[0].mxu0
  %1411 = vmatprep.mubr.f32.mxu0 0.0
  %1412 = vmatmul.mubr.f32.gmra.mrb[0].mxu0 %v1333
  %v1413 = vpop.f32.mrb[0].mxu0
  %v1414 = vadd.f32 0.0, %v1413
  %v1415 = vpop.f32.mrb[0].mxu0
  %1416 = vmatprep.mubr.f32.mxu0 0.0
  %1417 = vmatmul.mubr.f32.gmra.mrb[0].mxu0 %v1335
  %v1418 = vpop.f32.mrb[0].mxu0
  %v1419 = vadd.f32 0.0, %v1418
  %v1420 = vpop.f32.mrb[0].mxu0
  %1421 = vdwg.mxu0
  %v1422 = vlaneseq
  %v1423 = vand.u32 %v1422, 127
  %vm1424 = vcmask 220160
  %v1425 = vsel %vm1424, %v1311, -inf
  %1426 = vmax.xlane.f32.xlu0 %v1425
  %v1427 = vpop.xlane.xlu0 %1426
  %v1428 = vsel %vm1424, %v1316, -inf
  %1429 = vmax.xlane.f32.xlu0 %v1428
  %v1430 = vpop.xlane.xlu0 %1429
  %v1431 = vsel %vm1424, %v1321, -inf
  %1432 = vmax.xlane.f32.xlu0 %v1431
  %v1433 = vpop.xlane.xlu0 %1432
  %vm1434 = vcmask 215040
  %v1435 = vsel %vm1434, %v1326, -inf
  %1436 = vmax.xlane.f32.xlu0 %v1435
  %v1437 = vpop.xlane.xlu0 %1436
  %v1438 = vsel %vm1424, %v1404, -inf
  %1439 = vmax.xlane.f32.xlu0 %v1438
  %v1440 = vpop.xlane.xlu0 %1439
  %v1441 = vsel %vm1424, %v1409, -inf
  %1442 = vmax.xlane.f32.xlu0 %v1441
  %v1443 = vpop.xlane.xlu0 %1442
  %v1444 = vsel %vm1424, %v1414, -inf
  %1445 = vmax.xlane.f32.xlu0 %v1444
  %v1446 = vpop.xlane.xlu0 %1445
  %v1447 = vsel %vm1434, %v1419, -inf
  %1448 = vmax.xlane.f32.xlu0 %v1447
  %v1449 = vpop.xlane.xlu0 %1448
  %vm1450 = vcmp.ge.f32.partialorder %v1311, %v1427
  %vm1451 = vcmp.ge.f32.partialorder %v1316, %v1430
  %vm1452 = vcmp.ge.f32.partialorder %v1321, %v1433
  %vm1453 = vcmp.ge.f32.partialorder %v1326, %v1437
  %vm1454 = vcmp.ge.f32.partialorder %v1404, %v1440
  %vm1455 = vcmp.ge.f32.partialorder %v1409, %v1443
  %vm1456 = vcmp.ge.f32.partialorder %v1414, %v1446
  %vm1457 = vcmp.ge.f32.partialorder %v1419, %v1449
  %v1458 = vsel %vm1450, %v1423, 27
  %v1459 = vsel %vm1451, %v1423, 27
  %v1460 = vsel %vm1452, %v1423, 27
  %v1461 = vsel %vm1453, %v1423, 27
  %v1462 = vsel %vm1454, %v1423, 27
  %v1463 = vsel %vm1455, %v1423, 27
  %v1464 = vsel %vm1456, %v1423, 27
  %v1465 = vsel %vm1457, %v1423, 27
  %v1466 = vsel %vm1424, %v1458, 2147483647
  %v1467 = vand.u32 %v1466, 65535
  %v1468 = vshra.s32 %v1466, 16
  %v1469 = vcvt.s32.f32 %v1467
  %v1470 = vcvt.s32.f32 %v1468
  %1471 = vmin.xlane.f32.xlu0 %v1470
  %v1472 = vpop.xlane.xlu0 %1471
  %vm1473 = vcmp.eq.f32.partialorder %v1470, %v1472
  %v1474 = vsel %vm1473, %v1469, inf
  %1475 = vmin.xlane.f32.xlu0 %v1474
  %v1476 = vpop.xlane.xlu0 %1475
  %v1477 = vcvt.f32.s32 %v1476
  %v1478 = vcvt.f32.s32 %v1472
  %v1479 = vshll.u32 %v1478, 16
  %v1480 = vadd.s32 %v1479, %v1477
  %v1481 = vsel %vm1424, %v1459, 2147483647
  %v1482 = vand.u32 %v1481, 65535
  %v1483 = vshra.s32 %v1481, 16
  %v1484 = vcvt.s32.f32 %v1482
  %v1485 = vcvt.s32.f32 %v1483
  %1486 = vmin.xlane.f32.xlu0 %v1485
  %v1487 = vpop.xlane.xlu0 %1486
  %vm1488 = vcmp.eq.f32.partialorder %v1485, %v1487
  %v1489 = vsel %vm1488, %v1484, inf
  %1490 = vmin.xlane.f32.xlu0 %v1489
  %v1491 = vpop.xlane.xlu0 %1490
  %v1492 = vcvt.f32.s32 %v1491
  %v1493 = vcvt.f32.s32 %v1487
  %v1494 = vshll.u32 %v1493, 16
  %v1495 = vadd.s32 %v1494, %v1492
  %v1496 = vsel %vm1424, %v1460, 2147483647
  %v1497 = vand.u32 %v1496, 65535
  %v1498 = vshra.s32 %v1496, 16
  %v1499 = vcvt.s32.f32 %v1497
  %v1500 = vcvt.s32.f32 %v1498
  %1501 = vmin.xlane.f32.xlu0 %v1500
  %v1502 = vpop.xlane.xlu0 %1501
  %vm1503 = vcmp.eq.f32.partialorder %v1500, %v1502
  %v1504 = vsel %vm1503, %v1499, inf
  %1505 = vmin.xlane.f32.xlu0 %v1504
  %v1506 = vpop.xlane.xlu0 %1505
  %v1507 = vcvt.f32.s32 %v1506
  %v1508 = vcvt.f32.s32 %v1502
  %v1509 = vshll.u32 %v1508, 16
  %v1510 = vadd.s32 %v1509, %v1507
  %v1511 = vsel %vm1434, %v1461, 2147483647
  %v1512 = vand.u32 %v1511, 65535
  %v1513 = vshra.s32 %v1511, 16
  %v1514 = vcvt.s32.f32 %v1512
  %v1515 = vcvt.s32.f32 %v1513
  %1516 = vmin.xlane.f32.xlu0 %v1515
  %v1517 = vpop.xlane.xlu0 %1516
  %vm1518 = vcmp.eq.f32.partialorder %v1515, %v1517
  %v1519 = vsel %vm1518, %v1514, inf
  %1520 = vmin.xlane.f32.xlu0 %v1519
  %v1521 = vpop.xlane.xlu0 %1520
  %v1522 = vcvt.f32.s32 %v1521
  %v1523 = vcvt.f32.s32 %v1517
  %v1524 = vshll.u32 %v1523, 16
  %v1525 = vadd.s32 %v1524, %v1522
  %v1526 = vsel %vm1424, %v1462, 2147483647
  %v1527 = vand.u32 %v1526, 65535
  %v1528 = vshra.s32 %v1526, 16
  %v1529 = vcvt.s32.f32 %v1527
  %v1530 = vcvt.s32.f32 %v1528
  %1531 = vmin.xlane.f32.xlu0 %v1530
  %v1532 = vpop.xlane.xlu0 %1531
  %vm1533 = vcmp.eq.f32.partialorder %v1530, %v1532
  %v1534 = vsel %vm1533, %v1529, inf
  %1535 = vmin.xlane.f32.xlu0 %v1534
  %v1536 = vpop.xlane.xlu0 %1535
  %v1537 = vcvt.f32.s32 %v1536
  %v1538 = vcvt.f32.s32 %v1532
  %v1539 = vshll.u32 %v1538, 16
  %v1540 = vadd.s32 %v1539, %v1537
  %v1541 = vsel %vm1424, %v1463, 2147483647
  %v1542 = vand.u32 %v1541, 65535
  %v1543 = vshra.s32 %v1541, 16
  %v1544 = vcvt.s32.f32 %v1542
  %v1545 = vcvt.s32.f32 %v1543
  %1546 = vmin.xlane.f32.xlu0 %v1545
  %v1547 = vpop.xlane.xlu0 %1546
  %vm1548 = vcmp.eq.f32.partialorder %v1545, %v1547
  %v1549 = vsel %vm1548, %v1544, inf
  %1550 = vmin.xlane.f32.xlu0 %v1549
  %v1551 = vpop.xlane.xlu0 %1550
  %v1552 = vcvt.f32.s32 %v1551
  %v1553 = vcvt.f32.s32 %v1547
  %v1554 = vshll.u32 %v1553, 16
  %v1555 = vadd.s32 %v1554, %v1552
  %v1556 = vsel %vm1424, %v1464, 2147483647
  %v1557 = vand.u32 %v1556, 65535
  %v1558 = vshra.s32 %v1556, 16
  %v1559 = vcvt.s32.f32 %v1557
  %v1560 = vcvt.s32.f32 %v1558
  %1561 = vmin.xlane.f32.xlu0 %v1560
  %v1562 = vpop.xlane.xlu0 %1561
  %vm1563 = vcmp.eq.f32.partialorder %v1560, %v1562
  %v1564 = vsel %vm1563, %v1559, inf
  %1565 = vmin.xlane.f32.xlu0 %v1564
  %v1566 = vpop.xlane.xlu0 %1565
  %v1567 = vcvt.f32.s32 %v1566
  %v1568 = vcvt.f32.s32 %v1562
  %v1569 = vshll.u32 %v1568, 16
  %v1570 = vadd.s32 %v1569, %v1567
  %v1571 = vsel %vm1434, %v1465, 2147483647
  %v1572 = vand.u32 %v1571, 65535
  %v1573 = vshra.s32 %v1571, 16
  %v1574 = vcvt.s32.f32 %v1572
  %v1575 = vcvt.s32.f32 %v1573
  %1576 = vmin.xlane.f32.xlu0 %v1575
  %v1577 = vpop.xlane.xlu0 %1576
  %vm1578 = vcmp.eq.f32.partialorder %v1575, %v1577
  %v1579 = vsel %vm1578, %v1574, inf
  %1580 = vmin.xlane.f32.xlu0 %v1579
  %v1581 = vpop.xlane.xlu0 %1580
  %v1582 = vcvt.f32.s32 %v1581
  %v1583 = vcvt.f32.s32 %v1577
  %v1584 = vshll.u32 %v1583, 16
  %v1585 = vadd.s32 %v1584, %v1582
  %vm1586 = vcmp.eq.s32.totalorder %v1423, %v1480
  %vm1587 = vcmp.eq.s32.totalorder %v1423, %v1495
  %vm1588 = vcmp.eq.s32.totalorder %v1423, %v1510
  %vm1589 = vcmp.eq.s32.totalorder %v1423, %v1525
  %vm1590 = vcmp.eq.s32.totalorder %v1423, %v1540
  %vm1591 = vcmp.eq.s32.totalorder %v1423, %v1555
  %vm1592 = vcmp.eq.s32.totalorder %v1423, %v1570
  %vm1593 = vcmp.eq.s32.totalorder %v1423, %v1585
  %v1594 = vsel %vm1586, -inf, %v1311
  %v1595 = vsel %vm1587, -inf, %v1316
  %v1596 = vsel %vm1588, -inf, %v1321
  %v1597 = vsel %vm1589, -inf, %v1326
  %v1598 = vsel %vm1590, -inf, %v1404
  %v1599 = vsel %vm1591, -inf, %v1409
  %v1600 = vsel %vm1592, -inf, %v1414
  %v1601 = vsel %vm1593, -inf, %v1419
  %v1602 = vsel %vm1424, %v1594, -inf
  %1603 = vmax.xlane.f32.xlu0 %v1602
  %v1604 = vpop.xlane.xlu0 %1603
  %v1605 = vsel %vm1424, %v1595, -inf
  %1606 = vmax.xlane.f32.xlu0 %v1605
  %v1607 = vpop.xlane.xlu0 %1606
  %v1608 = vsel %vm1424, %v1596, -inf
  %1609 = vmax.xlane.f32.xlu0 %v1608
  %v1610 = vpop.xlane.xlu0 %1609
  %v1611 = vsel %vm1434, %v1597, -inf
  %1612 = vmax.xlane.f32.xlu0 %v1611
  %v1613 = vpop.xlane.xlu0 %1612
  %v1614 = vsel %vm1424, %v1598, -inf
  %1615 = vmax.xlane.f32.xlu0 %v1614
  %v1616 = vpop.xlane.xlu0 %1615
  %v1617 = vsel %vm1424, %v1599, -inf
  %1618 = vmax.xlane.f32.xlu0 %v1617
  %v1619 = vpop.xlane.xlu0 %1618
  %v1620 = vsel %vm1424, %v1600, -inf
  %1621 = vmax.xlane.f32.xlu0 %v1620
  %v1622 = vpop.xlane.xlu0 %1621
  %v1623 = vsel %vm1434, %v1601, -inf
  %1624 = vmax.xlane.f32.xlu0 %v1623
  %v1625 = vpop.xlane.xlu0 %1624
  %vm1626 = vcmp.ge.f32.partialorder %v1594, %v1604
  %vm1627 = vcmp.ge.f32.partialorder %v1595, %v1607
  %vm1628 = vcmp.ge.f32.partialorder %v1596, %v1610
  %vm1629 = vcmp.ge.f32.partialorder %v1597, %v1613
  %vm1630 = vcmp.ge.f32.partialorder %v1598, %v1616
  %vm1631 = vcmp.ge.f32.partialorder %v1599, %v1619
  %vm1632 = vcmp.ge.f32.partialorder %v1600, %v1622
  %vm1633 = vcmp.ge.f32.partialorder %v1601, %v1625
  %v1634 = vsel %vm1626, %v1423, 27
  %v1635 = vsel %vm1627, %v1423, 27
  %v1636 = vsel %vm1628, %v1423, 27
  %v1637 = vsel %vm1629, %v1423, 27
  %v1638 = vsel %vm1630, %v1423, 27
  %v1639 = vsel %vm1631, %v1423, 27
  %v1640 = vsel %vm1632, %v1423, 27
  %v1641 = vsel %vm1633, %v1423, 27
  %v1642 = vsel %vm1424, %v1634, 2147483647
  %v1643 = vand.u32 %v1642, 65535
  %v1644 = vshra.s32 %v1642, 16
  %v1645 = vcvt.s32.f32 %v1643
  %v1646 = vcvt.s32.f32 %v1644
  %1647 = vmin.xlane.f32.xlu0 %v1646
  %v1648 = vpop.xlane.xlu0 %1647
  %vm1649 = vcmp.eq.f32.partialorder %v1646, %v1648
  %v1650 = vsel %vm1649, %v1645, inf
  %1651 = vmin.xlane.f32.xlu0 %v1650
  %v1652 = vpop.xlane.xlu0 %1651
  %v1653 = vcvt.f32.s32 %v1652
  %v1654 = vcvt.f32.s32 %v1648
  %v1655 = vshll.u32 %v1654, 16
  %v1656 = vadd.s32 %v1655, %v1653
  %v1657 = vsel %vm1424, %v1635, 2147483647
  %v1658 = vand.u32 %v1657, 65535
  %v1659 = vshra.s32 %v1657, 16
  %v1660 = vcvt.s32.f32 %v1658
  %v1661 = vcvt.s32.f32 %v1659
  %1662 = vmin.xlane.f32.xlu0 %v1661
  %v1663 = vpop.xlane.xlu0 %1662
  %vm1664 = vcmp.eq.f32.partialorder %v1661, %v1663
  %v1665 = vsel %vm1664, %v1660, inf
  %1666 = vmin.xlane.f32.xlu0 %v1665
  %v1667 = vpop.xlane.xlu0 %1666
  %v1668 = vcvt.f32.s32 %v1667
  %v1669 = vcvt.f32.s32 %v1663
  %v1670 = vshll.u32 %v1669, 16
  %v1671 = vadd.s32 %v1670, %v1668
  %v1672 = vsel %vm1424, %v1636, 2147483647
  %v1673 = vand.u32 %v1672, 65535
  %v1674 = vshra.s32 %v1672, 16
  %v1675 = vcvt.s32.f32 %v1673
  %v1676 = vcvt.s32.f32 %v1674
  %1677 = vmin.xlane.f32.xlu0 %v1676
  %v1678 = vpop.xlane.xlu0 %1677
  %vm1679 = vcmp.eq.f32.partialorder %v1676, %v1678
  %v1680 = vsel %vm1679, %v1675, inf
  %1681 = vmin.xlane.f32.xlu0 %v1680
  %v1682 = vpop.xlane.xlu0 %1681
  %v1683 = vcvt.f32.s32 %v1682
  %v1684 = vcvt.f32.s32 %v1678
  %v1685 = vshll.u32 %v1684, 16
  %v1686 = vadd.s32 %v1685, %v1683
  %v1687 = vsel %vm1434, %v1637, 2147483647
  %v1688 = vand.u32 %v1687, 65535
  %v1689 = vshra.s32 %v1687, 16
  %v1690 = vcvt.s32.f32 %v1688
  %v1691 = vcvt.s32.f32 %v1689
  %1692 = vmin.xlane.f32.xlu0 %v1691
  %v1693 = vpop.xlane.xlu0 %1692
  %vm1694 = vcmp.eq.f32.partialorder %v1691, %v1693
  %v1695 = vsel %vm1694, %v1690, inf
  %1696 = vmin.xlane.f32.xlu0 %v1695
  %v1697 = vpop.xlane.xlu0 %1696
  %v1698 = vcvt.f32.s32 %v1697
  %v1699 = vcvt.f32.s32 %v1693
  %v1700 = vshll.u32 %v1699, 16
  %v1701 = vadd.s32 %v1700, %v1698
  %v1702 = vsel %vm1424, %v1638, 2147483647
  %v1703 = vand.u32 %v1702, 65535
  %v1704 = vshra.s32 %v1702, 16
  %v1705 = vcvt.s32.f32 %v1703
  %v1706 = vcvt.s32.f32 %v1704
  %1707 = vmin.xlane.f32.xlu0 %v1706
  %v1708 = vpop.xlane.xlu0 %1707
  %vm1709 = vcmp.eq.f32.partialorder %v1706, %v1708
  %v1710 = vsel %vm1709, %v1705, inf
  %1711 = vmin.xlane.f32.xlu0 %v1710
  %v1712 = vpop.xlane.xlu0 %1711
  %v1713 = vcvt.f32.s32 %v1712
  %v1714 = vcvt.f32.s32 %v1708
  %v1715 = vshll.u32 %v1714, 16
  %v1716 = vadd.s32 %v1715, %v1713
  %v1717 = vsel %vm1424, %v1639, 2147483647
  %v1718 = vand.u32 %v1717, 65535
  %v1719 = vshra.s32 %v1717, 16
  %v1720 = vcvt.s32.f32 %v1718
  %v1721 = vcvt.s32.f32 %v1719
  %1722 = vmin.xlane.f32.xlu0 %v1721
  %v1723 = vpop.xlane.xlu0 %1722
  %vm1724 = vcmp.eq.f32.partialorder %v1721, %v1723
  %v1725 = vsel %vm1724, %v1720, inf
  %1726 = vmin.xlane.f32.xlu0 %v1725
  %v1727 = vpop.xlane.xlu0 %1726
  %v1728 = vcvt.f32.s32 %v1727
  %v1729 = vcvt.f32.s32 %v1723
  %v1730 = vshll.u32 %v1729, 16
  %v1731 = vadd.s32 %v1730, %v1728
  %v1732 = vsel %vm1424, %v1640, 2147483647
  %v1733 = vand.u32 %v1732, 65535
  %v1734 = vshra.s32 %v1732, 16
  %v1735 = vcvt.s32.f32 %v1733
  %v1736 = vcvt.s32.f32 %v1734
  %1737 = vmin.xlane.f32.xlu0 %v1736
  %v1738 = vpop.xlane.xlu0 %1737
  %vm1739 = vcmp.eq.f32.partialorder %v1736, %v1738
  %v1740 = vsel %vm1739, %v1735, inf
  %1741 = vmin.xlane.f32.xlu0 %v1740
  %v1742 = vpop.xlane.xlu0 %1741
  %v1743 = vcvt.f32.s32 %v1742
  %v1744 = vcvt.f32.s32 %v1738
  %v1745 = vshll.u32 %v1744, 16
  %v1746 = vadd.s32 %v1745, %v1743
  %v1747 = vsel %vm1434, %v1641, 2147483647
  %v1748 = vand.u32 %v1747, 65535
  %v1749 = vshra.s32 %v1747, 16
  %v1750 = vcvt.s32.f32 %v1748
  %v1751 = vcvt.s32.f32 %v1749
  %1752 = vmin.xlane.f32.xlu0 %v1751
  %v1753 = vpop.xlane.xlu0 %1752
  %vm1754 = vcmp.eq.f32.partialorder %v1751, %v1753
  %v1755 = vsel %vm1754, %v1750, inf
  %1756 = vmin.xlane.f32.xlu0 %v1755
  %v1757 = vpop.xlane.xlu0 %1756
  %v1758 = vcvt.f32.s32 %v1757
  %v1759 = vcvt.f32.s32 %v1753
  %v1760 = vshll.u32 %v1759, 16
  %v1761 = vadd.s32 %v1760, %v1758
  %vm1762 = vcmp.eq.s32.totalorder %v1423, %v1656
  %vm1763 = vcmp.eq.s32.totalorder %v1423, %v1671
  %vm1764 = vcmp.eq.s32.totalorder %v1423, %v1686
  %vm1765 = vcmp.eq.s32.totalorder %v1423, %v1701
  %vm1766 = vcmp.eq.s32.totalorder %v1423, %v1716
  %vm1767 = vcmp.eq.s32.totalorder %v1423, %v1731
  %vm1768 = vcmp.eq.s32.totalorder %v1423, %v1746
  %vm1769 = vcmp.eq.s32.totalorder %v1423, %v1761
  %v1770 = vsel %vm1762, -inf, %v1594
  %v1771 = vsel %vm1763, -inf, %v1595
  %v1772 = vsel %vm1764, -inf, %v1596
  %v1773 = vsel %vm1765, -inf, %v1597
  %v1774 = vsel %vm1766, -inf, %v1598
  %v1775 = vsel %vm1767, -inf, %v1599
  %v1776 = vsel %vm1768, -inf, %v1600
  %v1777 = vsel %vm1769, -inf, %v1601
  %v1778 = vsel %vm1424, %v1770, -inf
  %1779 = vmax.xlane.f32.xlu0 %v1778
  %v1780 = vpop.xlane.xlu0 %1779
  %v1781 = vsel %vm1424, %v1771, -inf
  %1782 = vmax.xlane.f32.xlu0 %v1781
  %v1783 = vpop.xlane.xlu0 %1782
  %v1784 = vsel %vm1424, %v1772, -inf
  %1785 = vmax.xlane.f32.xlu0 %v1784
  %v1786 = vpop.xlane.xlu0 %1785
  %v1787 = vsel %vm1434, %v1773, -inf
  %1788 = vmax.xlane.f32.xlu0 %v1787
  %v1789 = vpop.xlane.xlu0 %1788
  %v1790 = vsel %vm1424, %v1774, -inf
  %1791 = vmax.xlane.f32.xlu0 %v1790
  %v1792 = vpop.xlane.xlu0 %1791
  %v1793 = vsel %vm1424, %v1775, -inf
  %1794 = vmax.xlane.f32.xlu0 %v1793
  %v1795 = vpop.xlane.xlu0 %1794
  %v1796 = vsel %vm1424, %v1776, -inf
  %1797 = vmax.xlane.f32.xlu0 %v1796
  %v1798 = vpop.xlane.xlu0 %1797
  %v1799 = vsel %vm1434, %v1777, -inf
  %1800 = vmax.xlane.f32.xlu0 %v1799
  %v1801 = vpop.xlane.xlu0 %1800
  %vm1802 = vcmp.ge.f32.partialorder %v1770, %v1780
  %vm1803 = vcmp.ge.f32.partialorder %v1771, %v1783
  %vm1804 = vcmp.ge.f32.partialorder %v1772, %v1786
  %vm1805 = vcmp.ge.f32.partialorder %v1773, %v1789
  %vm1806 = vcmp.ge.f32.partialorder %v1774, %v1792
  %vm1807 = vcmp.ge.f32.partialorder %v1775, %v1795
  %vm1808 = vcmp.ge.f32.partialorder %v1776, %v1798
  %vm1809 = vcmp.ge.f32.partialorder %v1777, %v1801
  %v1810 = vsel %vm1802, %v1423, 27
  %v1811 = vsel %vm1803, %v1423, 27
  %v1812 = vsel %vm1804, %v1423, 27
  %v1813 = vsel %vm1805, %v1423, 27
  %v1814 = vsel %vm1806, %v1423, 27
  %v1815 = vsel %vm1807, %v1423, 27
  %v1816 = vsel %vm1808, %v1423, 27
  %v1817 = vsel %vm1809, %v1423, 27
  %v1818 = vsel %vm1424, %v1810, 2147483647
  %v1819 = vand.u32 %v1818, 65535
  %v1820 = vshra.s32 %v1818, 16
  %v1821 = vcvt.s32.f32 %v1819
  %v1822 = vcvt.s32.f32 %v1820
  %1823 = vmin.xlane.f32.xlu0 %v1822
  %v1824 = vpop.xlane.xlu0 %1823
  %vm1825 = vcmp.eq.f32.partialorder %v1822, %v1824
  %v1826 = vsel %vm1825, %v1821, inf
  %1827 = vmin.xlane.f32.xlu0 %v1826
  %v1828 = vpop.xlane.xlu0 %1827
  %v1829 = vcvt.f32.s32 %v1828
  %v1830 = vcvt.f32.s32 %v1824
  %v1831 = vshll.u32 %v1830, 16
  %v1832 = vadd.s32 %v1831, %v1829
  %v1833 = vsel %vm1424, %v1811, 2147483647
  %v1834 = vand.u32 %v1833, 65535
  %v1835 = vshra.s32 %v1833, 16
  %v1836 = vcvt.s32.f32 %v1834
  %v1837 = vcvt.s32.f32 %v1835
  %1838 = vmin.xlane.f32.xlu0 %v1837
  %v1839 = vpop.xlane.xlu0 %1838
  %vm1840 = vcmp.eq.f32.partialorder %v1837, %v1839
  %v1841 = vsel %vm1840, %v1836, inf
  %1842 = vmin.xlane.f32.xlu0 %v1841
  %v1843 = vpop.xlane.xlu0 %1842
  %v1844 = vcvt.f32.s32 %v1843
  %v1845 = vcvt.f32.s32 %v1839
  %v1846 = vshll.u32 %v1845, 16
  %v1847 = vadd.s32 %v1846, %v1844
  %v1848 = vsel %vm1424, %v1812, 2147483647
  %v1849 = vand.u32 %v1848, 65535
  %v1850 = vshra.s32 %v1848, 16
  %v1851 = vcvt.s32.f32 %v1849
  %v1852 = vcvt.s32.f32 %v1850
  %1853 = vmin.xlane.f32.xlu0 %v1852
  %v1854 = vpop.xlane.xlu0 %1853
  %vm1855 = vcmp.eq.f32.partialorder %v1852, %v1854
  %v1856 = vsel %vm1855, %v1851, inf
  %1857 = vmin.xlane.f32.xlu0 %v1856
  %v1858 = vpop.xlane.xlu0 %1857
  %v1859 = vcvt.f32.s32 %v1858
  %v1860 = vcvt.f32.s32 %v1854
  %v1861 = vshll.u32 %v1860, 16
  %v1862 = vadd.s32 %v1861, %v1859
  %v1863 = vsel %vm1434, %v1813, 2147483647
  %v1864 = vand.u32 %v1863, 65535
  %v1865 = vshra.s32 %v1863, 16
  %v1866 = vcvt.s32.f32 %v1864
  %v1867 = vcvt.s32.f32 %v1865
  %1868 = vmin.xlane.f32.xlu0 %v1867
  %v1869 = vpop.xlane.xlu0 %1868
  %vm1870 = vcmp.eq.f32.partialorder %v1867, %v1869
  %v1871 = vsel %vm1870, %v1866, inf
  %1872 = vmin.xlane.f32.xlu0 %v1871
  %v1873 = vpop.xlane.xlu0 %1872
  %v1874 = vcvt.f32.s32 %v1873
  %v1875 = vcvt.f32.s32 %v1869
  %v1876 = vshll.u32 %v1875, 16
  %v1877 = vadd.s32 %v1876, %v1874
  %v1878 = vsel %vm1424, %v1814, 2147483647
  %v1879 = vand.u32 %v1878, 65535
  %v1880 = vshra.s32 %v1878, 16
  %v1881 = vcvt.s32.f32 %v1879
  %v1882 = vcvt.s32.f32 %v1880
  %1883 = vmin.xlane.f32.xlu0 %v1882
  %v1884 = vpop.xlane.xlu0 %1883
  %vm1885 = vcmp.eq.f32.partialorder %v1882, %v1884
  %v1886 = vsel %vm1885, %v1881, inf
  %1887 = vmin.xlane.f32.xlu0 %v1886
  %v1888 = vpop.xlane.xlu0 %1887
  %v1889 = vcvt.f32.s32 %v1888
  %v1890 = vcvt.f32.s32 %v1884
  %v1891 = vshll.u32 %v1890, 16
  %v1892 = vadd.s32 %v1891, %v1889
  %v1893 = vsel %vm1424, %v1815, 2147483647
  %v1894 = vand.u32 %v1893, 65535
  %v1895 = vshra.s32 %v1893, 16
  %v1896 = vcvt.s32.f32 %v1894
  %v1897 = vcvt.s32.f32 %v1895
  %1898 = vmin.xlane.f32.xlu0 %v1897
  %v1899 = vpop.xlane.xlu0 %1898
  %vm1900 = vcmp.eq.f32.partialorder %v1897, %v1899
  %v1901 = vsel %vm1900, %v1896, inf
  %1902 = vmin.xlane.f32.xlu0 %v1901
  %v1903 = vpop.xlane.xlu0 %1902
  %v1904 = vcvt.f32.s32 %v1903
  %v1905 = vcvt.f32.s32 %v1899
  %v1906 = vshll.u32 %v1905, 16
  %v1907 = vadd.s32 %v1906, %v1904
  %v1908 = vsel %vm1424, %v1816, 2147483647
  %v1909 = vand.u32 %v1908, 65535
  %v1910 = vshra.s32 %v1908, 16
  %v1911 = vcvt.s32.f32 %v1909
  %v1912 = vcvt.s32.f32 %v1910
  %1913 = vmin.xlane.f32.xlu0 %v1912
  %v1914 = vpop.xlane.xlu0 %1913
  %vm1915 = vcmp.eq.f32.partialorder %v1912, %v1914
  %v1916 = vsel %vm1915, %v1911, inf
  %1917 = vmin.xlane.f32.xlu0 %v1916
  %v1918 = vpop.xlane.xlu0 %1917
  %v1919 = vcvt.f32.s32 %v1918
  %v1920 = vcvt.f32.s32 %v1914
  %v1921 = vshll.u32 %v1920, 16
  %v1922 = vadd.s32 %v1921, %v1919
  %v1923 = vsel %vm1434, %v1817, 2147483647
  %v1924 = vand.u32 %v1923, 65535
  %v1925 = vshra.s32 %v1923, 16
  %v1926 = vcvt.s32.f32 %v1924
  %v1927 = vcvt.s32.f32 %v1925
  %1928 = vmin.xlane.f32.xlu0 %v1927
  %v1929 = vpop.xlane.xlu0 %1928
  %vm1930 = vcmp.eq.f32.partialorder %v1927, %v1929
  %v1931 = vsel %vm1930, %v1926, inf
  %1932 = vmin.xlane.f32.xlu0 %v1931
  %v1933 = vpop.xlane.xlu0 %1932
  %v1934 = vcvt.f32.s32 %v1933
  %v1935 = vcvt.f32.s32 %v1929
  %v1936 = vshll.u32 %v1935, 16
  %v1937 = vadd.s32 %v1936, %v1934
  %vm1938 = vcmp.eq.s32.totalorder %v1423, %v1832
  %vm1939 = vcmp.eq.s32.totalorder %v1423, %v1847
  %vm1940 = vcmp.eq.s32.totalorder %v1423, %v1862
  %vm1941 = vcmp.eq.s32.totalorder %v1423, %v1877
  %vm1942 = vcmp.eq.s32.totalorder %v1423, %v1892
  %vm1943 = vcmp.eq.s32.totalorder %v1423, %v1907
  %vm1944 = vcmp.eq.s32.totalorder %v1423, %v1922
  %vm1945 = vcmp.eq.s32.totalorder %v1423, %v1937
  %v1946 = vsel %vm1938, -inf, %v1770
  %v1947 = vsel %vm1939, -inf, %v1771
  %v1948 = vsel %vm1940, -inf, %v1772
  %v1949 = vsel %vm1941, -inf, %v1773
  %v1950 = vsel %vm1942, -inf, %v1774
  %v1951 = vsel %vm1943, -inf, %v1775
  %v1952 = vsel %vm1944, -inf, %v1776
  %v1953 = vsel %vm1945, -inf, %v1777
  %v1954 = vsel %vm1424, %v1946, -inf
  %1955 = vmax.xlane.f32.xlu0 %v1954
  %v1956 = vpop.xlane.xlu0 %1955
  %v1957 = vsel %vm1424, %v1947, -inf
  %1958 = vmax.xlane.f32.xlu0 %v1957
  %v1959 = vpop.xlane.xlu0 %1958
  %v1960 = vsel %vm1424, %v1948, -inf
  %1961 = vmax.xlane.f32.xlu0 %v1960
  %v1962 = vpop.xlane.xlu0 %1961
  %v1963 = vsel %vm1434, %v1949, -inf
  %1964 = vmax.xlane.f32.xlu0 %v1963
  %v1965 = vpop.xlane.xlu0 %1964
  %v1966 = vsel %vm1424, %v1950, -inf
  %1967 = vmax.xlane.f32.xlu0 %v1966
  %v1968 = vpop.xlane.xlu0 %1967
  %v1969 = vsel %vm1424, %v1951, -inf
  %1970 = vmax.xlane.f32.xlu0 %v1969
  %v1971 = vpop.xlane.xlu0 %1970
  %v1972 = vsel %vm1424, %v1952, -inf
  %1973 = vmax.xlane.f32.xlu0 %v1972
  %v1974 = vpop.xlane.xlu0 %1973
  %v1975 = vsel %vm1434, %v1953, -inf
  %1976 = vmax.xlane.f32.xlu0 %v1975
  %v1977 = vpop.xlane.xlu0 %1976
  %vm1978 = vcmp.ge.f32.partialorder %v1311, %v1956
  %vm1979 = vcmp.ge.f32.partialorder %v1316, %v1959
  %vm1980 = vcmp.ge.f32.partialorder %v1321, %v1962
  %vm1981 = vcmp.ge.f32.partialorder %v1326, %v1965
  %vm1982 = vcmp.ge.f32.partialorder %v1404, %v1968
  %vm1983 = vcmp.ge.f32.partialorder %v1409, %v1971
  %vm1984 = vcmp.ge.f32.partialorder %v1414, %v1974
  %vm1985 = vcmp.ge.f32.partialorder %v1419, %v1977
  %v1986 = vsel %vm1978, 1, 0
  %v1987 = vsel %vm1979, 1, 0
  %v1988 = vsel %vm1980, 1, 0
  %v1989 = vsel %vm1981, 1, 0
  %v1990 = vsel %vm1982, 1, 0
  %v1991 = vsel %vm1983, 1, 0
  %v1992 = vsel %vm1984, 1, 0
  %v1993 = vsel %vm1985, 1, 0
  %v1994 = vcvt.s32.f32 %v1986
  %v1995 = vcvt.s32.f32 %v1987
  %v1996 = vcvt.s32.f32 %v1988
  %v1997 = vcvt.s32.f32 %v1989
  %v1998 = vcvt.s32.f32 %v1990
  %v1999 = vcvt.s32.f32 %v1991
  %v2000 = vcvt.s32.f32 %v1992
  %v2001 = vcvt.s32.f32 %v1993
  %v2002 = vsel %vm1424, %v1994, 0.0
  %2003 = vadd.xlane.f32.xlu0 %v2002
  %v2004 = vpop.xlane.xlu0 %2003
  %v2005 = vsel %vm1424, %v1995, 0.0
  %2006 = vadd.xlane.f32.xlu0 %v2005
  %v2007 = vpop.xlane.xlu0 %2006
  %v2008 = vsel %vm1424, %v1996, 0.0
  %2009 = vadd.xlane.f32.xlu0 %v2008
  %v2010 = vpop.xlane.xlu0 %2009
  %v2011 = vsel %vm1434, %v1997, 0.0
  %2012 = vadd.xlane.f32.xlu0 %v2011
  %v2013 = vpop.xlane.xlu0 %2012
  %v2014 = vsel %vm1424, %v1998, 0.0
  %2015 = vadd.xlane.f32.xlu0 %v2014
  %v2016 = vpop.xlane.xlu0 %2015
  %v2017 = vsel %vm1424, %v1999, 0.0
  %2018 = vadd.xlane.f32.xlu0 %v2017
  %v2019 = vpop.xlane.xlu0 %2018
  %v2020 = vsel %vm1424, %v2000, 0.0
  %2021 = vadd.xlane.f32.xlu0 %v2020
  %v2022 = vpop.xlane.xlu0 %2021
  %v2023 = vsel %vm1434, %v2001, 0.0
  %2024 = vadd.xlane.f32.xlu0 %v2023
  %v2025 = vpop.xlane.xlu0 %2024
  %v2026 = vrsqrt.pop %v2004
  %v2027 = vrsqrt.pop %v2007
  %v2028 = vrsqrt.pop %v2010
  %v2029 = vrsqrt.pop %v2013
  %v2030 = vrsqrt.pop %v2016
  %v2031 = vrsqrt.pop %v2019
  %v2032 = vrsqrt.pop %v2022
  %v2033 = vrsqrt.pop %v2025
  %v2042 = vlaneseq
  %v2043 = vshrl.u32 %v2042, 7
  %v2044 = vsub.s32 0, %v2043
  %v2045 = vrot.slane %v2026, %v2044
  %v2046 = vlaneseq
  %v2047 = vshrl.u32 %v2046, 7
  %v2048 = vsub.s32 1, %v2047
  %v2049 = vrot.slane %v2026, %v2048
  %v2050 = vlaneseq
  %v2051 = vshrl.u32 %v2050, 7
  %v2052 = vsub.s32 2, %v2051
  %v2053 = vrot.slane %v2026, %v2052
  %v2054 = vlaneseq
  %v2055 = vshrl.u32 %v2054, 7
  %v2056 = vsub.s32 3, %v2055
  %v2057 = vrot.slane %v2026, %v2056
  %v2058 = vlaneseq
  %v2059 = vshrl.u32 %v2058, 7
  %v2060 = vsub.s32 4, %v2059
  %v2061 = vrot.slane %v2026, %v2060
  %v2062 = vlaneseq
  %v2063 = vshrl.u32 %v2062, 7
  %v2064 = vsub.s32 5, %v2063
  %v2065 = vrot.slane %v2026, %v2064
  %v2066 = vlaneseq
  %v2067 = vshrl.u32 %v2066, 7
  %v2068 = vsub.s32 6, %v2067
  %v2069 = vrot.slane %v2026, %v2068
  %v2070 = vlaneseq
  %v2071 = vshrl.u32 %v2070, 7
  %v2072 = vsub.s32 7, %v2071
  %v2073 = vrot.slane %v2026, %v2072
  %v2074 = vlaneseq
  %v2075 = vshrl.u32 %v2074, 7
  %v2076 = vsub.s32 0, %v2075
  %v2077 = vrot.slane %v2027, %v2076
  %v2078 = vlaneseq
  %v2079 = vshrl.u32 %v2078, 7
  %v2080 = vsub.s32 1, %v2079
  %v2081 = vrot.slane %v2027, %v2080
  %v2082 = vlaneseq
  %v2083 = vshrl.u32 %v2082, 7
  %v2084 = vsub.s32 2, %v2083
  %v2085 = vrot.slane %v2027, %v2084
  %v2086 = vlaneseq
  %v2087 = vshrl.u32 %v2086, 7
  %v2088 = vsub.s32 3, %v2087
  %v2089 = vrot.slane %v2027, %v2088
  %v2090 = vlaneseq
  %v2091 = vshrl.u32 %v2090, 7
  %v2092 = vsub.s32 4, %v2091
  %v2093 = vrot.slane %v2027, %v2092
  %v2094 = vlaneseq
  %v2095 = vshrl.u32 %v2094, 7
  %v2096 = vsub.s32 5, %v2095
  %v2097 = vrot.slane %v2027, %v2096
  %v2098 = vlaneseq
  %v2099 = vshrl.u32 %v2098, 7
  %v2100 = vsub.s32 6, %v2099
  %v2101 = vrot.slane %v2027, %v2100
  %v2102 = vlaneseq
  %v2103 = vshrl.u32 %v2102, 7
  %v2104 = vsub.s32 7, %v2103
  %v2105 = vrot.slane %v2027, %v2104
  %v2106 = vlaneseq
  %v2107 = vshrl.u32 %v2106, 7
  %v2108 = vsub.s32 0, %v2107
  %v2109 = vrot.slane %v2028, %v2108
  %v2110 = vlaneseq
  %v2111 = vshrl.u32 %v2110, 7
  %v2112 = vsub.s32 1, %v2111
  %v2113 = vrot.slane %v2028, %v2112
  %v2114 = vlaneseq
  %v2115 = vshrl.u32 %v2114, 7
  %v2116 = vsub.s32 2, %v2115
  %v2117 = vrot.slane %v2028, %v2116
  %v2118 = vlaneseq
  %v2119 = vshrl.u32 %v2118, 7
  %v2120 = vsub.s32 3, %v2119
  %v2121 = vrot.slane %v2028, %v2120
  %v2122 = vlaneseq
  %v2123 = vshrl.u32 %v2122, 7
  %v2124 = vsub.s32 4, %v2123
  %v2125 = vrot.slane %v2028, %v2124
  %v2126 = vlaneseq
  %v2127 = vshrl.u32 %v2126, 7
  %v2128 = vsub.s32 5, %v2127
  %v2129 = vrot.slane %v2028, %v2128
  %v2130 = vlaneseq
  %v2131 = vshrl.u32 %v2130, 7
  %v2132 = vsub.s32 6, %v2131
  %v2133 = vrot.slane %v2028, %v2132
  %v2134 = vlaneseq
  %v2135 = vshrl.u32 %v2134, 7
  %v2136 = vsub.s32 7, %v2135
  %v2137 = vrot.slane %v2028, %v2136
  %v2138 = vlaneseq
  %v2139 = vshrl.u32 %v2138, 7
  %v2140 = vsub.s32 0, %v2139
  %v2141 = vrot.slane %v2029, %v2140
  %v2142 = vlaneseq
  %v2143 = vshrl.u32 %v2142, 7
  %v2144 = vsub.s32 1, %v2143
  %v2145 = vrot.slane %v2029, %v2144
  %v2146 = vlaneseq
  %v2147 = vshrl.u32 %v2146, 7
  %v2148 = vsub.s32 2, %v2147
  %v2149 = vrot.slane %v2029, %v2148
  %v2150 = vlaneseq
  %v2151 = vshrl.u32 %v2150, 7
  %v2152 = vsub.s32 0, %v2151
  %v2153 = vrot.slane %v2030, %v2152
  %v2154 = vlaneseq
  %v2155 = vshrl.u32 %v2154, 7
  %v2156 = vsub.s32 1, %v2155
  %v2157 = vrot.slane %v2030, %v2156
  %v2158 = vlaneseq
  %v2159 = vshrl.u32 %v2158, 7
  %v2160 = vsub.s32 2, %v2159
  %v2161 = vrot.slane %v2030, %v2160
  %v2162 = vlaneseq
  %v2163 = vshrl.u32 %v2162, 7
  %v2164 = vsub.s32 3, %v2163
  %v2165 = vrot.slane %v2030, %v2164
  %v2166 = vlaneseq
  %v2167 = vshrl.u32 %v2166, 7
  %v2168 = vsub.s32 4, %v2167
  %v2169 = vrot.slane %v2030, %v2168
  %v2170 = vlaneseq
  %v2171 = vshrl.u32 %v2170, 7
  %v2172 = vsub.s32 5, %v2171
  %v2173 = vrot.slane %v2030, %v2172
  %v2174 = vlaneseq
  %v2175 = vshrl.u32 %v2174, 7
  %v2176 = vsub.s32 6, %v2175
  %v2177 = vrot.slane %v2030, %v2176
  %v2178 = vlaneseq
  %v2179 = vshrl.u32 %v2178, 7
  %v2180 = vsub.s32 7, %v2179
  %v2181 = vrot.slane %v2030, %v2180
  %v2182 = vlaneseq
  %v2183 = vshrl.u32 %v2182, 7
  %v2184 = vsub.s32 0, %v2183
  %v2185 = vrot.slane %v2031, %v2184
  %v2186 = vlaneseq
  %v2187 = vshrl.u32 %v2186, 7
  %v2188 = vsub.s32 1, %v2187
  %v2189 = vrot.slane %v2031, %v2188
  %v2190 = vlaneseq
  %v2191 = vshrl.u32 %v2190, 7
  %v2192 = vsub.s32 2, %v2191
  %v2193 = vrot.slane %v2031, %v2192
  %v2194 = vlaneseq
  %v2195 = vshrl.u32 %v2194, 7
  %v2196 = vsub.s32 3, %v2195
  %v2197 = vrot.slane %v2031, %v2196
  %v2198 = vlaneseq
  %v2199 = vshrl.u32 %v2198, 7
  %v2200 = vsub.s32 4, %v2199
  %v2201 = vrot.slane %v2031, %v2200
  %v2202 = vlaneseq
  %v2203 = vshrl.u32 %v2202, 7
  %v2204 = vsub.s32 5, %v2203
  %v2205 = vrot.slane %v2031, %v2204
  %v2206 = vlaneseq
  %v2207 = vshrl.u32 %v2206, 7
  %v2208 = vsub.s32 6, %v2207
  %v2209 = vrot.slane %v2031, %v2208
  %v2210 = vlaneseq
  %v2211 = vshrl.u32 %v2210, 7
  %v2212 = vsub.s32 7, %v2211
  %v2213 = vrot.slane %v2031, %v2212
  %v2214 = vlaneseq
  %v2215 = vshrl.u32 %v2214, 7
  %v2216 = vsub.s32 0, %v2215
  %v2217 = vrot.slane %v2032, %v2216
  %v2218 = vlaneseq
  %v2219 = vshrl.u32 %v2218, 7
  %v2220 = vsub.s32 1, %v2219
  %v2221 = vrot.slane %v2032, %v2220
  %v2222 = vlaneseq
  %v2223 = vshrl.u32 %v2222, 7
  %v2224 = vsub.s32 2, %v2223
  %v2225 = vrot.slane %v2032, %v2224
  %v2226 = vlaneseq
  %v2227 = vshrl.u32 %v2226, 7
  %v2228 = vsub.s32 3, %v2227
  %v2229 = vrot.slane %v2032, %v2228
  %v2230 = vlaneseq
  %v2231 = vshrl.u32 %v2230, 7
  %v2232 = vsub.s32 4, %v2231
  %v2233 = vrot.slane %v2032, %v2232
  %v2234 = vlaneseq
  %v2235 = vshrl.u32 %v2234, 7
  %v2236 = vsub.s32 5, %v2235
  %v2237 = vrot.slane %v2032, %v2236
  %v2238 = vlaneseq
  %v2239 = vshrl.u32 %v2238, 7
  %v2240 = vsub.s32 6, %v2239
  %v2241 = vrot.slane %v2032, %v2240
  %v2242 = vlaneseq
  %v2243 = vshrl.u32 %v2242, 7
  %v2244 = vsub.s32 7, %v2243
  %v2245 = vrot.slane %v2032, %v2244
  %v2246 = vlaneseq
  %v2247 = vshrl.u32 %v2246, 7
  %v2248 = vsub.s32 0, %v2247
  %v2249 = vrot.slane %v2033, %v2248
  %v2250 = vlaneseq
  %v2251 = vshrl.u32 %v2250, 7
  %v2252 = vsub.s32 1, %v2251
  %v2253 = vrot.slane %v2033, %v2252
  %v2254 = vlaneseq
  %v2255 = vshrl.u32 %v2254, 7
  %v2256 = vsub.s32 2, %v2255
  %v2257 = vrot.slane %v2033, %v2256
  %v2312 = vmul.f32 %v864, %v2045
  %v2313 = vmul.f32 %v878, %v2049
  %v2314 = vmul.f32 %v886, %v2053
  %v2315 = vmul.f32 %v888, %v2057
  %v2316 = vmul.f32 %v871, %v2061
  %v2317 = vmul.f32 %v885, %v2065
  %v2318 = vmul.f32 %v887, %v2069
  %v2319 = vmul.f32 %v889, %v2073
  %v2320 = vmul.f32 %v913, %v2077
  %v2321 = vmul.f32 %v927, %v2081
  %v2322 = vmul.f32 %v935, %v2085
  %v2323 = vmul.f32 %v937, %v2089
  %v2324 = vmul.f32 %v920, %v2093
  %v2325 = vmul.f32 %v934, %v2097
  %v2326 = vmul.f32 %v936, %v2101
  %v2327 = vmul.f32 %v938, %v2105
  %v2328 = vmul.f32 %v962, %v2109
  %v2329 = vmul.f32 %v976, %v2113
  %v2330 = vmul.f32 %v984, %v2117
  %v2331 = vmul.f32 %v986, %v2121
  %v2332 = vmul.f32 %v969, %v2125
  %v2333 = vmul.f32 %v983, %v2129
  %v2334 = vmul.f32 %v985, %v2133
  %v2335 = vmul.f32 %v987, %v2137
  %v2336 = vmul.f32 %v1011, %v2141
  %v2337 = vmul.f32 %v1025, %v2145
  %v2338 = vmul.f32 %v1033, %v2149
  %v2339 = vmul.f32 %v1035, %v2153
  %v2340 = vmul.f32 %v1018, %v2157
  %v2341 = vmul.f32 %v1032, %v2161
  %v2342 = vmul.f32 %v1034, %v2165
  %v2343 = vmul.f32 %v1036, %v2169
  %v2344 = vmul.f32 %v1060, %v2173
  %v2345 = vmul.f32 %v1074, %v2177
  %v2346 = vmul.f32 %v1082, %v2181
  %v2347 = vmul.f32 %v1084, %v2185
  %v2348 = vmul.f32 %v1067, %v2189
  %v2349 = vmul.f32 %v1081, %v2193
  %v2350 = vmul.f32 %v1083, %v2197
  %v2351 = vmul.f32 %v1085, %v2201
  %v2352 = vmul.f32 %v1109, %v2205
  %v2353 = vmul.f32 %v1123, %v2209
  %v2354 = vmul.f32 %v1131, %v2213
  %v2355 = vmul.f32 %v1133, %v2217
  %v2356 = vmul.f32 %v1116, %v2221
  %v2357 = vmul.f32 %v1130, %v2225
  %v2358 = vmul.f32 %v1132, %v2229
  %v2359 = vmul.f32 %v1134, %v2233
  %v2360 = vmul.f32 %v1158, %v2237
  %v2361 = vmul.f32 %v1172, %v2241
  %v2362 = vmul.f32 %v1180, %v2245
  %v2363 = vmul.f32 %v1181, %v2249
  %v2364 = vmul.f32 %v1165, %v2253
  %v2365 = vmul.f32 %v1179, %v2257
  %v2393 = vcombine.low %v2312, %v2313
  %v2394 = vcombine.low %v2314, %v2315
  %v2395 = vcombine.low %v2316, %v2317
  %v2396 = vcombine.low %v2318, %v2319
  %v2398 = vunpack.c.l.s4 1966171168
  %v2399 = vunpack.c.0.s8 %v2398
  %v2400 = vlaneseq
  %v2401 = vshrl.u32 %v2400, 7
  %v2402 = vsub.s32 %v2399, %v2401
  %v2403 = vrot.slane %v2393, %v2402
  %v2405 = vunpack.c.l.s4 1966171168
  %v2406 = vunpack.c.0.s8 %v2405
  %v2407 = vlaneseq
  %v2408 = vshrl.u32 %v2407, 7
  %v2409 = vsub.s32 %v2406, %v2408
  %v2410 = vrot.slane %v2394, %v2409
  %v2412 = vunpack.c.l.s4 1966171168
  %v2413 = vunpack.c.0.s8 %v2412
  %v2414 = vlaneseq
  %v2415 = vshrl.u32 %v2414, 7
  %v2416 = vsub.s32 %v2413, %v2415
  %v2417 = vrot.slane %v2395, %v2416
  %v2419 = vunpack.c.l.s4 1966171168
  %v2420 = vunpack.c.0.s8 %v2419
  %v2421 = vlaneseq
  %v2422 = vshrl.u32 %v2421, 7
  %v2423 = vsub.s32 %v2420, %v2422
  %v2424 = vrot.slane %v2396, %v2423
  %v2425 = vcombine.low %v2403, %v2410
  %v2426 = vcombine.low %v2417, %v2424
  %v2428 = vunpack.c.l.s4 1966171168
  %v2429 = vunpack.c.0.s8 %v2428
  %v2430 = vlaneseq
  %v2431 = vshrl.u32 %v2430, 7
  %v2432 = vsub.s32 %v2429, %v2431
  %v2433 = vrot.slane %v2425, %v2432
  %v2435 = vunpack.c.l.s4 1966171168
  %v2436 = vunpack.c.0.s8 %v2435
  %v2437 = vlaneseq
  %v2438 = vshrl.u32 %v2437, 7
  %v2439 = vsub.s32 %v2436, %v2438
  %v2440 = vrot.slane %v2426, %v2439
  %v2441 = vcombine.low %v2433, %v2440
  %v2442 = vcombine.low %v2320, %v2321
  %v2443 = vcombine.low %v2322, %v2323
  %v2444 = vcombine.low %v2324, %v2325
  %v2445 = vcombine.low %v2326, %v2327
  %v2447 = vunpack.c.l.s4 1966171168
  %v2448 = vunpack.c.0.s8 %v2447
  %v2449 = vlaneseq
  %v2450 = vshrl.u32 %v2449, 7
  %v2451 = vsub.s32 %v2448, %v2450
  %v2452 = vrot.slane %v2442, %v2451
  %v2454 = vunpack.c.l.s4 1966171168
  %v2455 = vunpack.c.0.s8 %v2454
  %v2456 = vlaneseq
  %v2457 = vshrl.u32 %v2456, 7
  %v2458 = vsub.s32 %v2455, %v2457
  %v2459 = vrot.slane %v2443, %v2458
  %v2461 = vunpack.c.l.s4 1966171168
  %v2462 = vunpack.c.0.s8 %v2461
  %v2463 = vlaneseq
  %v2464 = vshrl.u32 %v2463, 7
  %v2465 = vsub.s32 %v2462, %v2464
  %v2466 = vrot.slane %v2444, %v2465
  %v2468 = vunpack.c.l.s4 1966171168
  %v2469 = vunpack.c.0.s8 %v2468
  %v2470 = vlaneseq
  %v2471 = vshrl.u32 %v2470, 7
  %v2472 = vsub.s32 %v2469, %v2471
  %v2473 = vrot.slane %v2445, %v2472
  %v2474 = vcombine.low %v2452, %v2459
  %v2475 = vcombine.low %v2466, %v2473
  %v2477 = vunpack.c.l.s4 1966171168
  %v2478 = vunpack.c.0.s8 %v2477
  %v2479 = vlaneseq
  %v2480 = vshrl.u32 %v2479, 7
  %v2481 = vsub.s32 %v2478, %v2480
  %v2482 = vrot.slane %v2474, %v2481
  %v2484 = vunpack.c.l.s4 1966171168
  %v2485 = vunpack.c.0.s8 %v2484
  %v2486 = vlaneseq
  %v2487 = vshrl.u32 %v2486, 7
  %v2488 = vsub.s32 %v2485, %v2487
  %v2489 = vrot.slane %v2475, %v2488
  %v2490 = vcombine.low %v2482, %v2489
  %v2491 = vcombine.low %v2328, %v2329
  %v2492 = vcombine.low %v2330, %v2331
  %v2493 = vcombine.low %v2332, %v2333
  %v2494 = vcombine.low %v2334, %v2335
  %v2496 = vunpack.c.l.s4 1966171168
  %v2497 = vunpack.c.0.s8 %v2496
  %v2498 = vlaneseq
  %v2499 = vshrl.u32 %v2498, 7
  %v2500 = vsub.s32 %v2497, %v2499
  %v2501 = vrot.slane %v2491, %v2500
  %v2503 = vunpack.c.l.s4 1966171168
  %v2504 = vunpack.c.0.s8 %v2503
  %v2505 = vlaneseq
  %v2506 = vshrl.u32 %v2505, 7
  %v2507 = vsub.s32 %v2504, %v2506
  %v2508 = vrot.slane %v2492, %v2507
  %v2510 = vunpack.c.l.s4 1966171168
  %v2511 = vunpack.c.0.s8 %v2510
  %v2512 = vlaneseq
  %v2513 = vshrl.u32 %v2512, 7
  %v2514 = vsub.s32 %v2511, %v2513
  %v2515 = vrot.slane %v2493, %v2514
  %v2517 = vunpack.c.l.s4 1966171168
  %v2518 = vunpack.c.0.s8 %v2517
  %v2519 = vlaneseq
  %v2520 = vshrl.u32 %v2519, 7
  %v2521 = vsub.s32 %v2518, %v2520
  %v2522 = vrot.slane %v2494, %v2521
  %v2523 = vcombine.low %v2501, %v2508
  %v2524 = vcombine.low %v2515, %v2522
  %v2526 = vunpack.c.l.s4 1966171168
  %v2527 = vunpack.c.0.s8 %v2526
  %v2528 = vlaneseq
  %v2529 = vshrl.u32 %v2528, 7
  %v2530 = vsub.s32 %v2527, %v2529
  %v2531 = vrot.slane %v2523, %v2530
  %v2533 = vunpack.c.l.s4 1966171168
  %v2534 = vunpack.c.0.s8 %v2533
  %v2535 = vlaneseq
  %v2536 = vshrl.u32 %v2535, 7
  %v2537 = vsub.s32 %v2534, %v2536
  %v2538 = vrot.slane %v2524, %v2537
  %v2539 = vcombine.low %v2531, %v2538
  %v2540 = vcombine.low %v2336, %v2337
  %v2542 = vunpack.c.l.s4 1966171168
  %v2543 = vunpack.c.0.s8 %v2542
  %v2544 = vlaneseq
  %v2545 = vshrl.u32 %v2544, 7
  %v2546 = vsub.s32 %v2543, %v2545
  %v2547 = vrot.slane %v2540, %v2546
  %v2549 = vunpack.c.l.s4 1966171168
  %v2550 = vunpack.c.0.s8 %v2549
  %v2551 = vlaneseq
  %v2552 = vshrl.u32 %v2551, 7
  %v2553 = vsub.s32 %v2550, %v2552
  %v2554 = vrot.slane %v2338, %v2553
  %v2555 = vcombine.low %v2547, %v2554
  %v2557 = vunpack.c.l.s4 1966171168
  %v2558 = vunpack.c.0.s8 %v2557
  %v2559 = vlaneseq
  %v2560 = vshrl.u32 %v2559, 7
  %v2561 = vsub.s32 %v2558, %v2560
  %v2562 = vrot.slane %v2555, %v2561
  %2563 = vrot.lane.b32.xlu0 %v2441, 96
  %v2564 = vpop.permute.xlu0 %2563
  %2565 = vrot.lane.b32.xlu0 %v2490, 96
  %v2566 = vpop.permute.xlu0 %2565
  %2567 = vrot.lane.b32.xlu0 %v2539, 96
  %v2568 = vpop.permute.xlu0 %2567
  %2569 = vrot.lane.b32.xlu0 %v2562, 96
  %v2570 = vpop.permute.xlu0 %2569
  %v2575 = vsel %vm1424, %v1994, 0
  %v2578 = vsel %vm1424, %v1995, 0
  %v2581 = vsel %vm1424, %v1996, 0
  %v2584 = vsel %vm1424, %v1997, 0
  %vm2586 = vcmask 1042432
  %v2587 = vsel %vm2586, %v2570, 0
  %2589 = vmatprep.subr.mxu0 0.0
  %2590 = vmatpush1.msra.mxu0 %v2564
  %2591 = vmatprep.subr.mxu0 0.0
  %2592 = vmatpush1.msra.mxu0 %v2566
  %2593 = vmatprep.subr.mxu0 0.0
  %2594 = vmatpush1.msra.mxu0 %v2568
  %2595 = vmatprep.subr.mxu0 0.0
  %2596 = vmatpush1.msra.mxu0 %v2587
  %2597 = vmatprep.subr.mxu0 0.0
  %2598 = vmatpush1.msra.mxu0 0.0
  %2599 = vmatprep.subr.mxu0 0.0
  %2600 = vmatpush1.msra.mxu0 0.0
  %2601 = vmatprep.subr.mxu0 0.0
  %2602 = vmatpush1.msra.mxu0 0.0
  %2603 = vmatprep.subr.mxu0 0.0
  %2604 = vmatpush1.msra.mxu0 0.0
  %2605 = vmatprep.subr.mxu0 0.0
  %2606 = vmatpush1.msra.mxu0 0.0
  %2607 = vmatprep.subr.mxu0 0.0
  %2608 = vmatpush1.msra.mxu0 0.0
  %2609 = vmatprep.subr.mxu0 0.0
  %2610 = vmatpush1.msra.mxu0 0.0
  %2611 = vmatprep.subr.mxu0 0.0
  %2612 = vmatpush1.msra.mxu0 0.0
  %2613 = vmatprep.subr.mxu0 0.0
  %2614 = vmatpush1.msra.mxu0 0.0
  %2615 = vmatprep.subr.mxu0 0.0
  %2616 = vmatpush1.msra.mxu0 0.0
  %2617 = vmatprep.subr.mxu0 0.0
  %2618 = vmatpush1.msra.mxu0 0.0
  %2619 = vmatprep.subr.mxu0 0.0
  %2620 = vmatpush1.msra.mxu0 0.0
  %2621 = vmatprep.subr.mxu0 0.0
  %2622 = vmatpush1.msra.mxu0 0.0
  %2623 = vmatprep.subr.mxu0 0.0
  %2624 = vmatpush1.msra.mxu0 0.0
  %2625 = vmatprep.subr.mxu0 0.0
  %2626 = vmatpush1.msra.mxu0 0.0
  %2627 = vmatprep.subr.mxu0 0.0
  %2628 = vmatpush1.msra.mxu0 0.0
  %2629 = vmatprep.subr.mxu0 0.0
  %2630 = vmatpush1.msra.mxu0 0.0
  %2631 = vmatprep.subr.mxu0 0.0
  %2632 = vmatpush1.msra.mxu0 0.0
  %2633 = vmatprep.subr.mxu0 0.0
  %2634 = vmatpush1.msra.mxu0 0.0
  %2635 = vmatprep.subr.mxu0 0.0
  %2636 = vmatpush1.msra.mxu0 0.0
  %2637 = vmatprep.subr.mxu0 0.0
  %2638 = vmatpush1.msra.mxu0 0.0
  %2639 = vmatprep.subr.mxu0 0.0
  %2640 = vmatpush1.msra.mxu0 0.0
  %2641 = vmatprep.subr.mxu0 0.0
  %2642 = vmatpush1.msra.mxu0 0.0
  %2643 = vmatprep.subr.mxu0 0.0
  %2644 = vmatpush1.msra.mxu0 0.0
  %2645 = vmatprep.subr.mxu0 0.0
  %2646 = vmatpush1.msra.mxu0 0.0
  %2647 = vmatprep.subr.mxu0 0.0
  %2648 = vmatpush1.msra.mxu0 0.0
  %2649 = vmatprep.subr.mxu0 0.0
  %2650 = vmatpush1.msra.mxu0 0.0
  %2651 = vmatprep.subr.mxu0 0.0
  %2652 = vmatpush1.msra.mxu0 0.0
  %2653 = vmatprep.mubr.f32.mxu0 0.0
  %2654 = vmatmul.mubr.f32.gmra.mrb[0].mxu0 %v2575
  %v2655 = vpop.f32.mrb[0].mxu0
  %v2656 = vadd.f32 0.0, %v2655
  %v2657 = vpop.f32.mrb[0].mxu0
  %2658 = vmatprep.mubr.f32.mxu0 0.0
  %2659 = vmatmul.mubr.f32.gmra.mrb[0].mxu0 %v2578
  %v2660 = vpop.f32.mrb[0].mxu0
  %v2661 = vadd.f32 0.0, %v2660
  %v2662 = vpop.f32.mrb[0].mxu0
  %2663 = vmatprep.mubr.f32.mxu0 0.0
  %2664 = vmatmul.mubr.f32.gmra.mrb[0].mxu0 %v2581
  %v2665 = vpop.f32.mrb[0].mxu0
  %v2666 = vadd.f32 0.0, %v2665
  %v2667 = vpop.f32.mrb[0].mxu0
  %2668 = vmatprep.mubr.f32.mxu0 0.0
  %2669 = vmatmul.mubr.f32.gmra.mrb[0].mxu0 %v2584
  %v2670 = vpop.f32.mrb[0].mxu0
  %v2671 = vadd.f32 0.0, %v2670
  %v2672 = vpop.f32.mrb[0].mxu0
  %2673 = vdwg.mxu0
  %v2701 = vcombine.low %v2339, %v2340
  %v2702 = vcombine.low %v2341, %v2342
  %v2703 = vcombine.low %v2343, %v2344
  %v2704 = vcombine.low %v2345, %v2346
  %v2706 = vunpack.c.l.s4 1966171168
  %v2707 = vunpack.c.0.s8 %v2706
  %v2708 = vlaneseq
  %v2709 = vshrl.u32 %v2708, 7
  %v2710 = vsub.s32 %v2707, %v2709
  %v2711 = vrot.slane %v2701, %v2710
  %v2713 = vunpack.c.l.s4 1966171168
  %v2714 = vunpack.c.0.s8 %v2713
  %v2715 = vlaneseq
  %v2716 = vshrl.u32 %v2715, 7
  %v2717 = vsub.s32 %v2714, %v2716
  %v2718 = vrot.slane %v2702, %v2717
  %v2720 = vunpack.c.l.s4 1966171168
  %v2721 = vunpack.c.0.s8 %v2720
  %v2722 = vlaneseq
  %v2723 = vshrl.u32 %v2722, 7
  %v2724 = vsub.s32 %v2721, %v2723
  %v2725 = vrot.slane %v2703, %v2724
  %v2727 = vunpack.c.l.s4 1966171168
  %v2728 = vunpack.c.0.s8 %v2727
  %v2729 = vlaneseq
  %v2730 = vshrl.u32 %v2729, 7
  %v2731 = vsub.s32 %v2728, %v2730
  %v2732 = vrot.slane %v2704, %v2731
  %v2733 = vcombine.low %v2711, %v2718
  %v2734 = vcombine.low %v2725, %v2732
  %v2736 = vunpack.c.l.s4 1966171168
  %v2737 = vunpack.c.0.s8 %v2736
  %v2738 = vlaneseq
  %v2739 = vshrl.u32 %v2738, 7
  %v2740 = vsub.s32 %v2737, %v2739
  %v2741 = vrot.slane %v2733, %v2740
  %v2743 = vunpack.c.l.s4 1966171168
  %v2744 = vunpack.c.0.s8 %v2743
  %v2745 = vlaneseq
  %v2746 = vshrl.u32 %v2745, 7
  %v2747 = vsub.s32 %v2744, %v2746
  %v2748 = vrot.slane %v2734, %v2747
  %v2749 = vcombine.low %v2741, %v2748
  %v2750 = vcombine.low %v2347, %v2348
  %v2751 = vcombine.low %v2349, %v2350
  %v2752 = vcombine.low %v2351, %v2352
  %v2753 = vcombine.low %v2353, %v2354
  %v2755 = vunpack.c.l.s4 1966171168
  %v2756 = vunpack.c.0.s8 %v2755
  %v2757 = vlaneseq
  %v2758 = vshrl.u32 %v2757, 7
  %v2759 = vsub.s32 %v2756, %v2758
  %v2760 = vrot.slane %v2750, %v2759
  %v2762 = vunpack.c.l.s4 1966171168
  %v2763 = vunpack.c.0.s8 %v2762
  %v2764 = vlaneseq
  %v2765 = vshrl.u32 %v2764, 7
  %v2766 = vsub.s32 %v2763, %v2765
  %v2767 = vrot.slane %v2751, %v2766
  %v2769 = vunpack.c.l.s4 1966171168
  %v2770 = vunpack.c.0.s8 %v2769
  %v2771 = vlaneseq
  %v2772 = vshrl.u32 %v2771, 7
  %v2773 = vsub.s32 %v2770, %v2772
  %v2774 = vrot.slane %v2752, %v2773
  %v2776 = vunpack.c.l.s4 1966171168
  %v2777 = vunpack.c.0.s8 %v2776
  %v2778 = vlaneseq
  %v2779 = vshrl.u32 %v2778, 7
  %v2780 = vsub.s32 %v2777, %v2779
  %v2781 = vrot.slane %v2753, %v2780
  %v2782 = vcombine.low %v2760, %v2767
  %v2783 = vcombine.low %v2774, %v2781
  %v2785 = vunpack.c.l.s4 1966171168
  %v2786 = vunpack.c.0.s8 %v2785
  %v2787 = vlaneseq
  %v2788 = vshrl.u32 %v2787, 7
  %v2789 = vsub.s32 %v2786, %v2788
  %v2790 = vrot.slane %v2782, %v2789
  %v2792 = vunpack.c.l.s4 1966171168
  %v2793 = vunpack.c.0.s8 %v2792
  %v2794 = vlaneseq
  %v2795 = vshrl.u32 %v2794, 7
  %v2796 = vsub.s32 %v2793, %v2795
  %v2797 = vrot.slane %v2783, %v2796
  %v2798 = vcombine.low %v2790, %v2797
  %v2799 = vcombine.low %v2355, %v2356
  %v2800 = vcombine.low %v2357, %v2358
  %v2801 = vcombine.low %v2359, %v2360
  %v2802 = vcombine.low %v2361, %v2362
  %v2804 = vunpack.c.l.s4 1966171168
  %v2805 = vunpack.c.0.s8 %v2804
  %v2806 = vlaneseq
  %v2807 = vshrl.u32 %v2806, 7
  %v2808 = vsub.s32 %v2805, %v2807
  %v2809 = vrot.slane %v2799, %v2808
  %v2811 = vunpack.c.l.s4 1966171168
  %v2812 = vunpack.c.0.s8 %v2811
  %v2813 = vlaneseq
  %v2814 = vshrl.u32 %v2813, 7
  %v2815 = vsub.s32 %v2812, %v2814
  %v2816 = vrot.slane %v2800, %v2815
  %v2818 = vunpack.c.l.s4 1966171168
  %v2819 = vunpack.c.0.s8 %v2818
  %v2820 = vlaneseq
  %v2821 = vshrl.u32 %v2820, 7
  %v2822 = vsub.s32 %v2819, %v2821
  %v2823 = vrot.slane %v2801, %v2822
  %v2825 = vunpack.c.l.s4 1966171168
  %v2826 = vunpack.c.0.s8 %v2825
  %v2827 = vlaneseq
  %v2828 = vshrl.u32 %v2827, 7
  %v2829 = vsub.s32 %v2826, %v2828
  %v2830 = vrot.slane %v2802, %v2829
  %v2831 = vcombine.low %v2809, %v2816
  %v2832 = vcombine.low %v2823, %v2830
  %v2834 = vunpack.c.l.s4 1966171168
  %v2835 = vunpack.c.0.s8 %v2834
  %v2836 = vlaneseq
  %v2837 = vshrl.u32 %v2836, 7
  %v2838 = vsub.s32 %v2835, %v2837
  %v2839 = vrot.slane %v2831, %v2838
  %v2841 = vunpack.c.l.s4 1966171168
  %v2842 = vunpack.c.0.s8 %v2841
  %v2843 = vlaneseq
  %v2844 = vshrl.u32 %v2843, 7
  %v2845 = vsub.s32 %v2842, %v2844
  %v2846 = vrot.slane %v2832, %v2845
  %v2847 = vcombine.low %v2839, %v2846
  %v2848 = vcombine.low %v2363, %v2364
  %v2850 = vunpack.c.l.s4 1966171168
  %v2851 = vunpack.c.0.s8 %v2850
  %v2852 = vlaneseq
  %v2853 = vshrl.u32 %v2852, 7
  %v2854 = vsub.s32 %v2851, %v2853
  %v2855 = vrot.slane %v2848, %v2854
  %v2857 = vunpack.c.l.s4 1966171168
  %v2858 = vunpack.c.0.s8 %v2857
  %v2859 = vlaneseq
  %v2860 = vshrl.u32 %v2859, 7
  %v2861 = vsub.s32 %v2858, %v2860
  %v2862 = vrot.slane %v2365, %v2861
  %v2863 = vcombine.low %v2855, %v2862
  %v2865 = vunpack.c.l.s4 1966171168
  %v2866 = vunpack.c.0.s8 %v2865
  %v2867 = vlaneseq
  %v2868 = vshrl.u32 %v2867, 7
  %v2869 = vsub.s32 %v2866, %v2868
  %v2870 = vrot.slane %v2863, %v2869
  %2871 = vrot.lane.b32.xlu0 %v2749, 96
  %v2872 = vpop.permute.xlu0 %2871
  %2873 = vrot.lane.b32.xlu0 %v2798, 96
  %v2874 = vpop.permute.xlu0 %2873
  %2875 = vrot.lane.b32.xlu0 %v2847, 96
  %v2876 = vpop.permute.xlu0 %2875
  %2877 = vrot.lane.b32.xlu0 %v2870, 96
  %v2878 = vpop.permute.xlu0 %2877
  %v2883 = vsel %vm1424, %v1998, 0
  %v2886 = vsel %vm1424, %v1999, 0
  %v2889 = vsel %vm1424, %v2000, 0
  %v2892 = vsel %vm1424, %v2001, 0
  %v2894 = vsel %vm2586, %v2878, 0
  %2896 = vmatprep.subr.mxu0 0.0
  %2897 = vmatpush1.msra.mxu0 %v2872
  %2898 = vmatprep.subr.mxu0 0.0
  %2899 = vmatpush1.msra.mxu0 %v2874
  %2900 = vmatprep.subr.mxu0 0.0
  %2901 = vmatpush1.msra.mxu0 %v2876
  %2902 = vmatprep.subr.mxu0 0.0
  %2903 = vmatpush1.msra.mxu0 %v2894
  %2904 = vmatprep.subr.mxu0 0.0
  %2905 = vmatpush1.msra.mxu0 0.0
  %2906 = vmatprep.subr.mxu0 0.0
  %2907 = vmatpush1.msra.mxu0 0.0
  %2908 = vmatprep.subr.mxu0 0.0
  %2909 = vmatpush1.msra.mxu0 0.0
  %2910 = vmatprep.subr.mxu0 0.0
  %2911 = vmatpush1.msra.mxu0 0.0
  %2912 = vmatprep.subr.mxu0 0.0
  %2913 = vmatpush1.msra.mxu0 0.0
  %2914 = vmatprep.subr.mxu0 0.0
  %2915 = vmatpush1.msra.mxu0 0.0
  %2916 = vmatprep.subr.mxu0 0.0
  %2917 = vmatpush1.msra.mxu0 0.0
  %2918 = vmatprep.subr.mxu0 0.0
  %2919 = vmatpush1.msra.mxu0 0.0
  %2920 = vmatprep.subr.mxu0 0.0
  %2921 = vmatpush1.msra.mxu0 0.0
  %2922 = vmatprep.subr.mxu0 0.0
  %2923 = vmatpush1.msra.mxu0 0.0
  %2924 = vmatprep.subr.mxu0 0.0
  %2925 = vmatpush1.msra.mxu0 0.0
  %2926 = vmatprep.subr.mxu0 0.0
  %2927 = vmatpush1.msra.mxu0 0.0
  %2928 = vmatprep.subr.mxu0 0.0
  %2929 = vmatpush1.msra.mxu0 0.0
  %2930 = vmatprep.subr.mxu0 0.0
  %2931 = vmatpush1.msra.mxu0 0.0
  %2932 = vmatprep.subr.mxu0 0.0
  %2933 = vmatpush1.msra.mxu0 0.0
  %2934 = vmatprep.subr.mxu0 0.0
  %2935 = vmatpush1.msra.mxu0 0.0
  %2936 = vmatprep.subr.mxu0 0.0
  %2937 = vmatpush1.msra.mxu0 0.0
  %2938 = vmatprep.subr.mxu0 0.0
  %2939 = vmatpush1.msra.mxu0 0.0
  %2940 = vmatprep.subr.mxu0 0.0
  %2941 = vmatpush1.msra.mxu0 0.0
  %2942 = vmatprep.subr.mxu0 0.0
  %2943 = vmatpush1.msra.mxu0 0.0
  %2944 = vmatprep.subr.mxu0 0.0
  %2945 = vmatpush1.msra.mxu0 0.0
  %2946 = vmatprep.subr.mxu0 0.0
  %2947 = vmatpush1.msra.mxu0 0.0
  %2948 = vmatprep.subr.mxu0 0.0
  %2949 = vmatpush1.msra.mxu0 0.0
  %2950 = vmatprep.subr.mxu0 0.0
  %2951 = vmatpush1.msra.mxu0 0.0
  %2952 = vmatprep.subr.mxu0 0.0
  %2953 = vmatpush1.msra.mxu0 0.0
  %2954 = vmatprep.subr.mxu0 0.0
  %2955 = vmatpush1.msra.mxu0 0.0
  %2956 = vmatprep.subr.mxu0 0.0
  %2957 = vmatpush1.msra.mxu0 0.0
  %2958 = vmatprep.subr.mxu0 0.0
  %2959 = vmatpush1.msra.mxu0 0.0
  %2960 = vmatprep.mubr.f32.mxu0 0.0
  %2961 = vmatmul.mubr.f32.gmra.mrb[0].mxu0 %v2883
  %v2962 = vpop.f32.mrb[0].mxu0
  %v2963 = vadd.f32 0.0, %v2962
  %v2964 = vpop.f32.mrb[0].mxu0
  %2965 = vmatprep.mubr.f32.mxu0 0.0
  %2966 = vmatmul.mubr.f32.gmra.mrb[0].mxu0 %v2886
  %v2967 = vpop.f32.mrb[0].mxu0
  %v2968 = vadd.f32 0.0, %v2967
  %v2969 = vpop.f32.mrb[0].mxu0
  %2970 = vmatprep.mubr.f32.mxu0 0.0
  %2971 = vmatmul.mubr.f32.gmra.mrb[0].mxu0 %v2889
  %v2972 = vpop.f32.mrb[0].mxu0
  %v2973 = vadd.f32 0.0, %v2972
  %v2974 = vpop.f32.mrb[0].mxu0
  %2975 = vmatprep.mubr.f32.mxu0 0.0
  %2976 = vmatmul.mubr.f32.gmra.mrb[0].mxu0 %v2892
  %v2977 = vpop.f32.mrb[0].mxu0
  %v2978 = vadd.f32 0.0, %v2977
  %v2979 = vpop.f32.mrb[0].mxu0
  %2980 = vdwg.mxu0
  %v2981 = vmul.f32 %v2656, %v2026
  %v2982 = vmul.f32 %v2661, %v2027
  %v2983 = vmul.f32 %v2666, %v2028
  %v2984 = vmul.f32 %v2671, %v2029
  %v2985 = vmul.f32 %v2963, %v2030
  %v2986 = vmul.f32 %v2968, %v2031
  %v2987 = vmul.f32 %v2973, %v2032
  %v2988 = vmul.f32 %v2978, %v2033
  %v2989 = vcombine.low %v864, %v878
  %v2990 = vcombine.low %v886, %v888
  %v2991 = vcombine.low %v871, %v885
  %v2992 = vcombine.low %v887, %v889
  %v2994 = vunpack.c.l.s4 1966171168
  %v2995 = vunpack.c.0.s8 %v2994
  %v2996 = vlaneseq
  %v2997 = vshrl.u32 %v2996, 7
  %v2998 = vsub.s32 %v2995, %v2997
  %v2999 = vrot.slane %v2989, %v2998
  %v3001 = vunpack.c.l.s4 1966171168
  %v3002 = vunpack.c.0.s8 %v3001
  %v3003 = vlaneseq
  %v3004 = vshrl.u32 %v3003, 7
  %v3005 = vsub.s32 %v3002, %v3004
  %v3006 = vrot.slane %v2990, %v3005
  %v3008 = vunpack.c.l.s4 1966171168
  %v3009 = vunpack.c.0.s8 %v3008
  %v3010 = vlaneseq
  %v3011 = vshrl.u32 %v3010, 7
  %v3012 = vsub.s32 %v3009, %v3011
  %v3013 = vrot.slane %v2991, %v3012
  %v3015 = vunpack.c.l.s4 1966171168
  %v3016 = vunpack.c.0.s8 %v3015
  %v3017 = vlaneseq
  %v3018 = vshrl.u32 %v3017, 7
  %v3019 = vsub.s32 %v3016, %v3018
  %v3020 = vrot.slane %v2992, %v3019
  %v3021 = vcombine.low %v2999, %v3006
  %v3022 = vcombine.low %v3013, %v3020
  %v3024 = vunpack.c.l.s4 1966171168
  %v3025 = vunpack.c.0.s8 %v3024
  %v3026 = vlaneseq
  %v3027 = vshrl.u32 %v3026, 7
  %v3028 = vsub.s32 %v3025, %v3027
  %v3029 = vrot.slane %v3021, %v3028
  %v3031 = vunpack.c.l.s4 1966171168
  %v3032 = vunpack.c.0.s8 %v3031
  %v3033 = vlaneseq
  %v3034 = vshrl.u32 %v3033, 7
  %v3035 = vsub.s32 %v3032, %v3034
  %v3036 = vrot.slane %v3022, %v3035
  %v3037 = vcombine.low %v3029, %v3036
  %v3038 = vcombine.low %v913, %v927
  %v3039 = vcombine.low %v935, %v937
  %v3040 = vcombine.low %v920, %v934
  %v3041 = vcombine.low %v936, %v938
  %v3043 = vunpack.c.l.s4 1966171168
  %v3044 = vunpack.c.0.s8 %v3043
  %v3045 = vlaneseq
  %v3046 = vshrl.u32 %v3045, 7
  %v3047 = vsub.s32 %v3044, %v3046
  %v3048 = vrot.slane %v3038, %v3047
  %v3050 = vunpack.c.l.s4 1966171168
  %v3051 = vunpack.c.0.s8 %v3050
  %v3052 = vlaneseq
  %v3053 = vshrl.u32 %v3052, 7
  %v3054 = vsub.s32 %v3051, %v3053
  %v3055 = vrot.slane %v3039, %v3054
  %v3057 = vunpack.c.l.s4 1966171168
  %v3058 = vunpack.c.0.s8 %v3057
  %v3059 = vlaneseq
  %v3060 = vshrl.u32 %v3059, 7
  %v3061 = vsub.s32 %v3058, %v3060
  %v3062 = vrot.slane %v3040, %v3061
  %v3064 = vunpack.c.l.s4 1966171168
  %v3065 = vunpack.c.0.s8 %v3064
  %v3066 = vlaneseq
  %v3067 = vshrl.u32 %v3066, 7
  %v3068 = vsub.s32 %v3065, %v3067
  %v3069 = vrot.slane %v3041, %v3068
  %v3070 = vcombine.low %v3048, %v3055
  %v3071 = vcombine.low %v3062, %v3069
  %v3073 = vunpack.c.l.s4 1966171168
  %v3074 = vunpack.c.0.s8 %v3073
  %v3075 = vlaneseq
  %v3076 = vshrl.u32 %v3075, 7
  %v3077 = vsub.s32 %v3074, %v3076
  %v3078 = vrot.slane %v3070, %v3077
  %v3080 = vunpack.c.l.s4 1966171168
  %v3081 = vunpack.c.0.s8 %v3080
  %v3082 = vlaneseq
  %v3083 = vshrl.u32 %v3082, 7
  %v3084 = vsub.s32 %v3081, %v3083
  %v3085 = vrot.slane %v3071, %v3084
  %v3086 = vcombine.low %v3078, %v3085
  %v3087 = vcombine.low %v962, %v976
  %v3088 = vcombine.low %v984, %v986
  %v3089 = vcombine.low %v969, %v983
  %v3090 = vcombine.low %v985, %v987
  %v3092 = vunpack.c.l.s4 1966171168
  %v3093 = vunpack.c.0.s8 %v3092
  %v3094 = vlaneseq
  %v3095 = vshrl.u32 %v3094, 7
  %v3096 = vsub.s32 %v3093, %v3095
  %v3097 = vrot.slane %v3087, %v3096
  %v3099 = vunpack.c.l.s4 1966171168
  %v3100 = vunpack.c.0.s8 %v3099
  %v3101 = vlaneseq
  %v3102 = vshrl.u32 %v3101, 7
  %v3103 = vsub.s32 %v3100, %v3102
  %v3104 = vrot.slane %v3088, %v3103
  %v3106 = vunpack.c.l.s4 1966171168
  %v3107 = vunpack.c.0.s8 %v3106
  %v3108 = vlaneseq
  %v3109 = vshrl.u32 %v3108, 7
  %v3110 = vsub.s32 %v3107, %v3109
  %v3111 = vrot.slane %v3089, %v3110
  %v3113 = vunpack.c.l.s4 1966171168
  %v3114 = vunpack.c.0.s8 %v3113
  %v3115 = vlaneseq
  %v3116 = vshrl.u32 %v3115, 7
  %v3117 = vsub.s32 %v3114, %v3116
  %v3118 = vrot.slane %v3090, %v3117
  %v3119 = vcombine.low %v3097, %v3104
  %v3120 = vcombine.low %v3111, %v3118
  %v3122 = vunpack.c.l.s4 1966171168
  %v3123 = vunpack.c.0.s8 %v3122
  %v3124 = vlaneseq
  %v3125 = vshrl.u32 %v3124, 7
  %v3126 = vsub.s32 %v3123, %v3125
  %v3127 = vrot.slane %v3119, %v3126
  %v3129 = vunpack.c.l.s4 1966171168
  %v3130 = vunpack.c.0.s8 %v3129
  %v3131 = vlaneseq
  %v3132 = vshrl.u32 %v3131, 7
  %v3133 = vsub.s32 %v3130, %v3132
  %v3134 = vrot.slane %v3120, %v3133
  %v3135 = vcombine.low %v3127, %v3134
  %v3136 = vcombine.low %v1011, %v1025
  %v3138 = vunpack.c.l.s4 1966171168
  %v3139 = vunpack.c.0.s8 %v3138
  %v3140 = vlaneseq
  %v3141 = vshrl.u32 %v3140, 7
  %v3142 = vsub.s32 %v3139, %v3141
  %v3143 = vrot.slane %v3136, %v3142
  %v3145 = vunpack.c.l.s4 1966171168
  %v3146 = vunpack.c.0.s8 %v3145
  %v3147 = vlaneseq
  %v3148 = vshrl.u32 %v3147, 7
  %v3149 = vsub.s32 %v3146, %v3148
  %v3150 = vrot.slane %v1033, %v3149
  %v3151 = vcombine.low %v3143, %v3150
  %v3153 = vunpack.c.l.s4 1966171168
  %v3154 = vunpack.c.0.s8 %v3153
  %v3155 = vlaneseq
  %v3156 = vshrl.u32 %v3155, 7
  %v3157 = vsub.s32 %v3154, %v3156
  %v3158 = vrot.slane %v3151, %v3157
  %v3159 = vcombine.low %v1035, %v1018
  %v3160 = vcombine.low %v1032, %v1034
  %v3161 = vcombine.low %v1036, %v1060
  %v3162 = vcombine.low %v1074, %v1082
  %v3164 = vunpack.c.l.s4 1966171168
  %v3165 = vunpack.c.0.s8 %v3164
  %v3166 = vlaneseq
  %v3167 = vshrl.u32 %v3166, 7
  %v3168 = vsub.s32 %v3165, %v3167
  %v3169 = vrot.slane %v3159, %v3168
  %v3171 = vunpack.c.l.s4 1966171168
  %v3172 = vunpack.c.0.s8 %v3171
  %v3173 = vlaneseq
  %v3174 = vshrl.u32 %v3173, 7
  %v3175 = vsub.s32 %v3172, %v3174
  %v3176 = vrot.slane %v3160, %v3175
  %v3178 = vunpack.c.l.s4 1966171168
  %v3179 = vunpack.c.0.s8 %v3178
  %v3180 = vlaneseq
  %v3181 = vshrl.u32 %v3180, 7
  %v3182 = vsub.s32 %v3179, %v3181
  %v3183 = vrot.slane %v3161, %v3182
  %v3185 = vunpack.c.l.s4 1966171168
  %v3186 = vunpack.c.0.s8 %v3185
  %v3187 = vlaneseq
  %v3188 = vshrl.u32 %v3187, 7
  %v3189 = vsub.s32 %v3186, %v3188
  %v3190 = vrot.slane %v3162, %v3189
  %v3191 = vcombine.low %v3169, %v3176
  %v3192 = vcombine.low %v3183, %v3190
  %v3194 = vunpack.c.l.s4 1966171168
  %v3195 = vunpack.c.0.s8 %v3194
  %v3196 = vlaneseq
  %v3197 = vshrl.u32 %v3196, 7
  %v3198 = vsub.s32 %v3195, %v3197
  %v3199 = vrot.slane %v3191, %v3198
  %v3201 = vunpack.c.l.s4 1966171168
  %v3202 = vunpack.c.0.s8 %v3201
  %v3203 = vlaneseq
  %v3204 = vshrl.u32 %v3203, 7
  %v3205 = vsub.s32 %v3202, %v3204
  %v3206 = vrot.slane %v3192, %v3205
  %v3207 = vcombine.low %v3199, %v3206
  %v3208 = vcombine.low %v1084, %v1067
  %v3209 = vcombine.low %v1081, %v1083
  %v3210 = vcombine.low %v1085, %v1109
  %v3211 = vcombine.low %v1123, %v1131
  %v3213 = vunpack.c.l.s4 1966171168
  %v3214 = vunpack.c.0.s8 %v3213
  %v3215 = vlaneseq
  %v3216 = vshrl.u32 %v3215, 7
  %v3217 = vsub.s32 %v3214, %v3216
  %v3218 = vrot.slane %v3208, %v3217
  %v3220 = vunpack.c.l.s4 1966171168
  %v3221 = vunpack.c.0.s8 %v3220
  %v3222 = vlaneseq
  %v3223 = vshrl.u32 %v3222, 7
  %v3224 = vsub.s32 %v3221, %v3223
  %v3225 = vrot.slane %v3209, %v3224
  %v3227 = vunpack.c.l.s4 1966171168
  %v3228 = vunpack.c.0.s8 %v3227
  %v3229 = vlaneseq
  %v3230 = vshrl.u32 %v3229, 7
  %v3231 = vsub.s32 %v3228, %v3230
  %v3232 = vrot.slane %v3210, %v3231
  %v3234 = vunpack.c.l.s4 1966171168
  %v3235 = vunpack.c.0.s8 %v3234
  %v3236 = vlaneseq
  %v3237 = vshrl.u32 %v3236, 7
  %v3238 = vsub.s32 %v3235, %v3237
  %v3239 = vrot.slane %v3211, %v3238
  %v3240 = vcombine.low %v3218, %v3225
  %v3241 = vcombine.low %v3232, %v3239
  %v3243 = vunpack.c.l.s4 1966171168
  %v3244 = vunpack.c.0.s8 %v3243
  %v3245 = vlaneseq
  %v3246 = vshrl.u32 %v3245, 7
  %v3247 = vsub.s32 %v3244, %v3246
  %v3248 = vrot.slane %v3240, %v3247
  %v3250 = vunpack.c.l.s4 1966171168
  %v3251 = vunpack.c.0.s8 %v3250
  %v3252 = vlaneseq
  %v3253 = vshrl.u32 %v3252, 7
  %v3254 = vsub.s32 %v3251, %v3253
  %v3255 = vrot.slane %v3241, %v3254
  %v3256 = vcombine.low %v3248, %v3255
  %v3257 = vcombine.low %v1133, %v1116
  %v3258 = vcombine.low %v1130, %v1132
  %v3259 = vcombine.low %v1134, %v1158
  %v3260 = vcombine.low %v1172, %v1180
  %v3262 = vunpack.c.l.s4 1966171168
  %v3263 = vunpack.c.0.s8 %v3262
  %v3264 = vlaneseq
  %v3265 = vshrl.u32 %v3264, 7
  %v3266 = vsub.s32 %v3263, %v3265
  %v3267 = vrot.slane %v3257, %v3266
  %v3269 = vunpack.c.l.s4 1966171168
  %v3270 = vunpack.c.0.s8 %v3269
  %v3271 = vlaneseq
  %v3272 = vshrl.u32 %v3271, 7
  %v3273 = vsub.s32 %v3270, %v3272
  %v3274 = vrot.slane %v3258, %v3273
  %v3276 = vunpack.c.l.s4 1966171168
  %v3277 = vunpack.c.0.s8 %v3276
  %v3278 = vlaneseq
  %v3279 = vshrl.u32 %v3278, 7
  %v3280 = vsub.s32 %v3277, %v3279
  %v3281 = vrot.slane %v3259, %v3280
  %v3283 = vunpack.c.l.s4 1966171168
  %v3284 = vunpack.c.0.s8 %v3283
  %v3285 = vlaneseq
  %v3286 = vshrl.u32 %v3285, 7
  %v3287 = vsub.s32 %v3284, %v3286
  %v3288 = vrot.slane %v3260, %v3287
  %v3289 = vcombine.low %v3267, %v3274
  %v3290 = vcombine.low %v3281, %v3288
  %v3292 = vunpack.c.l.s4 1966171168
  %v3293 = vunpack.c.0.s8 %v3292
  %v3294 = vlaneseq
  %v3295 = vshrl.u32 %v3294, 7
  %v3296 = vsub.s32 %v3293, %v3295
  %v3297 = vrot.slane %v3289, %v3296
  %v3299 = vunpack.c.l.s4 1966171168
  %v3300 = vunpack.c.0.s8 %v3299
  %v3301 = vlaneseq
  %v3302 = vshrl.u32 %v3301, 7
  %v3303 = vsub.s32 %v3300, %v3302
  %v3304 = vrot.slane %v3290, %v3303
  %v3305 = vcombine.low %v3297, %v3304
  %v3306 = vcombine.low %v1181, %v1165
  %v3308 = vunpack.c.l.s4 1966171168
  %v3309 = vunpack.c.0.s8 %v3308
  %v3310 = vlaneseq
  %v3311 = vshrl.u32 %v3310, 7
  %v3312 = vsub.s32 %v3309, %v3311
  %v3313 = vrot.slane %v3306, %v3312
  %v3315 = vunpack.c.l.s4 1966171168
  %v3316 = vunpack.c.0.s8 %v3315
  %v3317 = vlaneseq
  %v3318 = vshrl.u32 %v3317, 7
  %v3319 = vsub.s32 %v3316, %v3318
  %v3320 = vrot.slane %v1179, %v3319
  %v3321 = vcombine.low %v3313, %v3320
  %v3323 = vunpack.c.l.s4 1966171168
  %v3324 = vunpack.c.0.s8 %v3323
  %v3325 = vlaneseq
  %v3326 = vshrl.u32 %v3325, 7
  %v3327 = vsub.s32 %v3324, %v3326
  %v3328 = vrot.slane %v3321, %v3327
  %v3337 = vadd.f32 %v2981, %v3037
  %v3338 = vadd.f32 %v2982, %v3086
  %v3339 = vadd.f32 %v2983, %v3135
  %v3340 = vadd.f32 %v2984, %v3158
  %v3341 = vadd.f32 %v2985, %v3207
  %v3342 = vadd.f32 %v2986, %v3256
  %v3343 = vadd.f32 %v2987, %v3305
  %v3344 = vadd.f32 %v2988, %v3328
  %v3345 = vld [vmem:[%s3] sm:$0xff]
  %v3346 = vld [vmem:[%s3 + $0x8] sm:$0xff]
  %v3347 = vld [vmem:[%s3 + $0x10] sm:$0xff]
  %v3348 = vld [vmem:[%s3 + $0x18] sm:$0x7]
  %3350 = vset.pattern.permute.xlu0 0
  %3351 = vperm.xlu0 %3350, %v3345
  %v3352 = vpop.permute.xlu0 %3351
  %3355 = vset.pattern.permute.xlu0 0
  %3356 = vperm.xlu0 %3355, %v3346
  %v3357 = vpop.permute.xlu0 %3356
  %3360 = vset.pattern.permute.xlu0 0
  %3361 = vperm.xlu0 %3360, %v3347
  %v3362 = vpop.permute.xlu0 %3361
  %3365 = vset.pattern.permute.xlu0 0
  %3366 = vperm.xlu0 %3365, %v3348
  %v3367 = vpop.permute.xlu0 %3366
  %v3369 = vmul.f32 %v3337, %v3352
  %v3370 = vmul.f32 %v3338, %v3357
  %v3371 = vmul.f32 %v3339, %v3362
  %v3372 = vmul.f32 %v3340, %v3367
  %v3373 = vmul.f32 %v3341, %v3352
  %v3374 = vmul.f32 %v3342, %v3357
  %v3375 = vmul.f32 %v3343, %v3362
  %v3376 = vmul.f32 %v3344, %v3367
  %v3377 = vld [vmem:[%s4] sm:$0xff]
  %v3378 = vld [vmem:[%s4 + $0x8] sm:$0xff]
  %v3379 = vld [vmem:[%s4 + $0x10] sm:$0xff]
  %v3380 = vld [vmem:[%s4 + $0x18] sm:$0x7]
  %3382 = vset.pattern.permute.xlu0 0
  %3383 = vperm.xlu0 %3382, %v3377
  %v3384 = vpop.permute.xlu0 %3383
  %3387 = vset.pattern.permute.xlu0 0
  %3388 = vperm.xlu0 %3387, %v3378
  %v3389 = vpop.permute.xlu0 %3388
  %3392 = vset.pattern.permute.xlu0 0
  %3393 = vperm.xlu0 %3392, %v3379
  %v3394 = vpop.permute.xlu0 %3393
  %3397 = vset.pattern.permute.xlu0 0
  %3398 = vperm.xlu0 %3397, %v3380
  %v3399 = vpop.permute.xlu0 %3398
  %v3401 = vadd.f32 %v3369, %v3384
  %v3402 = vadd.f32 %v3370, %v3389
  %v3403 = vadd.f32 %v3371, %v3394
  %v3404 = vadd.f32 %v3372, %v3399
  %v3405 = vadd.f32 %v3373, %v3384
  %v3406 = vadd.f32 %v3374, %v3389
  %v3407 = vadd.f32 %v3375, %v3394
  %v3408 = vadd.f32 %v3376, %v3399
  %v3409 = vadd.f32 %v33, %v3401
  %v3410 = vadd.f32 %v34, %v3402
  %v3411 = vadd.f32 %v35, %v3403
  %v3412 = vadd.f32 %v36, %v3404
  %v3413 = vadd.f32 %v37, %v3405
  %v3414 = vadd.f32 %v38, %v3406
  %v3415 = vadd.f32 %v39, %v3407
  %v3416 = vadd.f32 %v40, %v3408
  %v3417 = vmax.f32 %v3409, 0.0
  %v3418 = vmax.f32 %v3410, 0.0
  %v3419 = vmax.f32 %v3411, 0.0
  %v3420 = vmax.f32 %v3412, 0.0
  %v3421 = vmax.f32 %v3413, 0.0
  %v3422 = vmax.f32 %v3414, 0.0
  %v3423 = vmax.f32 %v3415, 0.0
  %v3424 = vmax.f32 %v3416, 0.0
  %v3425 = vmul.f32 %v3417, %v3417
  %v3426 = vmul.f32 %v3418, %v3418
  %v3427 = vmul.f32 %v3419, %v3419
  %v3428 = vmul.f32 %v3420, %v3420
  %v3429 = vmul.f32 %v3421, %v3421
  %v3430 = vmul.f32 %v3422, %v3422
  %v3431 = vmul.f32 %v3423, %v3423
  %v3432 = vmul.f32 %v3424, %v3424
  %v3433 = vsel %vm757, %v3425, 0.0
  %3434 = vadd.xlane.f32.xlu0 %v3433
  %v3435 = vpop.xlane.xlu0 %3434
  %v3436 = vsel %vm757, %v3426, 0.0
  %3437 = vadd.xlane.f32.xlu0 %v3436
  %v3438 = vpop.xlane.xlu0 %3437
  %v3439 = vsel %vm757, %v3427, 0.0
  %3440 = vadd.xlane.f32.xlu0 %v3439
  %v3441 = vpop.xlane.xlu0 %3440
  %vm3442 = vcmask 256000
  %v3443 = vsel %vm3442, %v3428, 0.0
  %3444 = vadd.xlane.f32.xlu0 %v3443
  %v3445 = vpop.xlane.xlu0 %3444
  %v3446 = vsel %vm757, %v3429, 0.0
  %3447 = vadd.xlane.f32.xlu0 %v3446
  %v3448 = vpop.xlane.xlu0 %3447
  %v3449 = vsel %vm757, %v3430, 0.0
  %3450 = vadd.xlane.f32.xlu0 %v3449
  %v3451 = vpop.xlane.xlu0 %3450
  %v3452 = vsel %vm757, %v3431, 0.0
  %3453 = vadd.xlane.f32.xlu0 %v3452
  %v3454 = vpop.xlane.xlu0 %3453
  %v3455 = vsel %vm3442, %v3432, 0.0
  %3456 = vadd.xlane.f32.xlu0 %v3455
  %v3457 = vpop.xlane.xlu0 %3456
  %v3458 = vmax.f32 %v3435, 1e-24
  %v3459 = vmax.f32 %v3438, 1e-24
  %v3460 = vmax.f32 %v3441, 1e-24
  %v3461 = vmax.f32 %v3445, 1e-24
  %v3462 = vmax.f32 %v3448, 1e-24
  %v3463 = vmax.f32 %v3451, 1e-24
  %v3464 = vmax.f32 %v3454, 1e-24
  %v3465 = vmax.f32 %v3457, 1e-24
  %v3466 = vrsqrt.pop %v3458
  %v3467 = vrsqrt.pop %v3459
  %v3468 = vrsqrt.pop %v3460
  %v3469 = vrsqrt.pop %v3461
  %v3470 = vrsqrt.pop %v3462
  %v3471 = vrsqrt.pop %v3463
  %v3472 = vrsqrt.pop %v3464
  %v3473 = vrsqrt.pop %v3465
  %v3474 = vmul.f32 %v3417, %v3466
  %v3475 = vmul.f32 %v3418, %v3467
  %v3476 = vmul.f32 %v3419, %v3468
  %v3477 = vmul.f32 %v3420, %v3469
  %v3478 = vmul.f32 %v3421, %v3470
  %v3479 = vmul.f32 %v3422, %v3471
  %v3480 = vmul.f32 %v3423, %v3472
  %v3481 = vmul.f32 %v3424, %v3473
  %v3482 = vld [vmem:[%s5] sm:$0xff]
  %v3483 = vld [vmem:[%s5 + $0x8] sm:$0xff]
  %v3484 = vld [vmem:[%s5 + $0x10] sm:$0xff]
  %v3485 = vld [vmem:[%s5 + $0x18] sm:$0x7]
  %v3486 = vmul.f32 %v3474, %v3482
  %v3487 = vmul.f32 %v3475, %v3483
  %v3488 = vmul.f32 %v3476, %v3484
  %v3489 = vmul.f32 %v3477, %v3485
  %v3490 = vmul.f32 %v3478, %v3482
  %v3491 = vmul.f32 %v3479, %v3483
  %v3492 = vmul.f32 %v3480, %v3484
  %v3493 = vmul.f32 %v3481, %v3485
  %v3494 = vsel %vm757, %v3486, 0.0
  %3495 = vadd.xlane.f32.xlu0 %v3494
  %v3496 = vpop.xlane.xlu0 %3495
  %v3497 = vsel %vm757, %v3487, 0.0
  %3498 = vadd.xlane.f32.xlu0 %v3497
  %v3499 = vpop.xlane.xlu0 %3498
  %v3500 = vsel %vm757, %v3488, 0.0
  %3501 = vadd.xlane.f32.xlu0 %v3500
  %v3502 = vpop.xlane.xlu0 %3501
  %v3503 = vsel %vm3442, %v3489, 0.0
  %3504 = vadd.xlane.f32.xlu0 %v3503
  %v3505 = vpop.xlane.xlu0 %3504
  %v3506 = vsel %vm757, %v3490, 0.0
  %3507 = vadd.xlane.f32.xlu0 %v3506
  %v3508 = vpop.xlane.xlu0 %3507
  %v3509 = vsel %vm757, %v3491, 0.0
  %3510 = vadd.xlane.f32.xlu0 %v3509
  %v3511 = vpop.xlane.xlu0 %3510
  %v3512 = vsel %vm757, %v3492, 0.0
  %3513 = vadd.xlane.f32.xlu0 %v3512
  %v3514 = vpop.xlane.xlu0 %3513
  %v3515 = vsel %vm3442, %v3493, 0.0
  %3516 = vadd.xlane.f32.xlu0 %v3515
  %v3517 = vpop.xlane.xlu0 %3516
  %v3526 = vlaneseq
  %v3527 = vshrl.u32 %v3526, 7
  %v3528 = vsub.s32 %v1423, %v3527
  %v3529 = vrot.slane %v3496, %v3528
  %v3530 = vadd.s32 %v1423, 4294967288
  %v3531 = vlaneseq
  %v3532 = vshrl.u32 %v3531, 7
  %v3533 = vsub.s32 %v3530, %v3532
  %v3534 = vrot.slane %v3499, %v3533
  %vm3535 = vcmask 130112
  %v3536 = vsel %vm3535, %v3534, %v3529
  %v3537 = vadd.s32 %v1423, 4294967280
  %v3538 = vlaneseq
  %v3539 = vshrl.u32 %v3538, 7
  %v3540 = vsub.s32 %v3537, %v3539
  %v3541 = vrot.slane %v3502, %v3540
  %vm3542 = vcmask 195712
  %v3543 = vsel %vm3542, %v3541, %v3536
  %v3544 = vadd.s32 %v1423, 4294967272
  %v3545 = vlaneseq
  %v3546 = vshrl.u32 %v3545, 7
  %v3547 = vsub.s32 %v3544, %v3546
  %v3548 = vrot.slane %v3505, %v3547
  %vm3549 = vcmask 261312
  %v3550 = vsel %vm3549, %v3548, %v3543
  %v3551 = vlaneseq
  %v3552 = vshrl.u32 %v3551, 7
  %v3553 = vsub.s32 %v1423, %v3552
  %v3554 = vrot.slane %v3508, %v3553
  %v3555 = vlaneseq
  %v3556 = vshrl.u32 %v3555, 7
  %v3557 = vsub.s32 %v3530, %v3556
  %v3558 = vrot.slane %v3511, %v3557
  %v3559 = vsel %vm3535, %v3558, %v3554
  %v3560 = vlaneseq
  %v3561 = vshrl.u32 %v3560, 7
  %v3562 = vsub.s32 %v3537, %v3561
  %v3563 = vrot.slane %v3514, %v3562
  %v3564 = vsel %vm3542, %v3563, %v3559
  %v3565 = vlaneseq
  %v3566 = vshrl.u32 %v3565, 7
  %v3567 = vsub.s32 %v3544, %v3566
  %v3568 = vrot.slane %v3517, %v3567
  %v3569 = vsel %vm3549, %v3568, %v3564
  %vm3570 = vcmask 1041409
  %v3571 = vsel %vm3570, %v3569, %v3550
  %vm3573 = vcmask 214016
  %3574 = vst.msk [vmem:[%s8] sm:$0x3] %vm3573, %v3571
  %v3575 = vld [vmem:[%s6] sm:$0xff]
  %v3576 = vld [vmem:[%s6 + $0x8] sm:$0xff]
  %v3577 = vld [vmem:[%s6 + $0x10] sm:$0xff]
  %v3578 = vld [vmem:[%s6 + $0x18] sm:$0x7]
  %v3579 = vmul.f32 %v3474, %v3575
  %v3580 = vmul.f32 %v3475, %v3576
  %v3581 = vmul.f32 %v3476, %v3577
  %v3582 = vmul.f32 %v3477, %v3578
  %v3583 = vmul.f32 %v3478, %v3575
  %v3584 = vmul.f32 %v3479, %v3576
  %v3585 = vmul.f32 %v3480, %v3577
  %v3586 = vmul.f32 %v3481, %v3578
  %v3587 = vsel %vm757, %v3579, 0.0
  %3588 = vadd.xlane.f32.xlu0 %v3587
  %v3589 = vpop.xlane.xlu0 %3588
  %v3590 = vsel %vm757, %v3580, 0.0
  %3591 = vadd.xlane.f32.xlu0 %v3590
  %v3592 = vpop.xlane.xlu0 %3591
  %v3593 = vsel %vm757, %v3581, 0.0
  %3594 = vadd.xlane.f32.xlu0 %v3593
  %v3595 = vpop.xlane.xlu0 %3594
  %v3596 = vsel %vm3442, %v3582, 0.0
  %3597 = vadd.xlane.f32.xlu0 %v3596
  %v3598 = vpop.xlane.xlu0 %3597
  %v3599 = vsel %vm757, %v3583, 0.0
  %3600 = vadd.xlane.f32.xlu0 %v3599
  %v3601 = vpop.xlane.xlu0 %3600
  %v3602 = vsel %vm757, %v3584, 0.0
  %3603 = vadd.xlane.f32.xlu0 %v3602
  %v3604 = vpop.xlane.xlu0 %3603
  %v3605 = vsel %vm757, %v3585, 0.0
  %3606 = vadd.xlane.f32.xlu0 %v3605
  %v3607 = vpop.xlane.xlu0 %3606
  %v3608 = vsel %vm3442, %v3586, 0.0
  %3609 = vadd.xlane.f32.xlu0 %v3608
  %v3610 = vpop.xlane.xlu0 %3609
  %v3619 = vlaneseq
  %v3620 = vshrl.u32 %v3619, 7
  %v3621 = vsub.s32 %v1423, %v3620
  %v3622 = vrot.slane %v3589, %v3621
  %v3623 = vlaneseq
  %v3624 = vshrl.u32 %v3623, 7
  %v3625 = vsub.s32 %v3530, %v3624
  %v3626 = vrot.slane %v3592, %v3625
  %v3627 = vsel %vm3535, %v3626, %v3622
  %v3628 = vlaneseq
  %v3629 = vshrl.u32 %v3628, 7
  %v3630 = vsub.s32 %v3537, %v3629
  %v3631 = vrot.slane %v3595, %v3630
  %v3632 = vsel %vm3542, %v3631, %v3627
  %v3633 = vlaneseq
  %v3634 = vshrl.u32 %v3633, 7
  %v3635 = vsub.s32 %v3544, %v3634
  %v3636 = vrot.slane %v3598, %v3635
  %v3637 = vsel %vm3549, %v3636, %v3632
  %v3638 = vlaneseq
  %v3639 = vshrl.u32 %v3638, 7
  %v3640 = vsub.s32 %v1423, %v3639
  %v3641 = vrot.slane %v3601, %v3640
  %v3642 = vlaneseq
  %v3643 = vshrl.u32 %v3642, 7
  %v3644 = vsub.s32 %v3530, %v3643
  %v3645 = vrot.slane %v3604, %v3644
  %v3646 = vsel %vm3535, %v3645, %v3641
  %v3647 = vlaneseq
  %v3648 = vshrl.u32 %v3647, 7
  %v3649 = vsub.s32 %v3537, %v3648
  %v3650 = vrot.slane %v3607, %v3649
  %v3651 = vsel %vm3542, %v3650, %v3646
  %v3652 = vlaneseq
  %v3653 = vshrl.u32 %v3652, 7
  %v3654 = vsub.s32 %v3544, %v3653
  %v3655 = vrot.slane %v3610, %v3654
  %v3656 = vsel %vm3549, %v3655, %v3651
  %v3657 = vsel %vm3570, %v3656, %v3637
  %3659 = vst.msk [vmem:[%s9] sm:$0x3] %vm3573, %v3657
  %v3660 = vld [vmem:[%s7] sm:$0xff]
  %v3661 = vld [vmem:[%s7 + $0x8] sm:$0xff]
  %v3662 = vld [vmem:[%s7 + $0x10] sm:$0xff]
  %v3663 = vld [vmem:[%s7 + $0x18] sm:$0x7]
  %v3664 = vmul.f32 %v3474, %v3660
  %v3665 = vmul.f32 %v3475, %v3661
  %v3666 = vmul.f32 %v3476, %v3662
  %v3667 = vmul.f32 %v3477, %v3663
  %v3668 = vmul.f32 %v3478, %v3660
  %v3669 = vmul.f32 %v3479, %v3661
  %v3670 = vmul.f32 %v3480, %v3662
  %v3671 = vmul.f32 %v3481, %v3663
  %v3672 = vsel %vm757, %v3664, 0.0
  %3673 = vadd.xlane.f32.xlu0 %v3672
  %v3674 = vpop.xlane.xlu0 %3673
  %v3675 = vsel %vm757, %v3665, 0.0
  %3676 = vadd.xlane.f32.xlu0 %v3675
  %v3677 = vpop.xlane.xlu0 %3676
  %v3678 = vsel %vm757, %v3666, 0.0
  %3679 = vadd.xlane.f32.xlu0 %v3678
  %v3680 = vpop.xlane.xlu0 %3679
  %v3681 = vsel %vm3442, %v3667, 0.0
  %3682 = vadd.xlane.f32.xlu0 %v3681
  %v3683 = vpop.xlane.xlu0 %3682
  %v3684 = vsel %vm757, %v3668, 0.0
  %3685 = vadd.xlane.f32.xlu0 %v3684
  %v3686 = vpop.xlane.xlu0 %3685
  %v3687 = vsel %vm757, %v3669, 0.0
  %3688 = vadd.xlane.f32.xlu0 %v3687
  %v3689 = vpop.xlane.xlu0 %3688
  %v3690 = vsel %vm757, %v3670, 0.0
  %3691 = vadd.xlane.f32.xlu0 %v3690
  %v3692 = vpop.xlane.xlu0 %3691
  %v3693 = vsel %vm3442, %v3671, 0.0
  %3694 = vadd.xlane.f32.xlu0 %v3693
  %v3695 = vpop.xlane.xlu0 %3694
  %v3704 = vlaneseq
  %v3705 = vshrl.u32 %v3704, 7
  %v3706 = vsub.s32 %v1423, %v3705
  %v3707 = vrot.slane %v3674, %v3706
  %v3708 = vlaneseq
  %v3709 = vshrl.u32 %v3708, 7
  %v3710 = vsub.s32 %v3530, %v3709
  %v3711 = vrot.slane %v3677, %v3710
  %v3712 = vsel %vm3535, %v3711, %v3707
  %v3713 = vlaneseq
  %v3714 = vshrl.u32 %v3713, 7
  %v3715 = vsub.s32 %v3537, %v3714
  %v3716 = vrot.slane %v3680, %v3715
  %v3717 = vsel %vm3542, %v3716, %v3712
  %v3718 = vlaneseq
  %v3719 = vshrl.u32 %v3718, 7
  %v3720 = vsub.s32 %v3544, %v3719
  %v3721 = vrot.slane %v3683, %v3720
  %v3722 = vsel %vm3549, %v3721, %v3717
  %v3723 = vlaneseq
  %v3724 = vshrl.u32 %v3723, 7
  %v3725 = vsub.s32 %v1423, %v3724
  %v3726 = vrot.slane %v3686, %v3725
  %v3727 = vlaneseq
  %v3728 = vshrl.u32 %v3727, 7
  %v3729 = vsub.s32 %v3530, %v3728
  %v3730 = vrot.slane %v3689, %v3729
  %v3731 = vsel %vm3535, %v3730, %v3726
  %v3732 = vlaneseq
  %v3733 = vshrl.u32 %v3732, 7
  %v3734 = vsub.s32 %v3537, %v3733
  %v3735 = vrot.slane %v3692, %v3734
  %v3736 = vsel %vm3542, %v3735, %v3731
  %v3737 = vlaneseq
  %v3738 = vshrl.u32 %v3737, 7
  %v3739 = vsub.s32 %v3544, %v3738
  %v3740 = vrot.slane %v3695, %v3739
  %v3741 = vsel %vm3549, %v3740, %v3736
  %v3742 = vsel %vm3570, %v3741, %v3722
  %3744 = vst.msk [vmem:[%s10] sm:$0x3] %vm3573, %v3742
  // Predicated region
  $region34: #{head_forward.3} parent=0 // pred_check
    _
  $region35: #{head_forward.3} parent=0 // pred_check_branch
    %3746 = sbr.rel (0) target = $region37
  $region36: #{head_forward.3} parent=0 // pred_region
    _
  $region37: #{head_forward.3} parent=0 // pred_fallthru
    _
  // Predicated region
  $region38: #{head_forward.3} parent=0 // pred_check
    _
  $region39: #{head_forward.3} parent=0 // pred_check_branch
    %3748 = sbr.rel (0) target = $region41
  $region40: #{head_forward.3} parent=0 // pred_region
    _
  $region41: #{head_forward.3} parent=0 // pred_fallthru
    _
  // Predicated region
  $region42: #{head_forward.3} parent=0 // pred_check
    _
  $region43: #{head_forward.3} parent=0 // pred_check_branch
    %3750 = sbr.rel (0) target = $region45
  $region44: #{head_forward.3} parent=0 // pred_region
    _
  $region45: #{head_forward.3} parent=0 // pred_fallthru
    _
  // Predicated region
  $region46: #{head_forward.3} parent=0 // pred_check
    _
  $region47: #{head_forward.3} parent=0 // pred_check_branch
    %3752 = sbr.rel (0) target = $region49
  $region48: #{head_forward.3} parent=0 // pred_region
    _
  $region49: #{head_forward.3} parent=0 // pred_fallthru
    _
  // Predicated region
  $region50: #{head_forward.3} parent=0 // pred_check
    _
  $region51: #{head_forward.3} parent=0 // pred_check_branch
    %3754 = sbr.rel (0) target = $region53
  $region52: #{head_forward.3} parent=0 // pred_region
    _
  $region53: #{head_forward.3} parent=0 // pred_fallthru
    _
  // Predicated region
  $region54: #{head_forward.3} parent=0 // pred_check
    _
  $region55: #{head_forward.3} parent=0 // pred_check_branch
    %3756 = sbr.rel (0) target = $region57
  $region56: #{head_forward.3} parent=0 // pred_region
    _
  $region57: #{head_forward.3} parent=0 // pred_fallthru
    _

</llo_original>
